<compile_context>
chip_gen: v6e
topology: v6e:2x2x1
jax: 0.10.0
libtpu: 0.0.40
codegen_flags: <defaults>
</compile_context>

<pallas_src>
import functools
import numpy as np
import jax
import jax.numpy as jnp
from jax.experimental import pallas as pl
from jax.experimental.pallas import tpu as pltpu

# ---- Encoder config (defaults of the PyTorch module) ----
INPUT_CHANNELS = 1
OUTPUT_CHANNELS = 64
CSHAPE = (128, 7, 7)
IELS = int(np.prod(CSHAPE))          # 6272
C_FEATURE = 7
D2 = OUTPUT_CHANNELS - C_FEATURE     # 57
R = 80.0                             # adding_outlier=False

HEAD_W = 128                         # 64 (mu) + 1 (k1) + 1 (k2) + 62 zero pad
FC_TK_SMALL = 896                    # 6272 = 128*49 -> 128-multiple divisor
                                     # that fits v5e's 16 MiB scoped VMEM.


# ------------------------------------------------------------------
# Pallas kernel 1: single-K matmul + bias + ReLU (conv layers, im2col rows)
#   nk == 1 -> no accumulator scratch, no pl.when init/finalize.
#   Output is bf16 (activation/im2col HBM traffic halved downstream).
# ------------------------------------------------------------------
def _conv_mm_kernel(x_ref, w_ref, b_ref, o_ref):
    acc = jnp.dot(x_ref[...].astype(w_ref.dtype), w_ref[...],
                  preferred_element_type=jnp.float32)
    o_ref[...] = jnp.maximum(acc + b_ref[...], 0.0).astype(o_ref.dtype)


def conv_mm(x, w, b, *, tm_max=1024, out_dtype=jnp.bfloat16):
    """o = relu(x @ w + b); x:(M,K), w:(K,N), b:(1,N) f32 -> (M,N) out_dtype."""
    M, K = x.shape
    N = w.shape[1]
    tm = M if M <= tm_max else tm_max
    grid_m = pl.cdiv(M, tm)
    return pl.pallas_call(
        _conv_mm_kernel,
        out_shape=jax.ShapeDtypeStruct((M, N), out_dtype),
        grid=(grid_m,),
        in_specs=[
            pl.BlockSpec((tm, K), lambda m: (m, 0)),
            pl.BlockSpec((K, N), lambda m: (0, 0)),
            pl.BlockSpec((1, N), lambda m: (0, 0)),
        ],
        out_specs=pl.BlockSpec((tm, N), lambda m: (m, 0)),
        compiler_params=pltpu.CompilerParams(
            dimension_semantics=("parallel",)),
    )(x, w, b)


# ------------------------------------------------------------------
# Pallas kernel 2: fused FC (bf16 weight, K-tiled) + heads
#   epilogue: relu (in-place into acc scratch), one bf16 128-wide head matmul,
#   softplus(k)+const, per-segment L2 normalisation of mu — all packed into a
#   single lane-dense (tm, 128) f32 output slab (one writeback DMA).
# ------------------------------------------------------------------
def _stable_softplus(x):
    # log(1 + exp(x)) computed stably (same semantics as F.softplus)
    return jnp.log(1.0 + jnp.exp(-jnp.abs(x))) + jnp.maximum(x, 0.0)


def _fc_head_kernel(x_ref, wfc_ref, bfc_ref, wh_ref, bh_ref, out_ref,
                    acc_ref, *, nk):
    @pl.when(pl.program_id(1) == 0)
    def _():
        acc_ref[...] = jnp.zeros_like(acc_ref)

    # x is bf16, wfc is bf16 -> astype is a no-op (no per-step VALU cast).
    acc_ref[...] += jnp.dot(x_ref[...].astype(wfc_ref.dtype), wfc_ref[...],
                            preferred_element_type=jnp.float32)

    @pl.when(pl.program_id(1) == nk - 1)
    def _():
        # ReLU written back into the accumulator (no fresh (tm,1024) temp).
        acc_ref[...] = jnp.maximum(acc_ref[...] + bfc_ref[...], 0.0)
        head = jnp.dot(acc_ref[...].astype(wh_ref.dtype), wh_ref[...],
                       preferred_element_type=jnp.float32) + bh_ref[...]

        col = jax.lax.broadcasted_iota(jnp.int32, head.shape, 1)
        is_mu1 = col < C_FEATURE
        is_mu2 = (col >= C_FEATURE) & (col < OUTPUT_CHANNELS)
        is_k1 = col == OUTPUT_CHANNELS
        is_k2 = col == OUTPUT_CHANNELS + 1

        # per-segment L2 norms (matches PyTorch: mu / (||mu|| + 1e-7), exact)
        sq = head * head
        s1 = jnp.sum(jnp.where(is_mu1, sq, 0.0), axis=1, keepdims=True)
        s2 = jnp.sum(jnp.where(is_mu2, sq, 0.0), axis=1, keepdims=True)
        inv1 = 1.0 / (jnp.sqrt(s1) + 1e-7)
        inv2 = 1.0 / (jnp.sqrt(s2) + 1e-7)
        scale = jnp.where(is_mu1, inv1, 0.0) + jnp.where(is_mu2, inv2, 0.0)

        sp = _stable_softplus(head)
        kcols = (jnp.where(is_k1, sp + R, 0.0)
                 + jnp.where(is_k2, sp + 1.0, 0.0))

        # cols 0:64 -> normalized mu (mu1|mu2), col 64 -> k1, col 65 -> k2,
        # cols 66:128 stay zero (head weight / scale / kcols are zero there).
        out_ref[...] = (head * scale + kcols).astype(out_ref.dtype)


def _fc_tiling():
    """Chip-generation specific K tiling for the FC kernel."""
    try:
        kind = jax.devices()[0].device_kind.lower()
    except Exception:  # pragma: no cover
        kind = ""
    if ("v6" in kind) or ("v7" in kind) or ("tpu7" in kind):
        # Full K in one grid step: removes 7x per-step overhead which is
        # 40-60% of the FC on v7x's 3.2 TB/s HBM.  ~40 MiB scoped VMEM worst
        # case (double-buffered bf16 weight + x block + acc) — fits v6e
        # (128 MiB physical) and v7x (64 MiB physical) with headroom.
        return IELS, 48 * 1024 * 1024
    # v5e / older: keep 7 K-steps, stays under the 16 MiB default scoped VMEM;
    # bandwidth (not per-step overhead) is the bottleneck there.
    return FC_TK_SMALL, None


def fc_head(flat, wfc, bfc, wh, bh):
    B, K = flat.shape
    H = wfc.shape[1]
    tk, vmem_limit = _fc_tiling()
    if K % tk != 0:
        tk = K
    nk = K // tk
    # grid_m == 1 up to B=512 so the 12.25 MiB bf16 weight is streamed once.
    tm = B if B <= 512 else 512
    grid_m = pl.cdiv(B, tm)
    kernel = functools.partial(_fc_head_kernel, nk=nk)
    cp = dict(dimension_semantics=("parallel", "arbitrary"))
    if vmem_limit is not None:
        cp["vmem_limit_bytes"] = vmem_limit
    return pl.pallas_call(
        kernel,
        out_shape=jax.ShapeDtypeStruct((B, HEAD_W), jnp.float32),
        grid=(grid_m, nk),
        in_specs=[
            pl.BlockSpec((tm, tk), lambda m, k: (m, k)),
            pl.BlockSpec((tk, H), lambda m, k: (k, 0)),
            pl.BlockSpec((1, H), lambda m, k: (0, 0)),
            pl.BlockSpec((H, HEAD_W), lambda m, k: (0, 0)),
            pl.BlockSpec((1, HEAD_W), lambda m, k: (0, 0)),
        ],
        out_specs=pl.BlockSpec((tm, HEAD_W), lambda m, k: (m, 0)),
        scratch_shapes=[pltpu.VMEM((tm, H), jnp.float32)],
        compiler_params=pltpu.CompilerParams(**cp),
    )(flat, wfc, bfc, wh, bh)


# ------------------------------------------------------------------
# Pallas kernel 3: fused PowerSpherical deterministic part for BOTH heads,
#   operating on a single lane-packed (B, 64) slab with column masks
#   (no sub-128-lane outputs, one launch, one writeback DMA).
# ------------------------------------------------------------------
def _ps_pair_kernel(mu_ref, t_ref, eps_ref, z_ref):
    mu = mu_ref[...]                                   # (B,64) = [mu1 | mu2]
    eps = eps_ref[...]                                 # (B,64) gaussian
    Bdim, D = mu.shape
    col = jax.lax.broadcasted_iota(jnp.int32, (Bdim, D), 1)
    seg2 = col >= C_FEATURE                            # segment-2 columns
    is_first = (col == 0) | (col == C_FEATURE)         # first col of each seg
    t = jnp.where(seg2, t_ref[:, 1:2], t_ref[:, 0:1])  # per-row, per-seg t

    def seg_sum(v):
        s1 = jnp.sum(jnp.where(seg2, 0.0, v), axis=1, keepdims=True)
        s2 = jnp.sum(jnp.where(seg2, v, 0.0), axis=1, keepdims=True)
        return jnp.where(seg2, s2, s1)

    # tangent gaussian -> uniform on S^{d-2}
    v = jnp.where(is_first, 0.0, eps)
    vss = seg_sum(v * v)
    vhat = v * jax.lax.rsqrt(jnp.maximum(vss, 1e-12))
    sfac = jnp.sqrt(jnp.maximum(1.0 - t * t, 0.0))
    y = jnp.where(is_first, t, vhat * sfac)            # [t, sqrt(1-t^2) v]

    # guarded Householder rotation e1 -> mu (per segment)
    e1 = jnp.where(is_first, 1.0, 0.0)
    u = e1 - mu
    uss = seg_sum(u * u)
    inv_un = jnp.where(uss > 1e-12,
                       jax.lax.rsqrt(jnp.maximum(uss, 1e-12)), 0.0)
    uhat = u * inv_un
    dot = seg_sum(y * uhat)
    z_ref[...] = (y - 2.0 * dot * uhat).astype(z_ref.dtype)


def ps_pair_sample(mu_packed, t, eps):
    B = mu_packed.shape[0]
    full = lambda shape: pl.BlockSpec(shape, lambda i: (0, 0))
    return pl.pallas_call(
        _ps_pair_kernel,
        out_shape=jax.ShapeDtypeStruct((B, OUTPUT_CHANNELS), jnp.float32),
        grid=(1,),
        in_specs=[full((B, OUTPUT_CHANNELS)), full((B, 2)),
                  full((B, OUTPUT_CHANNELS))],
        out_specs=full((B, OUTPUT_CHANNELS)),
    )(mu_packed, t, eps)


# ------------------------------------------------------------------
# Plain-JAX glue
# ------------------------------------------------------------------
def im2col_nhwc(x, ksize=4, stride=2, pad=1):
    """x: (B,H,W,C) -> (B*Ho*Wo, ksize*ksize*C), feature order (kh, kw, c)."""
    B, H, W, C = x.shape
    xp = jnp.pad(x, ((0, 0), (pad, pad), (pad, pad), (0, 0)))
    Ho = (H + 2 * pad - ksize) // stride + 1
    Wo = (W + 2 * pad - ksize) // stride + 1
    cols = []
    for kh in range(ksize):
        for kw in range(ksize):
            cols.append(xp[:, kh:kh + stride * Ho:stride,
                           kw:kw + stride * Wo:stride, :])
    patches = jnp.concatenate(cols, axis=-1)                 # (B,Ho,Wo,k*k*C)
    return patches.reshape(B * Ho * Wo, ksize * ksize * C), Ho, Wo


def init_params(key):
    ks = jax.random.split(key, 11)
    s = 0.02
    f32 = jnp.float32
    bf16 = jnp.bfloat16
    # conv1: rows = (kh,kw,cin); K=16 kept as-is (block dim equals full dim)
    w1 = s * jax.random.normal(ks[0], (INPUT_CHANNELS * 16, 64), f32)
    # conv2: rows = (kh,kw,c); bf16 weight stream
    w2 = (s * jax.random.normal(ks[2], (64 * 16, 128), f32)).astype(bf16)
    # fc: rows = NHWC (h,w,c) flatten of conv2 output; bf16 halves HBM traffic
    w_fc = (s * jax.random.normal(ks[4], (IELS, 1024), f32)).astype(bf16)
    # fused head (bf16): cols 0:64 = mu, col 64 = k1, col 65 = k2, rest zero
    w_mu = s * jax.random.normal(ks[6], (1024, OUTPUT_CHANNELS), f32)
    w_k1 = s * jax.random.normal(ks[8], (1024, 1), f32)
    w_k2 = s * jax.random.normal(ks[9], (1024, 1), f32)
    w_head = jnp.concatenate(
        [w_mu, w_k1, w_k2,
         jnp.zeros((1024, HEAD_W - OUTPUT_CHANNELS - 2), f32)],
        axis=1).astype(bf16)
    b_mu = s * jax.random.normal(ks[7], (1, OUTPUT_CHANNELS), f32)
    b_k = s * jax.random.normal(ks[10], (1, 2), f32)
    b_head = jnp.concatenate(
        [b_mu, b_k, jnp.zeros((1, HEAD_W - OUTPUT_CHANNELS - 2), f32)], axis=1)
    return {
        "w1": w1, "b1": s * jax.random.normal(ks[1], (1, 64), f32),
        "w2": w2, "b2": s * jax.random.normal(ks[3], (1, 128), f32),
        "w_fc": w_fc, "b_fc": s * jax.random.normal(ks[5], (1, 1024), f32),
        "w_head": w_head, "b_head": b_head,
    }


def encoder_forward(params, x, key):
    """Equivalent of Encoder._forward(x) -> (z1, z2, mu1, mu2, k1, k2). x: NCHW."""
    B = x.shape[0]
    x = jnp.transpose(x, (0, 2, 3, 1))                            # NCHW -> NHWC
    # conv1 (Cin -> 64, 4x4, s2, p1) + ReLU (bf16 out)
    p1, Ho1, Wo1 = im2col_nhwc(x)                                 # (B*196, 16)
    h1 = conv_mm(p1, params["w1"], params["b1"]).reshape(B, Ho1, Wo1, 64)
    # conv2 (64 -> 128) + ReLU (bf16 in/out)
    p2, Ho2, Wo2 = im2col_nhwc(h1)                                # (B*49, 1024)
    h2 = conv_mm(p2, params["w2"], params["b2"])                  # (B*49, 128)
    flat = h2.reshape(B, Ho2 * Wo2 * 128)                         # (B,6272) bf16
    # fused FC + heads -> one lane-dense (B,128) slab
    packed = fc_head(flat, params["w_fc"], params["b_fc"],
                     params["w_head"], params["b_head"])
    mu_packed = packed[:, :OUTPUT_CHANNELS]                       # mu1 | mu2
    mu1 = packed[:, :C_FEATURE]
    mu2 = packed[:, C_FEATURE:OUTPUT_CHANNELS]
    k1 = packed[:, OUTPUT_CHANNELS:OUTPUT_CHANNELS + 1]
    k2 = packed[:, OUTPUT_CHANNELS + 1:OUTPUT_CHANNELS + 2]
    # PowerSpherical reparameterized samples.
    # TODO(synk): Beta base draw (concentration-dependent) has no Pallas
    # sampler; it and the Gaussian tangent draw stay in jax.random, the
    # deterministic transform runs in the Pallas kernel above.
    kb1, kb2, kn = jax.random.split(key, 3)
    a1 = (C_FEATURE - 1) / 2.0
    a2 = (D2 - 1) / 2.0
    t1 = 2.0 * jax.random.beta(kb1, a1 + k1[:, 0], a1) - 1.0
    t2 = 2.0 * jax.random.beta(kb2, a2 + k2[:, 0], a2) - 1.0
    t = jnp.stack([t1, t2], axis=1).astype(jnp.float32)           # (B,2)
    eps = jax.random.normal(kn, (B, OUTPUT_CHANNELS), jnp.float32)
    z = ps_pair_sample(mu_packed, t, eps)                         # (B,64)
    z1 = z[:, :C_FEATURE]
    z2 = z[:, C_FEATURE:]
    return z1, z2, mu1, mu2, k1, k2


if __name__ == "__main__":
    key = jax.random.PRNGKey(0)
    kx, kp, ks = jax.random.split(key, 3)
    # Input implied by cshape=(128,7,7): 1x28x28 images (MNIST-like). Batch=2.
    x = jax.random.normal(kx, (2, INPUT_CHANNELS, 28, 28), dtype=jnp.float32)
    params = init_params(kp)

    fwd = jax.jit(encoder_forward)
    out = jax.block_until_ready(fwd(params, x, ks))

    z1, z2, mu1, mu2, k1, k2 = out
    assert z1.shape == (2, C_FEATURE)
    assert z2.shape == (2, D2)
    assert mu1.shape == (2, C_FEATURE) and mu2.shape == (2, D2)
    assert k1.shape == (2, 1) and k2.shape == (2, 1)
    assert bool(jnp.all(jnp.isfinite(jnp.concatenate([z1, z2], axis=1))))
    assert bool(jnp.all(jnp.isfinite(k1))) and bool(jnp.all(jnp.isfinite(k2)))
    # mu segments should be (near-)unit norm after in-kernel normalisation
    assert bool(jnp.all(jnp.abs(jnp.linalg.norm(mu1, axis=1) - 1.0) < 1e-2))
    assert bool(jnp.all(jnp.abs(jnp.linalg.norm(mu2, axis=1) - 1.0) < 1e-2))
    print("KERNEL_OK")
</pallas_src>

<mosaic_0001>
module attributes {stable_mosaic.version = 11 : i64} {
  func.func @_conv_mm_kernel(%arg0: i32, %arg1: memref<392x16xf32, #tpu.memory_space<vmem>>, %arg2: memref<16x64xf32, #tpu.memory_space<vmem>>, %arg3: memref<1x64xf32, #tpu.memory_space<vmem>>, %arg4: memref<392x64xbf16, #tpu.memory_space<vmem>>) attributes {dimension_semantics = [#tpu.dimension_semantics<parallel>], iteration_bounds = array<i64: 1>, scalar_prefetch = 0 : i64, scratch_operands = 0 : i64, tpu.core_type = #tpu.core_type<tc>, window_params = [{transform_indices = @transform_0, window_bounds = array<i64: 392, 16>}, {pipeline_mode = #tpu.pipeline_mode<synchronous>, transform_indices = @transform_1, window_bounds = array<i64: 16, 64>}, {pipeline_mode = #tpu.pipeline_mode<synchronous>, transform_indices = @transform_2, window_bounds = array<i64: 1, 64>}, {transform_indices = @transform_3, window_bounds = array<i64: 392, 64>}]} {
    %c0 = arith.constant 0 : index
    %c0_0 = arith.constant 0 : index
    %0 = vector.load %arg1[%c0, %c0_0] : memref<392x16xf32, #tpu.memory_space<vmem>>, vector<392x16xf32>
    %c0_1 = arith.constant 0 : index
    %c0_2 = arith.constant 0 : index
    %1 = vector.load %arg2[%c0_1, %c0_2] : memref<16x64xf32, #tpu.memory_space<vmem>>, vector<16x64xf32>
    %cst = arith.constant dense<0.000000e+00> : vector<392x64xf32>
    %2 = tpu.matmul %0, %1, %cst {dimension_numbers = #tpu.dot_dimension_numbers<[1], [0], [0], [1], [0, 0, 1, 1], [], []>} : vector<392x16xf32>, vector<16x64xf32>, vector<392x64xf32> -> vector<392x64xf32>
    %c0_3 = arith.constant 0 : index
    %c0_4 = arith.constant 0 : index
    %3 = vector.load %arg3[%c0_3, %c0_4] : memref<1x64xf32, #tpu.memory_space<vmem>>, vector<1x64xf32>
    %4 = vector.broadcast %3 : vector<1x64xf32> to vector<392x64xf32>
    %5 = arith.addf %2, %4 : vector<392x64xf32>
    %cst_5 = arith.constant 0.000000e+00 : f32
    %6 = vector.broadcast %cst_5 : f32 to vector<392x64xf32>
    %7 = arith.maximumf %5, %6 : vector<392x64xf32>
    %8 = arith.truncf %7 : vector<392x64xf32> to vector<392x64xbf16>
    %c0_6 = arith.constant 0 : index
    %c0_7 = arith.constant 0 : index
    %9 = vector.load %arg4[%c0_6, %c0_7] : memref<392x64xbf16, #tpu.memory_space<vmem>>, vector<392x64xbf16>
    tpu.vector_store %arg4[%c0_6, %c0_7], %8 {strides = array<i32>} : memref<392x64xbf16, #tpu.memory_space<vmem>>, vector<392x64xbf16>,
    return
  }
  func.func @transform_0(%arg0: i32) -> (i32, i32) {
    %c0_i32 = arith.constant 0 : i32
    %c0_i32_0 = arith.constant 0 : i32
    return %arg0, %c0_i32 : i32, i32
  }
  func.func @transform_1(%arg0: i32) -> (i32, i32) {
    %c0_i32 = arith.constant 0 : i32
    %c0_i32_0 = arith.constant 0 : i32
    %c0_i32_1 = arith.constant 0 : i32
    return %c0_i32, %c0_i32_0 : i32, i32
  }
  func.func @transform_2(%arg0: i32) -> (i32, i32) {
    %c0_i32 = arith.constant 0 : i32
    %c0_i32_0 = arith.constant 0 : i32
    %c0_i32_1 = arith.constant 0 : i32
    return %c0_i32, %c0_i32_0 : i32, i32
  }
  func.func @transform_3(%arg0: i32) -> (i32, i32) {
    %c0_i32 = arith.constant 0 : i32
    %c0_i32_0 = arith.constant 0 : i32
    return %arg0, %c0_i32 : i32, i32
  }
}

module attributes {stable_mosaic.version = 11 : i64} {
  func.func @_conv_mm_kernel(%arg0: i32, %arg1: memref<98x1024xbf16, #tpu.memory_space<vmem>>, %arg2: memref<1024x128xbf16, #tpu.memory_space<vmem>>, %arg3: memref<1x128xf32, #tpu.memory_space<vmem>>, %arg4: memref<98x128xbf16, #tpu.memory_space<vmem>>) attributes {dimension_semantics = [#tpu.dimension_semantics<parallel>], iteration_bounds = array<i64: 1>, scalar_prefetch = 0 : i64, scratch_operands = 0 : i64, tpu.core_type = #tpu.core_type<tc>, window_params = [{transform_indices = @transform_0, window_bounds = array<i64: 98, 1024>}, {pipeline_mode = #tpu.pipeline_mode<synchronous>, transform_indices = @transform_1, window_bounds = array<i64: 1024, 128>}, {pipeline_mode = #tpu.pipeline_mode<synchronous>, transform_indices = @transform_2, window_bounds = array<i64: 1, 128>}, {transform_indices = @transform_3, window_bounds = array<i64: 98, 128>}]} {
    %c0 = arith.constant 0 : index
    %c0_0 = arith.constant 0 : index
    %0 = vector.load %arg1[%c0, %c0_0] : memref<98x1024xbf16, #tpu.memory_space<vmem>>, vector<98x1024xbf16>
    %c0_1 = arith.constant 0 : index
    %c0_2 = arith.constant 0 : index
    %1 = vector.load %arg2[%c0_1, %c0_2] : memref<1024x128xbf16, #tpu.memory_space<vmem>>, vector<1024x128xbf16>
    %cst = arith.constant dense<0.000000e+00> : vector<98x128xf32>
    %2 = tpu.matmul %0, %1, %cst {dimension_numbers = #tpu.dot_dimension_numbers<[1], [0], [0], [1], [0, 0, 1, 1], [], []>} : vector<98x1024xbf16>, vector<1024x128xbf16>, vector<98x128xf32> -> vector<98x128xf32>
    %c0_3 = arith.constant 0 : index
    %c0_4 = arith.constant 0 : index
    %3 = vector.load %arg3[%c0_3, %c0_4] : memref<1x128xf32, #tpu.memory_space<vmem>>, vector<1x128xf32>
    %4 = vector.broadcast %3 : vector<1x128xf32> to vector<98x128xf32>
    %5 = arith.addf %2, %4 : vector<98x128xf32>
    %cst_5 = arith.constant 0.000000e+00 : f32
    %6 = vector.broadcast %cst_5 : f32 to vector<98x128xf32>
    %7 = arith.maximumf %5, %6 : vector<98x128xf32>
    %8 = arith.truncf %7 : vector<98x128xf32> to vector<98x128xbf16>
    %c0_6 = arith.constant 0 : index
    %c0_7 = arith.constant 0 : index
    %9 = vector.load %arg4[%c0_6, %c0_7] : memref<98x128xbf16, #tpu.memory_space<vmem>>, vector<98x128xbf16>
    tpu.vector_store %arg4[%c0_6, %c0_7], %8 {strides = array<i32>} : memref<98x128xbf16, #tpu.memory_space<vmem>>, vector<98x128xbf16>,
    return
  }
  func.func @transform_0(%arg0: i32) -> (i32, i32) {
    %c0_i32 = arith.constant 0 : i32
    %c0_i32_0 = arith.constant 0 : i32
    return %arg0, %c0_i32 : i32, i32
  }
  func.func @transform_1(%arg0: i32) -> (i32, i32) {
    %c0_i32 = arith.constant 0 : i32
    %c0_i32_0 = arith.constant 0 : i32
    %c0_i32_1 = arith.constant 0 : i32
    return %c0_i32, %c0_i32_0 : i32, i32
  }
  func.func @transform_2(%arg0: i32) -> (i32, i32) {
    %c0_i32 = arith.constant 0 : i32
    %c0_i32_0 = arith.constant 0 : i32
    %c0_i32_1 = arith.constant 0 : i32
    return %c0_i32, %c0_i32_0 : i32, i32
  }
  func.func @transform_3(%arg0: i32) -> (i32, i32) {
    %c0_i32 = arith.constant 0 : i32
    %c0_i32_0 = arith.constant 0 : i32
    return %arg0, %c0_i32 : i32, i32
  }
}

module attributes {stable_mosaic.version = 11 : i64} {
  func.func @_fc_head_kernel(%arg0: i32, %arg1: i32, %arg2: memref<2x896xbf16, #tpu.memory_space<vmem>>, %arg3: memref<896x1024xbf16, #tpu.memory_space<vmem>>, %arg4: memref<1x1024xf32, #tpu.memory_space<vmem>>, %arg5: memref<1024x128xbf16, #tpu.memory_space<vmem>>, %arg6: memref<1x128xf32, #tpu.memory_space<vmem>>, %arg7: memref<2x128xf32, #tpu.memory_space<vmem>>, %arg8: memref<2x1024xf32, #tpu.memory_space<vmem>>) attributes {dimension_semantics = [#tpu.dimension_semantics<parallel>, #tpu.dimension_semantics<arbitrary>], iteration_bounds = array<i64: 1, 7>, scalar_prefetch = 0 : i64, scratch_operands = 1 : i64, tpu.core_type = #tpu.core_type<tc>, window_params = [{transform_indices = @transform_0, window_bounds = array<i64: 2, 896>}, {transform_indices = @transform_1, window_bounds = array<i64: 896, 1024>}, {pipeline_mode = #tpu.pipeline_mode<synchronous>, transform_indices = @transform_2, window_bounds = array<i64: 1, 1024>}, {pipeline_mode = #tpu.pipeline_mode<synchronous>, transform_indices = @transform_3, window_bounds = array<i64: 1024, 128>}, {pipeline_mode = #tpu.pipeline_mode<synchronous>, transform_indices = @transform_4, window_bounds = array<i64: 1, 128>}, {transform_indices = @transform_5, window_bounds = array<i64: 2, 128>}]} {
    %c0_i32 = arith.constant 0 : i32
    %0 = arith.cmpi eq, %arg1, %c0_i32 : i32
    %1 = arith.extui %0 : i1 to i32
    %c0_i32_0 = arith.constant 0 : i32
    %2 = arith.cmpi ne, %1, %c0_i32_0 : i32
    scf.if %2 {
      %cst_9 = arith.constant 0.000000e+00 : f32
      %12 = vector.broadcast %cst_9 : f32 to vector<2x1024xf32>
      %c0_10 = arith.constant 0 : index
      %c0_11 = arith.constant 0 : index
      %13 = vector.load %arg8[%c0_10, %c0_11] : memref<2x1024xf32, #tpu.memory_space<vmem>>, vector<2x1024xf32>
      tpu.vector_store %arg8[%c0_10, %c0_11], %12 {strides = array<i32>} : memref<2x1024xf32, #tpu.memory_space<vmem>>, vector<2x1024xf32>,
    } else {
    }
    %c0 = arith.constant 0 : index
    %c0_1 = arith.constant 0 : index
    %3 = vector.load %arg8[%c0, %c0_1] : memref<2x1024xf32, #tpu.memory_space<vmem>>, vector<2x1024xf32>
    %c0_2 = arith.constant 0 : index
    %c0_3 = arith.constant 0 : index
    %4 = vector.load %arg2[%c0_2, %c0_3] : memref<2x896xbf16, #tpu.memory_space<vmem>>, vector<2x896xbf16>
    %c0_4 = arith.constant 0 : index
    %c0_5 = arith.constant 0 : index
    %5 = vector.load %arg3[%c0_4, %c0_5] : memref<896x1024xbf16, #tpu.memory_space<vmem>>, vector<896x1024xbf16>
    %cst = arith.constant dense<0.000000e+00> : vector<2x1024xf32>
    %6 = tpu.matmul %4, %5, %cst {dimension_numbers = #tpu.dot_dimension_numbers<[1], [0], [0], [1], [0, 0, 1, 1], [], []>} : vector<2x896xbf16>, vector<896x1024xbf16>, vector<2x1024xf32> -> vector<2x1024xf32>
    %7 = arith.addf %3, %6 : vector<2x1024xf32>
    %c0_6 = arith.constant 0 : index
    %c0_7 = arith.constant 0 : index
    %8 = vector.load %arg8[%c0_6, %c0_7] : memref<2x1024xf32, #tpu.memory_space<vmem>>, vector<2x1024xf32>
    tpu.vector_store %arg8[%c0_6, %c0_7], %7 {strides = array<i32>} : memref<2x1024xf32, #tpu.memory_space<vmem>>, vector<2x1024xf32>,
    %c6_i32 = arith.constant 6 : i32
    %9 = arith.cmpi eq, %arg1, %c6_i32 : i32
    %10 = arith.extui %9 : i1 to i32
    %c0_i32_8 = arith.constant 0 : i32
    %11 = arith.cmpi ne, %10, %c0_i32_8 : i32
    scf.if %11 {
      %c0_9 = arith.constant 0 : index
      %c0_10 = arith.constant 0 : index
      %12 = vector.load %arg8[%c0_9, %c0_10] : memref<2x1024xf32, #tpu.memory_space<vmem>>, vector<2x1024xf32>
      %c0_11 = arith.constant 0 : index
      %c0_12 = arith.constant 0 : index
      %13 = vector.load %arg4[%c0_11, %c0_12] : memref<1x1024xf32, #tpu.memory_space<vmem>>, vector<1x1024xf32>
      %14 = vector.broadcast %13 : vector<1x1024xf32> to vector<2x1024xf32>
      %15 = arith.addf %12, %14 : vector<2x1024xf32>
      %cst_13 = arith.constant 0.000000e+00 : f32
      %16 = vector.broadcast %cst_13 : f32 to vector<2x1024xf32>
      %17 = arith.maximumf %15, %16 : vector<2x1024xf32>
      %c0_14 = arith.constant 0 : index
      %c0_15 = arith.constant 0 : index
      %18 = vector.load %arg8[%c0_14, %c0_15] : memref<2x1024xf32, #tpu.memory_space<vmem>>, vector<2x1024xf32>
      tpu.vector_store %arg8[%c0_14, %c0_15], %17 {strides = array<i32>} : memref<2x1024xf32, #tpu.memory_space<vmem>>, vector<2x1024xf32>,
      %c0_16 = arith.constant 0 : index
      %c0_17 = arith.constant 0 : index
      %19 = vector.load %arg8[%c0_16, %c0_17] : memref<2x1024xf32, #tpu.memory_space<vmem>>, vector<2x1024xf32>
      %20 = arith.truncf %19 : vector<2x1024xf32> to vector<2x1024xbf16>
      %c0_18 = arith.constant 0 : index
      %c0_19 = arith.constant 0 : index
      %21 = vector.load %arg5[%c0_18, %c0_19] : memref<1024x128xbf16, #tpu.memory_space<vmem>>, vector<1024x128xbf16>
      %cst_20 = arith.constant dense<0.000000e+00> : vector<2x128xf32>
      %22 = tpu.matmul %20, %21, %cst_20 {dimension_numbers = #tpu.dot_dimension_numbers<[1], [0], [0], [1], [0, 0, 1, 1], [], []>} : vector<2x1024xbf16>, vector<1024x128xbf16>, vector<2x128xf32> -> vector<2x128xf32>
      %c0_21 = arith.constant 0 : index
      %c0_22 = arith.constant 0 : index
      %23 = vector.load %arg6[%c0_21, %c0_22] : memref<1x128xf32, #tpu.memory_space<vmem>>, vector<1x128xf32>
      %24 = vector.broadcast %23 : vector<1x128xf32> to vector<2x128xf32>
      %25 = arith.addf %22, %24 : vector<2x128xf32>
      %26 = tpu.iota {dimensions = array<i32: 1>} : vector<2x128xi32>
      %c7_i32 = arith.constant 7 : i32
      %27 = vector.broadcast %c7_i32 : i32 to vector<2x128xi32>
      %28 = arith.cmpi slt, %26, %27 : vector<2x128xi32>
      %c7_i32_23 = arith.constant 7 : i32
      %29 = vector.broadcast %c7_i32_23 : i32 to vector<2x128xi32>
      %30 = arith.cmpi sge, %26, %29 : vector<2x128xi32>
      %c64_i32 = arith.constant 64 : i32
      %31 = vector.broadcast %c64_i32 : i32 to vector<2x128xi32>
      %32 = arith.cmpi slt, %26, %31 : vector<2x128xi32>
      %33 = arith.andi %30, %32 : vector<2x128xi1>
      %c64_i32_24 = arith.constant 64 : i32
      %34 = vector.broadcast %c64_i32_24 : i32 to vector<2x128xi32>
      %35 = arith.cmpi eq, %26, %34 : vector<2x128xi32>
      %c65_i32 = arith.constant 65 : i32
      %36 = vector.broadcast %c65_i32 : i32 to vector<2x128xi32>
      %37 = arith.cmpi eq, %26, %36 : vector<2x128xi32>
      %38 = arith.mulf %25, %25 : vector<2x128xf32>
      %cst_25 = arith.constant 0.000000e+00 : f32
      %39 = vector.broadcast %cst_25 : f32 to vector<2x128xf32>
      %40 = arith.select %28, %38, %39 : vector<2x128xi1>, vector<2x128xf32>
      %cst_26 = arith.constant dense<0.000000e+00> : vector<2xf32>
      %41 = vector.multi_reduction <add>, %40, %cst_26 [1] : vector<2x128xf32> to vector<2xf32>
      %42 = vector.shape_cast %41 : vector<2xf32> to vector<2x1xf32>
      %cst_27 = arith.constant 0.000000e+00 : f32
      %43 = vector.broadcast %cst_27 : f32 to vector<2x128xf32>
      %44 = arith.select %33, %38, %43 : vector<2x128xi1>, vector<2x128xf32>
      %cst_28 = arith.constant dense<0.000000e+00> : vector<2xf32>
      %45 = vector.multi_reduction <add>, %44, %cst_28 [1] : vector<2x128xf32> to vector<2xf32>
      %46 = vector.shape_cast %45 : vector<2xf32> to vector<2x1xf32>
      %47 = math.sqrt %42 : vector<2x1xf32>
      %cst_29 = arith.constant 1.000000e-07 : f32
      %48 = vector.broadcast %cst_29 : f32 to vector<2x1xf32>
      %49 = arith.addf %47, %48 : vector<2x1xf32>
      %cst_30 = arith.constant 1.000000e+00 : f32
      %50 = vector.broadcast %cst_30 : f32 to vector<2x1xf32>
      %51 = arith.divf %50, %49 : vector<2x1xf32>
      %52 = math.sqrt %46 : vector<2x1xf32>
      %cst_31 = arith.constant 1.000000e-07 : f32
      %53 = vector.broadcast %cst_31 : f32 to vector<2x1xf32>
      %54 = arith.addf %52, %53 : vector<2x1xf32>
      %cst_32 = arith.constant 1.000000e+00 : f32
      %55 = vector.broadcast %cst_32 : f32 to vector<2x1xf32>
      %56 = arith.divf %55, %54 : vector<2x1xf32>
      %cst_33 = arith.constant 0.000000e+00 : f32
      %57 = vector.shape_cast %51 : vector<2x1xf32> to vector<2x1xf32>
      %58 = vector.broadcast %57 : vector<2x1xf32> to vector<2x128xf32>
      %59 = vector.broadcast %cst_33 : f32 to vector<2x128xf32>
      %60 = arith.select %28, %58, %59 : vector<2x128xi1>, vector<2x128xf32>
      %cst_34 = arith.constant 0.000000e+00 : f32
      %61 = vector.shape_cast %56 : vector<2x1xf32> to vector<2x1xf32>
      %62 = vector.broadcast %61 : vector<2x1xf32> to vector<2x128xf32>
      %63 = vector.broadcast %cst_34 : f32 to vector<2x128xf32>
      %64 = arith.select %33, %62, %63 : vector<2x128xi1>, vector<2x128xf32>
      %65 = arith.addf %60, %64 : vector<2x128xf32>
      %66 = math.absf %25 : vector<2x128xf32>
      %cst_35 = arith.constant 0.000000e+00 : f32
      %67 = vector.broadcast %cst_35 : f32 to vector<2x128xf32>
      %68 = arith.subf %67, %66 : vector<2x128xf32>
      %69 = math.exp %68 : vector<2x128xf32>
      %cst_36 = arith.constant 1.000000e+00 : f32
      %70 = vector.broadcast %cst_36 : f32 to vector<2x128xf32>
      %71 = arith.addf %70, %69 : vector<2x128xf32>
      %72 = math.log %71 : vector<2x128xf32>
      %cst_37 = arith.constant 0.000000e+00 : f32
      %73 = vector.broadcast %cst_37 : f32 to vector<2x128xf32>
      %74 = arith.maximumf %25, %73 : vector<2x128xf32>
      %75 = arith.addf %72, %74 : vector<2x128xf32>
      %cst_38 = arith.constant 8.000000e+01 : f32
      %76 = vector.broadcast %cst_38 : f32 to vector<2x128xf32>
      %77 = arith.addf %75, %76 : vector<2x128xf32>
      %cst_39 = arith.constant 0.000000e+00 : f32
      %78 = vector.broadcast %cst_39 : f32 to vector<2x128xf32>
      %79 = arith.select %35, %77, %78 : vector<2x128xi1>, vector<2x128xf32>
      %cst_40 = arith.constant 1.000000e+00 : f32
      %80 = vector.broadcast %cst_40 : f32 to vector<2x128xf32>
      %81 = arith.addf %75, %80 : vector<2x128xf32>
      %cst_41 = arith.constant 0.000000e+00 : f32
      %82 = vector.broadcast %cst_41 : f32 to vector<2x128xf32>
      %83 = arith.select %37, %81, %82 : vector<2x128xi1>, vector<2x128xf32>
      %84 = arith.addf %79, %83 : vector<2x128xf32>
      %85 = arith.mulf %25, %65 : vector<2x128xf32>
      %86 = arith.addf %85, %84 : vector<2x128xf32>
      %c0_42 = arith.constant 0 : index
      %c0_43 = arith.constant 0 : index
      %87 = vector.load %arg7[%c0_42, %c0_43] : memref<2x128xf32, #tpu.memory_space<vmem>>, vector<2x128xf32>
      tpu.vector_store %arg7[%c0_42, %c0_43], %86 {strides = array<i32>} : memref<2x128xf32, #tpu.memory_space<vmem>>, vector<2x128xf32>,
    } else {
    }
    return
  }
  func.func @transform_0(%arg0: i32, %arg1: i32) -> (i32, i32) {
    %c0_i32 = arith.constant 0 : i32
    return %arg0, %arg1 : i32, i32
  }
  func.func @transform_1(%arg0: i32, %arg1: i32) -> (i32, i32) {
    %c0_i32 = arith.constant 0 : i32
    %c0_i32_0 = arith.constant 0 : i32
    return %arg1, %c0_i32 : i32, i32
  }
  func.func @transform_2(%arg0: i32, %arg1: i32) -> (i32, i32) {
    %c0_i32 = arith.constant 0 : i32
    %c0_i32_0 = arith.constant 0 : i32
    %c0_i32_1 = arith.constant 0 : i32
    return %c0_i32, %c0_i32_0 : i32, i32
  }
  func.func @transform_3(%arg0: i32, %arg1: i32) -> (i32, i32) {
    %c0_i32 = arith.constant 0 : i32
    %c0_i32_0 = arith.constant 0 : i32
    %c0_i32_1 = arith.constant 0 : i32
    return %c0_i32, %c0_i32_0 : i32, i32
  }
  func.func @transform_4(%arg0: i32, %arg1: i32) -> (i32, i32) {
    %c0_i32 = arith.constant 0 : i32
    %c0_i32_0 = arith.constant 0 : i32
    %c0_i32_1 = arith.constant 0 : i32
    return %c0_i32, %c0_i32_0 : i32, i32
  }
  func.func @transform_5(%arg0: i32, %arg1: i32) -> (i32, i32) {
    %c0_i32 = arith.constant 0 : i32
    %c0_i32_0 = arith.constant 0 : i32
    return %arg0, %c0_i32 : i32, i32
  }
}

module attributes {stable_mosaic.version = 11 : i64} {
  func.func @_ps_pair_kernel(%arg0: i32, %arg1: memref<2x64xf32, #tpu.memory_space<vmem>>, %arg2: memref<2x2xf32, #tpu.memory_space<vmem>>, %arg3: memref<2x64xf32, #tpu.memory_space<vmem>>, %arg4: memref<2x64xf32, #tpu.memory_space<vmem>>) attributes {dimension_semantics = [#tpu.dimension_semantics<arbitrary>], iteration_bounds = array<i64: 1>, scalar_prefetch = 0 : i64, scratch_operands = 0 : i64, tpu.core_type = #tpu.core_type<tc>, window_params = [{pipeline_mode = #tpu.pipeline_mode<synchronous>, transform_indices = @transform_0, window_bounds = array<i64: 2, 64>}, {pipeline_mode = #tpu.pipeline_mode<synchronous>, transform_indices = @transform_1, window_bounds = array<i64: 2, 2>}, {pipeline_mode = #tpu.pipeline_mode<synchronous>, transform_indices = @transform_2, window_bounds = array<i64: 2, 64>}, {pipeline_mode = #tpu.pipeline_mode<synchronous>, transform_indices = @transform_3, window_bounds = array<i64: 2, 64>}]} {
    %c0 = arith.constant 0 : index
    %c0_0 = arith.constant 0 : index
    %0 = vector.load %arg1[%c0, %c0_0] : memref<2x64xf32, #tpu.memory_space<vmem>>, vector<2x64xf32>
    %c0_1 = arith.constant 0 : index
    %c0_2 = arith.constant 0 : index
    %1 = vector.load %arg3[%c0_1, %c0_2] : memref<2x64xf32, #tpu.memory_space<vmem>>, vector<2x64xf32>
    %2 = tpu.iota {dimensions = array<i32: 1>} : vector<2x64xi32>
    %c7_i32 = arith.constant 7 : i32
    %3 = vector.broadcast %c7_i32 : i32 to vector<2x64xi32>
    %4 = arith.cmpi sge, %2, %3 : vector<2x64xi32>
    %c0_i32 = arith.constant 0 : i32
    %5 = vector.broadcast %c0_i32 : i32 to vector<2x64xi32>
    %6 = arith.cmpi eq, %2, %5 : vector<2x64xi32>
    %c7_i32_3 = arith.constant 7 : i32
    %7 = vector.broadcast %c7_i32_3 : i32 to vector<2x64xi32>
    %8 = arith.cmpi eq, %2, %7 : vector<2x64xi32>
    %9 = arith.ori %6, %8 : vector<2x64xi1>
    %c0_4 = arith.constant 0 : index
    %c1 = arith.constant 1 : index
    %10 = vector.load %arg2[%c0_4, %c1] : memref<2x2xf32, #tpu.memory_space<vmem>>, vector<2x1xf32>
    %c0_5 = arith.constant 0 : index
    %c0_6 = arith.constant 0 : index
    %11 = vector.load %arg2[%c0_5, %c0_6] : memref<2x2xf32, #tpu.memory_space<vmem>>, vector<2x1xf32>
    %12 = vector.shape_cast %10 : vector<2x1xf32> to vector<2x1xf32>
    %13 = vector.broadcast %12 : vector<2x1xf32> to vector<2x64xf32>
    %14 = vector.shape_cast %11 : vector<2x1xf32> to vector<2x1xf32>
    %15 = vector.broadcast %14 : vector<2x1xf32> to vector<2x64xf32>
    %16 = arith.select %4, %13, %15 : vector<2x64xi1>, vector<2x64xf32>
    %cst = arith.constant 0.000000e+00 : f32
    %17 = vector.broadcast %cst : f32 to vector<2x64xf32>
    %18 = arith.select %9, %17, %1 : vector<2x64xi1>, vector<2x64xf32>
    %19 = arith.mulf %18, %18 : vector<2x64xf32>
    %cst_7 = arith.constant 0.000000e+00 : f32
    %20 = vector.broadcast %cst_7 : f32 to vector<2x64xf32>
    %21 = arith.select %4, %20, %19 : vector<2x64xi1>, vector<2x64xf32>
    %cst_8 = arith.constant dense<0.000000e+00> : vector<2xf32>
    %22 = vector.multi_reduction <add>, %21, %cst_8 [1] : vector<2x64xf32> to vector<2xf32>
    %23 = vector.shape_cast %22 : vector<2xf32> to vector<2x1xf32>
    %cst_9 = arith.constant 0.000000e+00 : f32
    %24 = vector.broadcast %cst_9 : f32 to vector<2x64xf32>
    %25 = arith.select %4, %19, %24 : vector<2x64xi1>, vector<2x64xf32>
    %cst_10 = arith.constant dense<0.000000e+00> : vector<2xf32>
    %26 = vector.multi_reduction <add>, %25, %cst_10 [1] : vector<2x64xf32> to vector<2xf32>
    %27 = vector.shape_cast %26 : vector<2xf32> to vector<2x1xf32>
    %28 = vector.shape_cast %27 : vector<2x1xf32> to vector<2x1xf32>
    %29 = vector.broadcast %28 : vector<2x1xf32> to vector<2x64xf32>
    %30 = vector.shape_cast %23 : vector<2x1xf32> to vector<2x1xf32>
    %31 = vector.broadcast %30 : vector<2x1xf32> to vector<2x64xf32>
    %32 = arith.select %4, %29, %31 : vector<2x64xi1>, vector<2x64xf32>
    %cst_11 = arith.constant 9.99999996E-13 : f32
    %33 = vector.broadcast %cst_11 : f32 to vector<2x64xf32>
    %34 = arith.maximumf %32, %33 : vector<2x64xf32>
    %35 = math.rsqrt %34 : vector<2x64xf32>
    %36 = arith.mulf %18, %35 : vector<2x64xf32>
    %37 = arith.mulf %16, %16 : vector<2x64xf32>
    %cst_12 = arith.constant 1.000000e+00 : f32
    %38 = vector.broadcast %cst_12 : f32 to vector<2x64xf32>
    %39 = arith.subf %38, %37 : vector<2x64xf32>
    %cst_13 = arith.constant 0.000000e+00 : f32
    %40 = vector.broadcast %cst_13 : f32 to vector<2x64xf32>
    %41 = arith.maximumf %39, %40 : vector<2x64xf32>
    %42 = math.sqrt %41 : vector<2x64xf32>
    %43 = arith.mulf %36, %42 : vector<2x64xf32>
    %44 = arith.select %9, %16, %43 : vector<2x64xi1>, vector<2x64xf32>
    %cst_14 = arith.constant 1.000000e+00 : f32
    %cst_15 = arith.constant 0.000000e+00 : f32
    %45 = vector.broadcast %cst_14 : f32 to vector<2x64xf32>
    %46 = vector.broadcast %cst_15 : f32 to vector<2x64xf32>
    %47 = arith.select %9, %45, %46 : vector<2x64xi1>, vector<2x64xf32>
    %48 = arith.subf %47, %0 : vector<2x64xf32>
    %49 = arith.mulf %48, %48 : vector<2x64xf32>
    %cst_16 = arith.constant 0.000000e+00 : f32
    %50 = vector.broadcast %cst_16 : f32 to vector<2x64xf32>
    %51 = arith.select %4, %50, %49 : vector<2x64xi1>, vector<2x64xf32>
    %cst_17 = arith.constant dense<0.000000e+00> : vector<2xf32>
    %52 = vector.multi_reduction <add>, %51, %cst_17 [1] : vector<2x64xf32> to vector<2xf32>
    %53 = vector.shape_cast %52 : vector<2xf32> to vector<2x1xf32>
    %cst_18 = arith.constant 0.000000e+00 : f32
    %54 = vector.broadcast %cst_18 : f32 to vector<2x64xf32>
    %55 = arith.select %4, %49, %54 : vector<2x64xi1>, vector<2x64xf32>
    %cst_19 = arith.constant dense<0.000000e+00> : vector<2xf32>
    %56 = vector.multi_reduction <add>, %55, %cst_19 [1] : vector<2x64xf32> to vector<2xf32>
    %57 = vector.shape_cast %56 : vector<2xf32> to vector<2x1xf32>
    %58 = vector.shape_cast %57 : vector<2x1xf32> to vector<2x1xf32>
    %59 = vector.broadcast %58 : vector<2x1xf32> to vector<2x64xf32>
    %60 = vector.shape_cast %53 : vector<2x1xf32> to vector<2x1xf32>
    %61 = vector.broadcast %60 : vector<2x1xf32> to vector<2x64xf32>
    %62 = arith.select %4, %59, %61 : vector<2x64xi1>, vector<2x64xf32>
    %cst_20 = arith.constant 9.99999996E-13 : f32
    %63 = vector.broadcast %cst_20 : f32 to vector<2x64xf32>
    %64 = arith.cmpf ogt, %62, %63 : vector<2x64xf32>
    %cst_21 = arith.constant 9.99999996E-13 : f32
    %65 = vector.broadcast %cst_21 : f32 to vector<2x64xf32>
    %66 = arith.maximumf %62, %65 : vector<2x64xf32>
    %67 = math.rsqrt %66 : vector<2x64xf32>
    %cst_22 = arith.constant 0.000000e+00 : f32
    %68 = vector.broadcast %cst_22 : f32 to vector<2x64xf32>
    %69 = arith.select %64, %67, %68 : vector<2x64xi1>, vector<2x64xf32>
    %70 = arith.mulf %48, %69 : vector<2x64xf32>
    %71 = arith.mulf %44, %70 : vector<2x64xf32>
    %cst_23 = arith.constant 0.000000e+00 : f32
    %72 = vector.broadcast %cst_23 : f32 to vector<2x64xf32>
    %73 = arith.select %4, %72, %71 : vector<2x64xi1>, vector<2x64xf32>
    %cst_24 = arith.constant dense<0.000000e+00> : vector<2xf32>
    %74 = vector.multi_reduction <add>, %73, %cst_24 [1] : vector<2x64xf32> to vector<2xf32>
    %75 = vector.shape_cast %74 : vector<2xf32> to vector<2x1xf32>
    %cst_25 = arith.constant 0.000000e+00 : f32
    %76 = vector.broadcast %cst_25 : f32 to vector<2x64xf32>
    %77 = arith.select %4, %71, %76 : vector<2x64xi1>, vector<2x64xf32>
    %cst_26 = arith.constant dense<0.000000e+00> : vector<2xf32>
    %78 = vector.multi_reduction <add>, %77, %cst_26 [1] : vector<2x64xf32> to vector<2xf32>
    %79 = vector.shape_cast %78 : vector<2xf32> to vector<2x1xf32>
    %80 = vector.shape_cast %79 : vector<2x1xf32> to vector<2x1xf32>
    %81 = vector.broadcast %80 : vector<2x1xf32> to vector<2x64xf32>
    %82 = vector.shape_cast %75 : vector<2x1xf32> to vector<2x1xf32>
    %83 = vector.broadcast %82 : vector<2x1xf32> to vector<2x64xf32>
    %84 = arith.select %4, %81, %83 : vector<2x64xi1>, vector<2x64xf32>
    %cst_27 = arith.constant 2.000000e+00 : f32
    %85 = vector.broadcast %cst_27 : f32 to vector<2x64xf32>
    %86 = arith.mulf %85, %84 : vector<2x64xf32>
    %87 = arith.mulf %86, %70 : vector<2x64xf32>
    %88 = arith.subf %44, %87 : vector<2x64xf32>
    %c0_28 = arith.constant 0 : index
    %c0_29 = arith.constant 0 : index
    %89 = vector.load %arg4[%c0_28, %c0_29] : memref<2x64xf32, #tpu.memory_space<vmem>>, vector<2x64xf32>
    tpu.vector_store %arg4[%c0_28, %c0_29], %88 {strides = array<i32>} : memref<2x64xf32, #tpu.memory_space<vmem>>, vector<2x64xf32>,
    return
  }
  func.func @transform_0(%arg0: i32) -> (i32, i32) {
    %c0_i32 = arith.constant 0 : i32
    %c0_i32_0 = arith.constant 0 : i32
    %c0_i32_1 = arith.constant 0 : i32
    return %c0_i32, %c0_i32_0 : i32, i32
  }
  func.func @transform_1(%arg0: i32) -> (i32, i32) {
    %c0_i32 = arith.constant 0 : i32
    %c0_i32_0 = arith.constant 0 : i32
    %c0_i32_1 = arith.constant 0 : i32
    return %c0_i32, %c0_i32_0 : i32, i32
  }
  func.func @transform_2(%arg0: i32) -> (i32, i32) {
    %c0_i32 = arith.constant 0 : i32
    %c0_i32_0 = arith.constant 0 : i32
    %c0_i32_1 = arith.constant 0 : i32
    return %c0_i32, %c0_i32_0 : i32, i32
  }
  func.func @transform_3(%arg0: i32) -> (i32, i32) {
    %c0_i32 = arith.constant 0 : i32
    %c0_i32_0 = arith.constant 0 : i32
    %c0_i32_1 = arith.constant 0 : i32
    return %c0_i32, %c0_i32_0 : i32, i32
  }
}

</mosaic_0001>

<llo_original>
// kernel: encoder_forward.10
$region0: #{encoder_forward.10}
  #allocation0 [shape = 'u32[]', space=smem, size = 0x4, offset = 0x4, fixed_abs, tag = 'smem constant byte address 0x4 - core index']
  #allocation1 [shape = 'u32[144,128]{1,0:T(1,128)}', space=vmem, size = 0x12000, scoped, tag = 'internal scratch']
  %s0 = inlined_call_operand.vmem [shape: f32[392,16], index: 0, kind: input, shape index: {}]
  %s1 = inlined_call_operand.hbm [shape: f32[16,64], index: 1, kind: input, shape index: {}]
  %s2 = inlined_call_operand.hbm [shape: f32[1,64], index: 2, kind: input, shape index: {}]
  %s3 = inlined_call_operand.vmem [shape: bf16[392,64], index: 3, kind: output, shape index: {}]
  %s4 = sld [smem:[#allocation0]]
  $region30: #{encoder_forward.10} parent=0
    _
  %s6 = ssub.s32 1, %s4
  %s7 = scalar_select 0, %s6, %s4
  $region1: #{encoder_forward.10} parent=0
    #allocation2 [shape = 'u8[8192]{0}', space=vmem, size = 0x2000, scoped, tag = 'input window, operand 1, single buffered']
    #allocation3 [shape = 's32[1]{0}', space=sflag, size = 0x4, scoped, tag = 'scoped memory for encoder_forward.10']
    #allocation4 [shape = 'u8[512]{0}', space=vmem, size = 0x400, scoped, tag = 'input window, operand 2, single buffered']
    #allocation5 [shape = 's32[1]{0}', space=sflag, size = 0x4, scoped, tag = 'scoped memory for encoder_forward.10']
    %8 = vsyncpa [#allocation3], 0
    %9 = vsyncpa [#allocation5], 0
    // Predicated region
    $region2: #{encoder_forward.10} parent=1 // pred_check
      _
    $region3: #{encoder_forward.10} parent=1 // pred_check_branch
      %11 = sbr.rel (0) target = $region5
    $region4: #{encoder_forward.10} parent=1 // pred_region
      _
    $region5: #{encoder_forward.10} parent=1 // pred_fallthru
      _
    // Predicated region
    $region6: #{encoder_forward.10} parent=1 // pred_check
      _
    $region7: #{encoder_forward.10} parent=1 // pred_check_branch
      %13 = sbr.rel (0) target = $region9
    $region8: #{encoder_forward.10} parent=1 // pred_region
      %s15 = ssub.s32 256, 256
      %16 = vsyncadd [#allocation3], %s15
      %s17 = sshll.u32 [#allocation2], 4
      %s18 = int_to_ptr.vmem [resolvable:$true] %s17
      %23 = dma.hbm_to_vmem [thread:$0]  %s1, 256, %s18, [#allocation3], 128, 128, 8
    $region9: #{encoder_forward.10} parent=1 // pred_fallthru
      _
    // Predicated region
    $region10: #{encoder_forward.10} parent=1 // pred_check
      _
    $region11: #{encoder_forward.10} parent=1 // pred_check_branch
      %25 = sbr.rel (0) target = $region13
    $region12: #{encoder_forward.10} parent=1 // pred_region
      %s27 = ssub.s32 16, 16
      %28 = vsyncadd [#allocation5], %s27
      %s30 = sshll.u32 [#allocation4], 4
      %s31 = int_to_ptr.vmem [resolvable:$true] %s30
      %33 = dma.hbm_to_vmem [thread:$0]  %s2, 16, %s31, [#allocation5]
    $region13: #{encoder_forward.10} parent=1 // pred_fallthru
      _
    // Predicated region
    $region14: #{encoder_forward.10} parent=1 // pred_check
      _
    $region15: #{encoder_forward.10} parent=1 // pred_check_branch
      %35 = sbr.rel (0) target = $region17
    $region16: #{encoder_forward.10} parent=1 // pred_region
      %36 = dma.done [#allocation3], 256
    $region17: #{encoder_forward.10} parent=1 // pred_fallthru
      _
    // Predicated region
    $region18: #{encoder_forward.10} parent=1 // pred_check
      _
    $region19: #{encoder_forward.10} parent=1 // pred_check_branch
      %38 = sbr.rel (0) target = $region21
    $region20: #{encoder_forward.10} parent=1 // pred_region
      %39 = dma.done [#allocation5], 16
    $region21: #{encoder_forward.10} parent=1 // pred_fallthru
      _
    %v40 = vld [vmem:[%s0] sm:$0xff]
    %v41 = vld [vmem:[%s0 + $0x8] sm:$0xff]
    %v42 = vld [vmem:[%s0 + $0x10] sm:$0xff]
    %v43 = vld [vmem:[%s0 + $0x18] sm:$0xff]
    %v44 = vld [vmem:[%s0 + $0x20] sm:$0xff]
    %v45 = vld [vmem:[%s0 + $0x28] sm:$0xff]
    %v46 = vld [vmem:[%s0 + $0x30] sm:$0xff]
    %v47 = vld [vmem:[%s0 + $0x38] sm:$0xff]
    %v48 = vld [vmem:[%s0 + $0x40] sm:$0xff]
    %v49 = vld [vmem:[%s0 + $0x48] sm:$0xff]
    %v50 = vld [vmem:[%s0 + $0x50] sm:$0xff]
    %v51 = vld [vmem:[%s0 + $0x58] sm:$0xff]
    %v52 = vld [vmem:[%s0 + $0x60] sm:$0xff]
    %v53 = vld [vmem:[%s0 + $0x68] sm:$0xff]
    %v54 = vld [vmem:[%s0 + $0x70] sm:$0xff]
    %v55 = vld [vmem:[%s0 + $0x78] sm:$0xff]
    %v56 = vld [vmem:[%s0 + $0x80] sm:$0xff]
    %v57 = vld [vmem:[%s0 + $0x88] sm:$0xff]
    %v58 = vld [vmem:[%s0 + $0x90] sm:$0xff]
    %v59 = vld [vmem:[%s0 + $0x98] sm:$0xff]
    %v60 = vld [vmem:[%s0 + $0xa0] sm:$0xff]
    %v61 = vld [vmem:[%s0 + $0xa8] sm:$0xff]
    %v62 = vld [vmem:[%s0 + $0xb0] sm:$0xff]
    %v63 = vld [vmem:[%s0 + $0xb8] sm:$0xff]
    %v64 = vld [vmem:[%s0 + $0xc0] sm:$0xff]
    %v65 = vld [vmem:[%s0 + $0xc8] sm:$0xff]
    %v66 = vld [vmem:[%s0 + $0xd0] sm:$0xff]
    %v67 = vld [vmem:[%s0 + $0xd8] sm:$0xff]
    %v68 = vld [vmem:[%s0 + $0xe0] sm:$0xff]
    %v69 = vld [vmem:[%s0 + $0xe8] sm:$0xff]
    %v70 = vld [vmem:[%s0 + $0xf0] sm:$0xff]
    %v71 = vld [vmem:[%s0 + $0xf8] sm:$0xff]
    %v72 = vld [vmem:[%s0 + $0x100] sm:$0xff]
    %v73 = vld [vmem:[%s0 + $0x108] sm:$0xff]
    %v74 = vld [vmem:[%s0 + $0x110] sm:$0xff]
    %v75 = vld [vmem:[%s0 + $0x118] sm:$0xff]
    %v76 = vld [vmem:[%s0 + $0x120] sm:$0xff]
    %v77 = vld [vmem:[%s0 + $0x128] sm:$0xff]
    %v78 = vld [vmem:[%s0 + $0x130] sm:$0xff]
    %v79 = vld [vmem:[%s0 + $0x138] sm:$0xff]
    %v80 = vld [vmem:[%s0 + $0x140] sm:$0xff]
    %v81 = vld [vmem:[%s0 + $0x148] sm:$0xff]
    %v82 = vld [vmem:[%s0 + $0x150] sm:$0xff]
    %v83 = vld [vmem:[%s0 + $0x158] sm:$0xff]
    %v84 = vld [vmem:[%s0 + $0x160] sm:$0xff]
    %v85 = vld [vmem:[%s0 + $0x168] sm:$0xff]
    %v86 = vld [vmem:[%s0 + $0x170] sm:$0xff]
    %v87 = vld [vmem:[%s0 + $0x178] sm:$0xff]
    %v88 = vld [vmem:[%s0 + $0x180] sm:$0xff]
    %v89 = vld [vmem:[#allocation2] sm:$0xff]
    %v90 = vld [vmem:[#allocation2 + $0x8] sm:$0xff]
    %v91 = vld [vmem:[#allocation4] sm:$0x1]
    %v93 = vlaneseq
    %v94 = vshrl.u32 %v93, 7
    %v95 = vsub.s32 0, %v94
    %v96 = vrot.slane %v91, %v95
    %vm98 = vcmask 130048
    %v100 = vsel %vm98, %v40, 0
    %v103 = vsel %vm98, %v41, 0
    %v106 = vsel %vm98, %v42, 0
    %v109 = vsel %vm98, %v43, 0
    %v112 = vsel %vm98, %v44, 0
    %v115 = vsel %vm98, %v45, 0
    %v118 = vsel %vm98, %v46, 0
    %v121 = vsel %vm98, %v47, 0
    %v124 = vsel %vm98, %v48, 0
    %v127 = vsel %vm98, %v49, 0
    %v130 = vsel %vm98, %v50, 0
    %v133 = vsel %vm98, %v51, 0
    %v136 = vsel %vm98, %v52, 0
    %v139 = vsel %vm98, %v53, 0
    %v142 = vsel %vm98, %v54, 0
    %v145 = vsel %vm98, %v55, 0
    %v148 = vsel %vm98, %v56, 0
    %v151 = vsel %vm98, %v57, 0
    %v154 = vsel %vm98, %v58, 0
    %v157 = vsel %vm98, %v59, 0
    %v160 = vsel %vm98, %v60, 0
    %v163 = vsel %vm98, %v61, 0
    %v166 = vsel %vm98, %v62, 0
    %v169 = vsel %vm98, %v63, 0
    %v172 = vsel %vm98, %v64, 0
    %v175 = vsel %vm98, %v65, 0
    %v178 = vsel %vm98, %v66, 0
    %v181 = vsel %vm98, %v67, 0
    %v184 = vsel %vm98, %v68, 0
    %v187 = vsel %vm98, %v69, 0
    %v190 = vsel %vm98, %v70, 0
    %v193 = vsel %vm98, %v71, 0
    %v196 = vsel %vm98, %v72, 0
    %v199 = vsel %vm98, %v73, 0
    %v202 = vsel %vm98, %v74, 0
    %v205 = vsel %vm98, %v75, 0
    %v208 = vsel %vm98, %v76, 0
    %v211 = vsel %vm98, %v77, 0
    %v214 = vsel %vm98, %v78, 0
    %v217 = vsel %vm98, %v79, 0
    %v220 = vsel %vm98, %v80, 0
    %v223 = vsel %vm98, %v81, 0
    %v226 = vsel %vm98, %v82, 0
    %v229 = vsel %vm98, %v83, 0
    %v232 = vsel %vm98, %v84, 0
    %v235 = vsel %vm98, %v85, 0
    %v238 = vsel %vm98, %v86, 0
    %v241 = vsel %vm98, %v87, 0
    %v244 = vsel %vm98, %v88, 0
    %246 = vmatprep.subr.mxu0 0.0
    %247 = vmatpush1.msra.mxu0 0.0
    %248 = vmatprep.subr.mxu0 0.0
    %249 = vmatpush1.msra.mxu0 0.0
    %250 = vmatprep.subr.mxu0 0.0
    %251 = vmatpush1.msra.mxu0 0.0
    %252 = vmatprep.subr.mxu0 0.0
    %253 = vmatpush1.msra.mxu0 0.0
    %254 = vmatprep.subr.mxu0 0.0
    %255 = vmatpush1.msra.mxu0 0.0
    %256 = vmatprep.subr.mxu0 0.0
    %257 = vmatpush1.msra.mxu0 0.0
    %258 = vmatprep.subr.mxu0 0.0
    %259 = vmatpush1.msra.mxu0 0.0
    %260 = vmatprep.subr.mxu0 0.0
    %261 = vmatpush1.msra.mxu0 0.0
    %262 = vmatprep.subr.mxu0 0.0
    %263 = vmatpush1.msra.mxu0 0.0
    %264 = vmatprep.subr.mxu0 0.0
    %265 = vmatpush1.msra.mxu0 0.0
    %266 = vmatprep.subr.mxu0 0.0
    %267 = vmatpush1.msra.mxu0 0.0
    %268 = vmatprep.subr.mxu0 0.0
    %269 = vmatpush1.msra.mxu0 0.0
    %270 = vmatprep.subr.mxu0 0.0
    %271 = vmatpush1.msra.mxu0 0.0
    %272 = vmatprep.subr.mxu0 0.0
    %273 = vmatpush1.msra.mxu0 0.0
    %274 = vmatprep.subr.mxu0 0.0
    %275 = vmatpush1.msra.mxu0 %v90
    %276 = vmatprep.subr.mxu0 0.0
    %277 = vmatpush1.msra.mxu0 %v89
    %278 = vmatprep.subr.mxu0 0.0
    %279 = vmatpush2.msra.mxu0 0.0
    %280 = vmatprep.subr.mxu0 0.0
    %281 = vmatpush2.msra.mxu0 0.0
    %282 = vmatprep.subr.mxu0 0.0
    %283 = vmatpush2.msra.mxu0 0.0
    %284 = vmatprep.subr.mxu0 0.0
    %285 = vmatpush2.msra.mxu0 0.0
    %286 = vmatprep.subr.mxu0 0.0
    %287 = vmatpush2.msra.mxu0 0.0
    %288 = vmatprep.subr.mxu0 0.0
    %289 = vmatpush2.msra.mxu0 0.0
    %290 = vmatprep.subr.mxu0 0.0
    %291 = vmatpush2.msra.mxu0 0.0
    %292 = vmatprep.subr.mxu0 0.0
    %293 = vmatpush2.msra.mxu0 0.0
    %294 = vmatprep.subr.mxu0 0.0
    %295 = vmatpush2.msra.mxu0 0.0
    %296 = vmatprep.subr.mxu0 0.0
    %297 = vmatpush2.msra.mxu0 0.0
    %298 = vmatprep.subr.mxu0 0.0
    %299 = vmatpush2.msra.mxu0 0.0
    %300 = vmatprep.subr.mxu0 0.0
    %301 = vmatpush2.msra.mxu0 0.0
    %302 = vmatprep.subr.mxu0 0.0
    %303 = vmatpush2.msra.mxu0 0.0
    %304 = vmatprep.subr.mxu0 0.0
    %305 = vmatpush2.msra.mxu0 0.0
    %306 = vmatprep.subr.mxu0 0.0
    %307 = vmatpush2.msra.mxu0 0.0
    %308 = vmatprep.subr.mxu0 0.0
    %309 = vmatpush2.msra.mxu0 0.0
    %310 = vmatprep.mubr.f32.mxu0 0.0
    %311 = vmatmul.mubr.f32.gmra.mxu0 %v100
    %v312 = vpop.f32.mrf.mxu0
    %v313 = vadd.f32 %v96, %v312
    %v314 = vpop.f32.mrf.mxu0
    %315 = vmatprep.mubr.f32.mxu0 0.0
    %316 = vmatmul.mubr.f32.gmra.mxu0 %v103
    %v317 = vpop.f32.mrf.mxu0
    %v318 = vadd.f32 %v96, %v317
    %v319 = vpop.f32.mrf.mxu0
    %320 = vmatprep.mubr.f32.mxu0 0.0
    %321 = vmatmul.mubr.f32.gmra.mxu0 %v106
    %v322 = vpop.f32.mrf.mxu0
    %v323 = vadd.f32 %v96, %v322
    %v324 = vpop.f32.mrf.mxu0
    %325 = vmatprep.mubr.f32.mxu0 0.0
    %326 = vmatmul.mubr.f32.gmra.mxu0 %v109
    %v327 = vpop.f32.mrf.mxu0
    %v328 = vadd.f32 %v96, %v327
    %v329 = vpop.f32.mrf.mxu0
    %330 = vmatprep.mubr.f32.mxu0 0.0
    %331 = vmatmul.mubr.f32.gmra.mxu0 %v112
    %v332 = vpop.f32.mrf.mxu0
    %v333 = vadd.f32 %v96, %v332
    %v334 = vpop.f32.mrf.mxu0
    %335 = vmatprep.mubr.f32.mxu0 0.0
    %336 = vmatmul.mubr.f32.gmra.mxu0 %v115
    %v337 = vpop.f32.mrf.mxu0
    %v338 = vadd.f32 %v96, %v337
    %v339 = vpop.f32.mrf.mxu0
    %340 = vmatprep.mubr.f32.mxu0 0.0
    %341 = vmatmul.mubr.f32.gmra.mxu0 %v118
    %v342 = vpop.f32.mrf.mxu0
    %v343 = vadd.f32 %v96, %v342
    %v344 = vpop.f32.mrf.mxu0
    %345 = vmatprep.mubr.f32.mxu0 0.0
    %346 = vmatmul.mubr.f32.gmra.mxu0 %v121
    %v347 = vpop.f32.mrf.mxu0
    %v348 = vadd.f32 %v96, %v347
    %v349 = vpop.f32.mrf.mxu0
    %350 = vmatprep.mubr.f32.mxu0 0.0
    %351 = vmatmul.mubr.f32.gmra.mxu0 %v124
    %v352 = vpop.f32.mrf.mxu0
    %v353 = vadd.f32 %v96, %v352
    %v354 = vpop.f32.mrf.mxu0
    %355 = vmatprep.mubr.f32.mxu0 0.0
    %356 = vmatmul.mubr.f32.gmra.mxu0 %v127
    %v357 = vpop.f32.mrf.mxu0
    %v358 = vadd.f32 %v96, %v357
    %v359 = vpop.f32.mrf.mxu0
    %360 = vmatprep.mubr.f32.mxu0 0.0
    %361 = vmatmul.mubr.f32.gmra.mxu0 %v130
    %v362 = vpop.f32.mrf.mxu0
    %v363 = vadd.f32 %v96, %v362
    %v364 = vpop.f32.mrf.mxu0
    %365 = vmatprep.mubr.f32.mxu0 0.0
    %366 = vmatmul.mubr.f32.gmra.mxu0 %v133
    %v367 = vpop.f32.mrf.mxu0
    %v368 = vadd.f32 %v96, %v367
    %v369 = vpop.f32.mrf.mxu0
    %370 = vmatprep.mubr.f32.mxu0 0.0
    %371 = vmatmul.mubr.f32.gmra.mxu0 %v136
    %v372 = vpop.f32.mrf.mxu0
    %v373 = vadd.f32 %v96, %v372
    %v374 = vpop.f32.mrf.mxu0
    %375 = vmatprep.mubr.f32.mxu0 0.0
    %376 = vmatmul.mubr.f32.gmra.mxu0 %v139
    %v377 = vpop.f32.mrf.mxu0
    %v378 = vadd.f32 %v96, %v377
    %v379 = vpop.f32.mrf.mxu0
    %380 = vmatprep.mubr.f32.mxu0 0.0
    %381 = vmatmul.mubr.f32.gmra.mxu0 %v142
    %v382 = vpop.f32.mrf.mxu0
    %v383 = vadd.f32 %v96, %v382
    %v384 = vpop.f32.mrf.mxu0
    %385 = vmatprep.mubr.f32.mxu0 0.0
    %386 = vmatmul.mubr.f32.gmra.mxu0 %v145
    %v387 = vpop.f32.mrf.mxu0
    %v388 = vadd.f32 %v96, %v387
    %v389 = vpop.f32.mrf.mxu0
    %390 = vmatprep.mubr.f32.mxu0 0.0
    %391 = vmatmul.mubr.f32.gmra.mxu0 %v148
    %v392 = vpop.f32.mrf.mxu0
    %v393 = vadd.f32 %v96, %v392
    %v394 = vpop.f32.mrf.mxu0
    %395 = vmatprep.mubr.f32.mxu0 0.0
    %396 = vmatmul.mubr.f32.gmra.mxu0 %v151
    %v397 = vpop.f32.mrf.mxu0
    %v398 = vadd.f32 %v96, %v397
    %v399 = vpop.f32.mrf.mxu0
    %400 = vmatprep.mubr.f32.mxu0 0.0
    %401 = vmatmul.mubr.f32.gmra.mxu0 %v154
    %v402 = vpop.f32.mrf.mxu0
    %v403 = vadd.f32 %v96, %v402
    %v404 = vpop.f32.mrf.mxu0
    %405 = vmatprep.mubr.f32.mxu0 0.0
    %406 = vmatmul.mubr.f32.gmra.mxu0 %v157
    %v407 = vpop.f32.mrf.mxu0
    %v408 = vadd.f32 %v96, %v407
    %v409 = vpop.f32.mrf.mxu0
    %410 = vmatprep.mubr.f32.mxu0 0.0
    %411 = vmatmul.mubr.f32.gmra.mxu0 %v160
    %v412 = vpop.f32.mrf.mxu0
    %v413 = vadd.f32 %v96, %v412
    %v414 = vpop.f32.mrf.mxu0
    %415 = vmatprep.mubr.f32.mxu0 0.0
    %416 = vmatmul.mubr.f32.gmra.mxu0 %v163
    %v417 = vpop.f32.mrf.mxu0
    %v418 = vadd.f32 %v96, %v417
    %v419 = vpop.f32.mrf.mxu0
    %420 = vmatprep.mubr.f32.mxu0 0.0
    %421 = vmatmul.mubr.f32.gmra.mxu0 %v166
    %v422 = vpop.f32.mrf.mxu0
    %v423 = vadd.f32 %v96, %v422
    %v424 = vpop.f32.mrf.mxu0
    %425 = vmatprep.mubr.f32.mxu0 0.0
    %426 = vmatmul.mubr.f32.gmra.mxu0 %v169
    %v427 = vpop.f32.mrf.mxu0
    %v428 = vadd.f32 %v96, %v427
    %v429 = vpop.f32.mrf.mxu0
    %430 = vmatprep.mubr.f32.mxu0 0.0
    %431 = vmatmul.mubr.f32.gmra.mxu0 %v172
    %v432 = vpop.f32.mrf.mxu0
    %v433 = vadd.f32 %v96, %v432
    %v434 = vpop.f32.mrf.mxu0
    %435 = vmatprep.mubr.f32.mxu0 0.0
    %436 = vmatmul.mubr.f32.gmra.mxu0 %v175
    %v437 = vpop.f32.mrf.mxu0
    %v438 = vadd.f32 %v96, %v437
    %v439 = vpop.f32.mrf.mxu0
    %440 = vmatprep.mubr.f32.mxu0 0.0
    %441 = vmatmul.mubr.f32.gmra.mxu0 %v178
    %v442 = vpop.f32.mrf.mxu0
    %v443 = vadd.f32 %v96, %v442
    %v444 = vpop.f32.mrf.mxu0
    %445 = vmatprep.mubr.f32.mxu0 0.0
    %446 = vmatmul.mubr.f32.gmra.mxu0 %v181
    %v447 = vpop.f32.mrf.mxu0
    %v448 = vadd.f32 %v96, %v447
    %v449 = vpop.f32.mrf.mxu0
    %450 = vmatprep.mubr.f32.mxu0 0.0
    %451 = vmatmul.mubr.f32.gmra.mxu0 %v184
    %v452 = vpop.f32.mrf.mxu0
    %v453 = vadd.f32 %v96, %v452
    %v454 = vpop.f32.mrf.mxu0
    %455 = vmatprep.mubr.f32.mxu0 0.0
    %456 = vmatmul.mubr.f32.gmra.mxu0 %v187
    %v457 = vpop.f32.mrf.mxu0
    %v458 = vadd.f32 %v96, %v457
    %v459 = vpop.f32.mrf.mxu0
    %460 = vmatprep.mubr.f32.mxu0 0.0
    %461 = vmatmul.mubr.f32.gmra.mxu0 %v190
    %v462 = vpop.f32.mrf.mxu0
    %v463 = vadd.f32 %v96, %v462
    %v464 = vpop.f32.mrf.mxu0
    %465 = vmatprep.mubr.f32.mxu0 0.0
    %466 = vmatmul.mubr.f32.gmra.mxu0 %v193
    %v467 = vpop.f32.mrf.mxu0
    %v468 = vadd.f32 %v96, %v467
    %v469 = vpop.f32.mrf.mxu0
    %470 = vmatprep.mubr.f32.mxu0 0.0
    %471 = vmatmul.mubr.f32.gmra.mxu0 %v196
    %v472 = vpop.f32.mrf.mxu0
    %v473 = vadd.f32 %v96, %v472
    %v474 = vpop.f32.mrf.mxu0
    %475 = vmatprep.mubr.f32.mxu0 0.0
    %476 = vmatmul.mubr.f32.gmra.mxu0 %v199
    %v477 = vpop.f32.mrf.mxu0
    %v478 = vadd.f32 %v96, %v477
    %v479 = vpop.f32.mrf.mxu0
    %480 = vmatprep.mubr.f32.mxu0 0.0
    %481 = vmatmul.mubr.f32.gmra.mxu0 %v202
    %v482 = vpop.f32.mrf.mxu0
    %v483 = vadd.f32 %v96, %v482
    %v484 = vpop.f32.mrf.mxu0
    %485 = vmatprep.mubr.f32.mxu0 0.0
    %486 = vmatmul.mubr.f32.gmra.mxu0 %v205
    %v487 = vpop.f32.mrf.mxu0
    %v488 = vadd.f32 %v96, %v487
    %v489 = vpop.f32.mrf.mxu0
    %490 = vmatprep.mubr.f32.mxu0 0.0
    %491 = vmatmul.mubr.f32.gmra.mxu0 %v208
    %v492 = vpop.f32.mrf.mxu0
    %v493 = vadd.f32 %v96, %v492
    %v494 = vpop.f32.mrf.mxu0
    %495 = vmatprep.mubr.f32.mxu0 0.0
    %496 = vmatmul.mubr.f32.gmra.mxu0 %v211
    %v497 = vpop.f32.mrf.mxu0
    %v498 = vadd.f32 %v96, %v497
    %v499 = vpop.f32.mrf.mxu0
    %500 = vmatprep.mubr.f32.mxu0 0.0
    %501 = vmatmul.mubr.f32.gmra.mxu0 %v214
    %v502 = vpop.f32.mrf.mxu0
    %v503 = vadd.f32 %v96, %v502
    %v504 = vpop.f32.mrf.mxu0
    %505 = vmatprep.mubr.f32.mxu0 0.0
    %506 = vmatmul.mubr.f32.gmra.mxu0 %v217
    %v507 = vpop.f32.mrf.mxu0
    %v508 = vadd.f32 %v96, %v507
    %v509 = vpop.f32.mrf.mxu0
    %510 = vmatprep.mubr.f32.mxu0 0.0
    %511 = vmatmul.mubr.f32.gmra.mxu0 %v220
    %v512 = vpop.f32.mrf.mxu0
    %v513 = vadd.f32 %v96, %v512
    %v514 = vpop.f32.mrf.mxu0
    %515 = vmatprep.mubr.f32.mxu0 0.0
    %516 = vmatmul.mubr.f32.gmra.mxu0 %v223
    %v517 = vpop.f32.mrf.mxu0
    %v518 = vadd.f32 %v96, %v517
    %v519 = vpop.f32.mrf.mxu0
    %520 = vmatprep.mubr.f32.mxu0 0.0
    %521 = vmatmul.mubr.f32.gmra.mxu0 %v226
    %v522 = vpop.f32.mrf.mxu0
    %v523 = vadd.f32 %v96, %v522
    %v524 = vpop.f32.mrf.mxu0
    %525 = vmatprep.mubr.f32.mxu0 0.0
    %526 = vmatmul.mubr.f32.gmra.mxu0 %v229
    %v527 = vpop.f32.mrf.mxu0
    %v528 = vadd.f32 %v96, %v527
    %v529 = vpop.f32.mrf.mxu0
    %530 = vmatprep.mubr.f32.mxu0 0.0
    %531 = vmatmul.mubr.f32.gmra.mxu0 %v232
    %v532 = vpop.f32.mrf.mxu0
    %v533 = vadd.f32 %v96, %v532
    %v534 = vpop.f32.mrf.mxu0
    %535 = vmatprep.mubr.f32.mxu0 0.0
    %536 = vmatmul.mubr.f32.gmra.mxu0 %v235
    %v537 = vpop.f32.mrf.mxu0
    %v538 = vadd.f32 %v96, %v537
    %v539 = vpop.f32.mrf.mxu0
    %540 = vmatprep.mubr.f32.mxu0 0.0
    %541 = vmatmul.mubr.f32.gmra.mxu0 %v238
    %v542 = vpop.f32.mrf.mxu0
    %v543 = vadd.f32 %v96, %v542
    %v544 = vpop.f32.mrf.mxu0
    %545 = vmatprep.mubr.f32.mxu0 0.0
    %546 = vmatmul.mubr.f32.gmra.mxu0 %v241
    %v547 = vpop.f32.mrf.mxu0
    %v548 = vadd.f32 %v96, %v547
    %v549 = vpop.f32.mrf.mxu0
    %550 = vmatprep.mubr.f32.mxu0 0.0
    %551 = vmatmul.mubr.f32.gmra.mxu0 %v244
    %v552 = vpop.f32.mrf.mxu0
    %v553 = vadd.f32 %v96, %v552
    %v554 = vpop.f32.mrf.mxu0
    %555 = vdwg.mxu0
    %v556 = vmax.f32 %v313, 0.0
    %v557 = vmax.f32 %v318, 0.0
    %v558 = vmax.f32 %v323, 0.0
    %v559 = vmax.f32 %v328, 0.0
    %v560 = vmax.f32 %v333, 0.0
    %v561 = vmax.f32 %v338, 0.0
    %v562 = vmax.f32 %v343, 0.0
    %v563 = vmax.f32 %v348, 0.0
    %v564 = vmax.f32 %v353, 0.0
    %v565 = vmax.f32 %v358, 0.0
    %v566 = vmax.f32 %v363, 0.0
    %v567 = vmax.f32 %v368, 0.0
    %v568 = vmax.f32 %v373, 0.0
    %v569 = vmax.f32 %v378, 0.0
    %v570 = vmax.f32 %v383, 0.0
    %v571 = vmax.f32 %v388, 0.0
    %v572 = vmax.f32 %v393, 0.0
    %v573 = vmax.f32 %v398, 0.0
    %v574 = vmax.f32 %v403, 0.0
    %v575 = vmax.f32 %v408, 0.0
    %v576 = vmax.f32 %v413, 0.0
    %v577 = vmax.f32 %v418, 0.0
    %v578 = vmax.f32 %v423, 0.0
    %v579 = vmax.f32 %v428, 0.0
    %v580 = vmax.f32 %v433, 0.0
    %v581 = vmax.f32 %v438, 0.0
    %v582 = vmax.f32 %v443, 0.0
    %v583 = vmax.f32 %v448, 0.0
    %v584 = vmax.f32 %v453, 0.0
    %v585 = vmax.f32 %v458, 0.0
    %v586 = vmax.f32 %v463, 0.0
    %v587 = vmax.f32 %v468, 0.0
    %v588 = vmax.f32 %v473, 0.0
    %v589 = vmax.f32 %v478, 0.0
    %v590 = vmax.f32 %v483, 0.0
    %v591 = vmax.f32 %v488, 0.0
    %v592 = vmax.f32 %v493, 0.0
    %v593 = vmax.f32 %v498, 0.0
    %v594 = vmax.f32 %v503, 0.0
    %v595 = vmax.f32 %v508, 0.0
    %v596 = vmax.f32 %v513, 0.0
    %v597 = vmax.f32 %v518, 0.0
    %v598 = vmax.f32 %v523, 0.0
    %v599 = vmax.f32 %v528, 0.0
    %v600 = vmax.f32 %v533, 0.0
    %v601 = vmax.f32 %v538, 0.0
    %v602 = vmax.f32 %v543, 0.0
    %v603 = vmax.f32 %v548, 0.0
    %v604 = vmax.f32 %v553, 0.0
    %v605 = vpack.c.bf16 %v557, %v556
    %v606 = vpack.c.bf16 %v559, %v558
    %v607 = vpack.c.bf16 %v561, %v560
    %v608 = vpack.c.bf16 %v563, %v562
    %v609 = vpack.c.bf16 %v565, %v564
    %v610 = vpack.c.bf16 %v567, %v566
    %v611 = vpack.c.bf16 %v569, %v568
    %v612 = vpack.c.bf16 %v571, %v570
    %v613 = vpack.c.bf16 %v573, %v572
    %v614 = vpack.c.bf16 %v575, %v574
    %v615 = vpack.c.bf16 %v577, %v576
    %v616 = vpack.c.bf16 %v579, %v578
    %v617 = vpack.c.bf16 %v581, %v580
    %v618 = vpack.c.bf16 %v583, %v582
    %v619 = vpack.c.bf16 %v585, %v584
    %v620 = vpack.c.bf16 %v587, %v586
    %v621 = vpack.c.bf16 %v589, %v588
    %v622 = vpack.c.bf16 %v591, %v590
    %v623 = vpack.c.bf16 %v593, %v592
    %v624 = vpack.c.bf16 %v595, %v594
    %v625 = vpack.c.bf16 %v597, %v596
    %v626 = vpack.c.bf16 %v599, %v598
    %v627 = vpack.c.bf16 %v601, %v600
    %v628 = vpack.c.bf16 %v603, %v602
    %v629 = vpack.c.bf16 %v604, %v604
    %v655 = vunpack.c.l.b16 %v605
    %v656 = vunpack.c.h.b16 %v605
    %v657 = vunpack.c.l.b16 %v606
    %v658 = vunpack.c.h.b16 %v606
    %v659 = vunpack.c.l.b16 %v607
    %v660 = vunpack.c.h.b16 %v607
    %v661 = vunpack.c.l.b16 %v608
    %v662 = vunpack.c.h.b16 %v608
    %v663 = vunpack.c.l.b16 %v609
    %v664 = vunpack.c.h.b16 %v609
    %v665 = vunpack.c.l.b16 %v610
    %v666 = vunpack.c.h.b16 %v610
    %v667 = vunpack.c.l.b16 %v611
    %v668 = vunpack.c.h.b16 %v611
    %v669 = vunpack.c.l.b16 %v612
    %v670 = vunpack.c.h.b16 %v612
    %v671 = vunpack.c.l.b16 %v613
    %v672 = vunpack.c.h.b16 %v613
    %v673 = vunpack.c.l.b16 %v614
    %v674 = vunpack.c.h.b16 %v614
    %v675 = vunpack.c.l.b16 %v615
    %v676 = vunpack.c.h.b16 %v615
    %v677 = vunpack.c.l.b16 %v616
    %v678 = vunpack.c.h.b16 %v616
    %v679 = vunpack.c.l.b16 %v617
    %v680 = vunpack.c.h.b16 %v617
    %v681 = vunpack.c.l.b16 %v618
    %v682 = vunpack.c.h.b16 %v618
    %v683 = vunpack.c.l.b16 %v619
    %v684 = vunpack.c.h.b16 %v619
    %v685 = vunpack.c.l.b16 %v620
    %v686 = vunpack.c.h.b16 %v620
    %v687 = vunpack.c.l.b16 %v621
    %v688 = vunpack.c.h.b16 %v621
    %v689 = vunpack.c.l.b16 %v622
    %v690 = vunpack.c.h.b16 %v622
    %v691 = vunpack.c.l.b16 %v623
    %v692 = vunpack.c.h.b16 %v623
    %v693 = vunpack.c.l.b16 %v624
    %v694 = vunpack.c.h.b16 %v624
    %v695 = vunpack.c.l.b16 %v625
    %v696 = vunpack.c.h.b16 %v625
    %v697 = vunpack.c.l.b16 %v626
    %v698 = vunpack.c.h.b16 %v626
    %v699 = vunpack.c.l.b16 %v627
    %v700 = vunpack.c.h.b16 %v627
    %v701 = vunpack.c.l.b16 %v628
    %v702 = vunpack.c.h.b16 %v628
    %v703 = vunpack.c.l.b16 %v629
    %v704 = vpack.c.b16 %v655, %v655
    %v705 = vpack.c.b16 %v656, %v656
    %v706 = vpack.c.b16 %v657, %v657
    %v707 = vpack.c.b16 %v658, %v658
    %v708 = vpack.c.b16 %v659, %v659
    %v709 = vpack.c.b16 %v660, %v660
    %v710 = vpack.c.b16 %v661, %v661
    %v711 = vpack.c.b16 %v662, %v662
    %v712 = vpack.c.b16 %v663, %v663
    %v713 = vpack.c.b16 %v664, %v664
    %v714 = vpack.c.b16 %v665, %v665
    %v715 = vpack.c.b16 %v666, %v666
    %v716 = vpack.c.b16 %v667, %v667
    %v717 = vpack.c.b16 %v668, %v668
    %v718 = vpack.c.b16 %v669, %v669
    %v719 = vpack.c.b16 %v670, %v670
    %v720 = vpack.c.b16 %v671, %v671
    %v721 = vpack.c.b16 %v672, %v672
    %v722 = vpack.c.b16 %v673, %v673
    %v723 = vpack.c.b16 %v674, %v674
    %v724 = vpack.c.b16 %v675, %v675
    %v725 = vpack.c.b16 %v676, %v676
    %v726 = vpack.c.b16 %v677, %v677
    %v727 = vpack.c.b16 %v678, %v678
    %v728 = vpack.c.b16 %v679, %v679
    %v729 = vpack.c.b16 %v680, %v680
    %v730 = vpack.c.b16 %v681, %v681
    %v731 = vpack.c.b16 %v682, %v682
    %v732 = vpack.c.b16 %v683, %v683
    %v733 = vpack.c.b16 %v684, %v684
    %v734 = vpack.c.b16 %v685, %v685
    %v735 = vpack.c.b16 %v686, %v686
    %v736 = vpack.c.b16 %v687, %v687
    %v737 = vpack.c.b16 %v688, %v688
    %v738 = vpack.c.b16 %v689, %v689
    %v739 = vpack.c.b16 %v690, %v690
    %v740 = vpack.c.b16 %v691, %v691
    %v741 = vpack.c.b16 %v692, %v692
    %v742 = vpack.c.b16 %v693, %v693
    %v743 = vpack.c.b16 %v694, %v694
    %v744 = vpack.c.b16 %v695, %v695
    %v745 = vpack.c.b16 %v696, %v696
    %v746 = vpack.c.b16 %v697, %v697
    %v747 = vpack.c.b16 %v698, %v698
    %v748 = vpack.c.b16 %v699, %v699
    %v749 = vpack.c.b16 %v700, %v700
    %v750 = vpack.c.b16 %v701, %v701
    %v751 = vpack.c.b16 %v702, %v702
    %v752 = vpack.c.b16 %v703, %v703
    %vm802 = vcmask 519168
    %803 = vst.msk [vmem:[%s3] sm:$0xf] %vm802, %v704
    %804 = vst.msk [vmem:[%s3 + $0x4] sm:$0xf] %vm802, %v705
    %805 = vst.msk [vmem:[%s3 + $0x8] sm:$0xf] %vm802, %v706
    %806 = vst.msk [vmem:[%s3 + $0xc] sm:$0xf] %vm802, %v707
    %807 = vst.msk [vmem:[%s3 + $0x10] sm:$0xf] %vm802, %v708
    %808 = vst.msk [vmem:[%s3 + $0x14] sm:$0xf] %vm802, %v709
    %809 = vst.msk [vmem:[%s3 + $0x18] sm:$0xf] %vm802, %v710
    %810 = vst.msk [vmem:[%s3 + $0x1c] sm:$0xf] %vm802, %v711
    %811 = vst.msk [vmem:[%s3 + $0x20] sm:$0xf] %vm802, %v712
    %812 = vst.msk [vmem:[%s3 + $0x24] sm:$0xf] %vm802, %v713
    %813 = vst.msk [vmem:[%s3 + $0x28] sm:$0xf] %vm802, %v714
    %814 = vst.msk [vmem:[%s3 + $0x2c] sm:$0xf] %vm802, %v715
    %815 = vst.msk [vmem:[%s3 + $0x30] sm:$0xf] %vm802, %v716
    %816 = vst.msk [vmem:[%s3 + $0x34] sm:$0xf] %vm802, %v717
    %817 = vst.msk [vmem:[%s3 + $0x38] sm:$0xf] %vm802, %v718
    %818 = vst.msk [vmem:[%s3 + $0x3c] sm:$0xf] %vm802, %v719
    %819 = vst.msk [vmem:[%s3 + $0x40] sm:$0xf] %vm802, %v720
    %820 = vst.msk [vmem:[%s3 + $0x44] sm:$0xf] %vm802, %v721
    %821 = vst.msk [vmem:[%s3 + $0x48] sm:$0xf] %vm802, %v722
    %822 = vst.msk [vmem:[%s3 + $0x4c] sm:$0xf] %vm802, %v723
    %823 = vst.msk [vmem:[%s3 + $0x50] sm:$0xf] %vm802, %v724
    %824 = vst.msk [vmem:[%s3 + $0x54] sm:$0xf] %vm802, %v725
    %825 = vst.msk [vmem:[%s3 + $0x58] sm:$0xf] %vm802, %v726
    %826 = vst.msk [vmem:[%s3 + $0x5c] sm:$0xf] %vm802, %v727
    %827 = vst.msk [vmem:[%s3 + $0x60] sm:$0xf] %vm802, %v728
    %828 = vst.msk [vmem:[%s3 + $0x64] sm:$0xf] %vm802, %v729
    %829 = vst.msk [vmem:[%s3 + $0x68] sm:$0xf] %vm802, %v730
    %830 = vst.msk [vmem:[%s3 + $0x6c] sm:$0xf] %vm802, %v731
    %831 = vst.msk [vmem:[%s3 + $0x70] sm:$0xf] %vm802, %v732
    %832 = vst.msk [vmem:[%s3 + $0x74] sm:$0xf] %vm802, %v733
    %833 = vst.msk [vmem:[%s3 + $0x78] sm:$0xf] %vm802, %v734
    %834 = vst.msk [vmem:[%s3 + $0x7c] sm:$0xf] %vm802, %v735
    %835 = vst.msk [vmem:[%s3 + $0x80] sm:$0xf] %vm802, %v736
    %836 = vst.msk [vmem:[%s3 + $0x84] sm:$0xf] %vm802, %v737
    %837 = vst.msk [vmem:[%s3 + $0x88] sm:$0xf] %vm802, %v738
    %838 = vst.msk [vmem:[%s3 + $0x8c] sm:$0xf] %vm802, %v739
    %839 = vst.msk [vmem:[%s3 + $0x90] sm:$0xf] %vm802, %v740
    %840 = vst.msk [vmem:[%s3 + $0x94] sm:$0xf] %vm802, %v741
    %841 = vst.msk [vmem:[%s3 + $0x98] sm:$0xf] %vm802, %v742
    %842 = vst.msk [vmem:[%s3 + $0x9c] sm:$0xf] %vm802, %v743
    %843 = vst.msk [vmem:[%s3 + $0xa0] sm:$0xf] %vm802, %v744
    %844 = vst.msk [vmem:[%s3 + $0xa4] sm:$0xf] %vm802, %v745
    %845 = vst.msk [vmem:[%s3 + $0xa8] sm:$0xf] %vm802, %v746
    %846 = vst.msk [vmem:[%s3 + $0xac] sm:$0xf] %vm802, %v747
    %847 = vst.msk [vmem:[%s3 + $0xb0] sm:$0xf] %vm802, %v748
    %848 = vst.msk [vmem:[%s3 + $0xb4] sm:$0xf] %vm802, %v749
    %849 = vst.msk [vmem:[%s3 + $0xb8] sm:$0xf] %vm802, %v750
    %850 = vst.msk [vmem:[%s3 + $0xbc] sm:$0xf] %vm802, %v751
    %851 = vst.msk [vmem:[%s3 + $0xc0] sm:$0xf] %vm802, %v752
    // Predicated region
    $region22: #{encoder_forward.10} parent=1 // pred_check
      _
    $region23: #{encoder_forward.10} parent=1 // pred_check_branch
      %853 = sbr.rel (0) target = $region25
    $region24: #{encoder_forward.10} parent=1 // pred_region
      _
    $region25: #{encoder_forward.10} parent=1 // pred_fallthru
      _
    // Predicated region
    $region26: #{encoder_forward.10} parent=1 // pred_check
      _
    $region27: #{encoder_forward.10} parent=1 // pred_check_branch
      %855 = sbr.rel (0) target = $region29
    $region28: #{encoder_forward.10} parent=1 // pred_region
      _
    $region29: #{encoder_forward.10} parent=1 // pred_fallthru
      _
    %856 = vsyncpa [#allocation3], 1
    %857 = vsyncpa [#allocation5], 1

// kernel: encoder_forward.11
$region0: #{encoder_forward.11}
  #allocation0 [shape = 'u32[]', space=smem, size = 0x4, offset = 0x4, fixed_abs, tag = 'smem constant byte address 0x4 - core index']
  #allocation1 [shape = 'u32[144,128]{1,0:T(1,128)}', space=vmem, size = 0x12000, scoped, tag = 'internal scratch']
  %s0 = inlined_call_operand.vmem [shape: bf16[98,1024], index: 0, kind: input, shape index: {}]
  %s1 = inlined_call_operand.hbm [shape: bf16[1024,128], index: 1, kind: input, shape index: {}]
  %s2 = inlined_call_operand.hbm [shape: f32[1,128], index: 2, kind: input, shape index: {}]
  %s3 = inlined_call_operand.vmem [shape: bf16[98,128], index: 3, kind: output, shape index: {}]
  %s4 = sld [smem:[#allocation0]]
  $region30: #{encoder_forward.11} parent=0
    _
  %s6 = ssub.s32 1, %s4
  %s7 = scalar_select 0, %s6, %s4
  $region1: #{encoder_forward.11} parent=0
    #allocation2 [shape = 'u8[262144]{0}', space=vmem, size = 0x40000, scoped, tag = 'input window, operand 1, single buffered']
    #allocation3 [shape = 's32[1]{0}', space=sflag, size = 0x4, scoped, tag = 'scoped memory for encoder_forward.11']
    #allocation4 [shape = 'u8[512]{0}', space=vmem, size = 0x400, scoped, tag = 'input window, operand 2, single buffered']
    #allocation5 [shape = 's32[1]{0}', space=sflag, size = 0x4, scoped, tag = 'scoped memory for encoder_forward.11']
    %8 = vsyncpa [#allocation3], 0
    %9 = vsyncpa [#allocation5], 0
    // Predicated region
    $region2: #{encoder_forward.11} parent=1 // pred_check
      _
    $region3: #{encoder_forward.11} parent=1 // pred_check_branch
      %11 = sbr.rel (0) target = $region5
    $region4: #{encoder_forward.11} parent=1 // pred_region
      _
    $region5: #{encoder_forward.11} parent=1 // pred_fallthru
      _
    // Predicated region
    $region6: #{encoder_forward.11} parent=1 // pred_check
      _
    $region7: #{encoder_forward.11} parent=1 // pred_check_branch
      %13 = sbr.rel (0) target = $region9
    $region8: #{encoder_forward.11} parent=1 // pred_region
      %s15 = ssub.s32 8192, 8192
      %16 = vsyncadd [#allocation3], %s15
      %s17 = sshll.u32 [#allocation2], 4
      %s18 = int_to_ptr.vmem [resolvable:$true] %s17
      %23 = dma.hbm_to_vmem [thread:$0]  %s1, 8192, %s18, [#allocation3], 64, 64, 4
    $region9: #{encoder_forward.11} parent=1 // pred_fallthru
      _
    // Predicated region
    $region10: #{encoder_forward.11} parent=1 // pred_check
      _
    $region11: #{encoder_forward.11} parent=1 // pred_check_branch
      %25 = sbr.rel (0) target = $region13
    $region12: #{encoder_forward.11} parent=1 // pred_region
      %s27 = ssub.s32 16, 16
      %28 = vsyncadd [#allocation5], %s27
      %s30 = sshll.u32 [#allocation4], 4
      %s31 = int_to_ptr.vmem [resolvable:$true] %s30
      %33 = dma.hbm_to_vmem [thread:$0]  %s2, 16, %s31, [#allocation5]
    $region13: #{encoder_forward.11} parent=1 // pred_fallthru
      _
    // Predicated region
    $region14: #{encoder_forward.11} parent=1 // pred_check
      _
    $region15: #{encoder_forward.11} parent=1 // pred_check_branch
      %35 = sbr.rel (0) target = $region17
    $region16: #{encoder_forward.11} parent=1 // pred_region
      %36 = dma.done [#allocation3], 8192
    $region17: #{encoder_forward.11} parent=1 // pred_fallthru
      _
    // Predicated region
    $region18: #{encoder_forward.11} parent=1 // pred_check
      _
    $region19: #{encoder_forward.11} parent=1 // pred_check_branch
      %38 = sbr.rel (0) target = $region21
    $region20: #{encoder_forward.11} parent=1 // pred_region
      %39 = dma.done [#allocation5], 16
    $region21: #{encoder_forward.11} parent=1 // pred_fallthru
      _
    %v41 = vld [vmem:[%s0] sm:$0xff]
    %v42 = vld [vmem:[%s0 + $0x8] sm:$0xff]
    %v43 = vld [vmem:[%s0 + $0x10] sm:$0xff]
    %v44 = vld [vmem:[%s0 + $0x18] sm:$0xff]
    %v45 = vld [vmem:[%s0 + $0x20] sm:$0xff]
    %v46 = vld [vmem:[%s0 + $0x28] sm:$0xff]
    %v47 = vld [vmem:[%s0 + $0x30] sm:$0xff]
    %v48 = vld [vmem:[%s0 + $0x38] sm:$0xff]
    %v49 = vld [vmem:[%s0 + $0x40] sm:$0xff]
    %v50 = vld [vmem:[%s0 + $0x48] sm:$0xff]
    %v51 = vld [vmem:[%s0 + $0x50] sm:$0xff]
    %v52 = vld [vmem:[%s0 + $0x58] sm:$0xff]
    %v53 = vld [vmem:[%s0 + $0x60] sm:$0xff]
    %v54 = vld [vmem:[%s0 + $0x68] sm:$0xff]
    %v55 = vld [vmem:[%s0 + $0x70] sm:$0xff]
    %v56 = vld [vmem:[%s0 + $0x78] sm:$0xff]
    %v57 = vld [vmem:[%s0 + $0x80] sm:$0xff]
    %v58 = vld [vmem:[%s0 + $0x88] sm:$0xff]
    %v59 = vld [vmem:[%s0 + $0x90] sm:$0xff]
    %v60 = vld [vmem:[%s0 + $0x98] sm:$0xff]
    %v61 = vld [vmem:[%s0 + $0xa0] sm:$0xff]
    %v62 = vld [vmem:[%s0 + $0xa8] sm:$0xff]
    %v63 = vld [vmem:[%s0 + $0xb0] sm:$0xff]
    %v64 = vld [vmem:[%s0 + $0xb8] sm:$0xff]
    %v65 = vld [vmem:[%s0 + $0xc0] sm:$0xff]
    %v66 = vld [vmem:[%s0 + $0xc8] sm:$0xff]
    %v67 = vld [vmem:[%s0 + $0xd0] sm:$0xff]
    %v68 = vld [vmem:[%s0 + $0xd8] sm:$0xff]
    %v69 = vld [vmem:[%s0 + $0xe0] sm:$0xff]
    %v70 = vld [vmem:[%s0 + $0xe8] sm:$0xff]
    %v71 = vld [vmem:[%s0 + $0xf0] sm:$0xff]
    %v72 = vld [vmem:[%s0 + $0xf8] sm:$0xff]
    %v73 = vld [vmem:[%s0 + $0x100] sm:$0xff]
    %v74 = vld [vmem:[%s0 + $0x108] sm:$0xff]
    %v75 = vld [vmem:[%s0 + $0x110] sm:$0xff]
    %v76 = vld [vmem:[%s0 + $0x118] sm:$0xff]
    %v77 = vld [vmem:[%s0 + $0x120] sm:$0xff]
    %v78 = vld [vmem:[%s0 + $0x128] sm:$0xff]
    %v79 = vld [vmem:[%s0 + $0x130] sm:$0xff]
    %v80 = vld [vmem:[%s0 + $0x138] sm:$0xff]
    %v81 = vld [vmem:[%s0 + $0x140] sm:$0xff]
    %v82 = vld [vmem:[%s0 + $0x148] sm:$0xff]
    %v83 = vld [vmem:[%s0 + $0x150] sm:$0xff]
    %v84 = vld [vmem:[%s0 + $0x158] sm:$0xff]
    %v85 = vld [vmem:[%s0 + $0x160] sm:$0xff]
    %v86 = vld [vmem:[%s0 + $0x168] sm:$0xff]
    %v87 = vld [vmem:[%s0 + $0x170] sm:$0xff]
    %v88 = vld [vmem:[%s0 + $0x178] sm:$0xff]
    %v89 = vld [vmem:[%s0 + $0x180] sm:$0x11]
    %v90 = vld [vmem:[%s0 + $0x188] sm:$0x11]
    %v91 = vld [vmem:[%s0 + $0x190] sm:$0x11]
    %v92 = vld [vmem:[%s0 + $0x198] sm:$0x11]
    %v93 = vld [vmem:[#allocation2] sm:$0xf]
    %v94 = vld [vmem:[#allocation2 + $0x4] sm:$0xf]
    %v95 = vld [vmem:[#allocation2 + $0x8] sm:$0xf]
    %v96 = vld [vmem:[#allocation2 + $0xc] sm:$0xf]
    %v97 = vld [vmem:[#allocation2 + $0x10] sm:$0xf]
    %v98 = vld [vmem:[#allocation2 + $0x14] sm:$0xf]
    %v99 = vld [vmem:[#allocation2 + $0x18] sm:$0xf]
    %v100 = vld [vmem:[#allocation2 + $0x1c] sm:$0xf]
    %v101 = vld [vmem:[#allocation2 + $0x20] sm:$0xf]
    %v102 = vld [vmem:[#allocation2 + $0x24] sm:$0xf]
    %v103 = vld [vmem:[#allocation2 + $0x28] sm:$0xf]
    %v104 = vld [vmem:[#allocation2 + $0x2c] sm:$0xf]
    %v105 = vld [vmem:[#allocation2 + $0x30] sm:$0xf]
    %v106 = vld [vmem:[#allocation2 + $0x34] sm:$0xf]
    %v107 = vld [vmem:[#allocation2 + $0x38] sm:$0xf]
    %v108 = vld [vmem:[#allocation2 + $0x3c] sm:$0xf]
    %v109 = vld [vmem:[#allocation2 + $0x40] sm:$0xf]
    %v110 = vld [vmem:[#allocation2 + $0x44] sm:$0xf]
    %v111 = vld [vmem:[#allocation2 + $0x48] sm:$0xf]
    %v112 = vld [vmem:[#allocation2 + $0x4c] sm:$0xf]
    %v113 = vld [vmem:[#allocation2 + $0x50] sm:$0xf]
    %v114 = vld [vmem:[#allocation2 + $0x54] sm:$0xf]
    %v115 = vld [vmem:[#allocation2 + $0x58] sm:$0xf]
    %v116 = vld [vmem:[#allocation2 + $0x5c] sm:$0xf]
    %v117 = vld [vmem:[#allocation2 + $0x60] sm:$0xf]
    %v118 = vld [vmem:[#allocation2 + $0x64] sm:$0xf]
    %v119 = vld [vmem:[#allocation2 + $0x68] sm:$0xf]
    %v120 = vld [vmem:[#allocation2 + $0x6c] sm:$0xf]
    %v121 = vld [vmem:[#allocation2 + $0x70] sm:$0xf]
    %v122 = vld [vmem:[#allocation2 + $0x74] sm:$0xf]
    %v123 = vld [vmem:[#allocation2 + $0x78] sm:$0xf]
    %v124 = vld [vmem:[#allocation2 + $0x7c] sm:$0xf]
    %v125 = vld [vmem:[#allocation2 + $0x80] sm:$0xf]
    %v126 = vld [vmem:[#allocation2 + $0x84] sm:$0xf]
    %v127 = vld [vmem:[#allocation2 + $0x88] sm:$0xf]
    %v128 = vld [vmem:[#allocation2 + $0x8c] sm:$0xf]
    %v129 = vld [vmem:[#allocation2 + $0x90] sm:$0xf]
    %v130 = vld [vmem:[#allocation2 + $0x94] sm:$0xf]
    %v131 = vld [vmem:[#allocation2 + $0x98] sm:$0xf]
    %v132 = vld [vmem:[#allocation2 + $0x9c] sm:$0xf]
    %v133 = vld [vmem:[#allocation2 + $0xa0] sm:$0xf]
    %v134 = vld [vmem:[#allocation2 + $0xa4] sm:$0xf]
    %v135 = vld [vmem:[#allocation2 + $0xa8] sm:$0xf]
    %v136 = vld [vmem:[#allocation2 + $0xac] sm:$0xf]
    %v137 = vld [vmem:[#allocation2 + $0xb0] sm:$0xf]
    %v138 = vld [vmem:[#allocation2 + $0xb4] sm:$0xf]
    %v139 = vld [vmem:[#allocation2 + $0xb8] sm:$0xf]
    %v140 = vld [vmem:[#allocation2 + $0xbc] sm:$0xf]
    %v141 = vld [vmem:[#allocation2 + $0xc0] sm:$0xf]
    %v142 = vld [vmem:[#allocation2 + $0xc4] sm:$0xf]
    %v143 = vld [vmem:[#allocation2 + $0xc8] sm:$0xf]
    %v144 = vld [vmem:[#allocation2 + $0xcc] sm:$0xf]
    %v145 = vld [vmem:[#allocation2 + $0xd0] sm:$0xf]
    %v146 = vld [vmem:[#allocation2 + $0xd4] sm:$0xf]
    %v147 = vld [vmem:[#allocation2 + $0xd8] sm:$0xf]
    %v148 = vld [vmem:[#allocation2 + $0xdc] sm:$0xf]
    %v149 = vld [vmem:[#allocation2 + $0xe0] sm:$0xf]
    %v150 = vld [vmem:[#allocation2 + $0xe4] sm:$0xf]
    %v151 = vld [vmem:[#allocation2 + $0xe8] sm:$0xf]
    %v152 = vld [vmem:[#allocation2 + $0xec] sm:$0xf]
    %v153 = vld [vmem:[#allocation2 + $0xf0] sm:$0xf]
    %v154 = vld [vmem:[#allocation2 + $0xf4] sm:$0xf]
    %v155 = vld [vmem:[#allocation2 + $0xf8] sm:$0xf]
    %v156 = vld [vmem:[#allocation2 + $0xfc] sm:$0xf]
    %v157 = vld [vmem:[#allocation2 + $0x100] sm:$0xf]
    %v158 = vld [vmem:[#allocation2 + $0x104] sm:$0xf]
    %v159 = vld [vmem:[#allocation2 + $0x108] sm:$0xf]
    %v160 = vld [vmem:[#allocation2 + $0x10c] sm:$0xf]
    %v161 = vld [vmem:[#allocation2 + $0x110] sm:$0xf]
    %v162 = vld [vmem:[#allocation2 + $0x114] sm:$0xf]
    %v163 = vld [vmem:[#allocation2 + $0x118] sm:$0xf]
    %v164 = vld [vmem:[#allocation2 + $0x11c] sm:$0xf]
    %v165 = vld [vmem:[#allocation2 + $0x120] sm:$0xf]
    %v166 = vld [vmem:[#allocation2 + $0x124] sm:$0xf]
    %v167 = vld [vmem:[#allocation2 + $0x128] sm:$0xf]
    %v168 = vld [vmem:[#allocation2 + $0x12c] sm:$0xf]
    %v169 = vld [vmem:[#allocation2 + $0x130] sm:$0xf]
    %v170 = vld [vmem:[#allocation2 + $0x134] sm:$0xf]
    %v171 = vld [vmem:[#allocation2 + $0x138] sm:$0xf]
    %v172 = vld [vmem:[#allocation2 + $0x13c] sm:$0xf]
    %v173 = vld [vmem:[#allocation2 + $0x140] sm:$0xf]
    %v174 = vld [vmem:[#allocation2 + $0x144] sm:$0xf]
    %v175 = vld [vmem:[#allocation2 + $0x148] sm:$0xf]
    %v176 = vld [vmem:[#allocation2 + $0x14c] sm:$0xf]
    %v177 = vld [vmem:[#allocation2 + $0x150] sm:$0xf]
    %v178 = vld [vmem:[#allocation2 + $0x154] sm:$0xf]
    %v179 = vld [vmem:[#allocation2 + $0x158] sm:$0xf]
    %v180 = vld [vmem:[#allocation2 + $0x15c] sm:$0xf]
    %v181 = vld [vmem:[#allocation2 + $0x160] sm:$0xf]
    %v182 = vld [vmem:[#allocation2 + $0x164] sm:$0xf]
    %v183 = vld [vmem:[#allocation2 + $0x168] sm:$0xf]
    %v184 = vld [vmem:[#allocation2 + $0x16c] sm:$0xf]
    %v185 = vld [vmem:[#allocation2 + $0x170] sm:$0xf]
    %v186 = vld [vmem:[#allocation2 + $0x174] sm:$0xf]
    %v187 = vld [vmem:[#allocation2 + $0x178] sm:$0xf]
    %v188 = vld [vmem:[#allocation2 + $0x17c] sm:$0xf]
    %v189 = vld [vmem:[#allocation2 + $0x180] sm:$0xf]
    %v190 = vld [vmem:[#allocation2 + $0x184] sm:$0xf]
    %v191 = vld [vmem:[#allocation2 + $0x188] sm:$0xf]
    %v192 = vld [vmem:[#allocation2 + $0x18c] sm:$0xf]
    %v193 = vld [vmem:[#allocation2 + $0x190] sm:$0xf]
    %v194 = vld [vmem:[#allocation2 + $0x194] sm:$0xf]
    %v195 = vld [vmem:[#allocation2 + $0x198] sm:$0xf]
    %v196 = vld [vmem:[#allocation2 + $0x19c] sm:$0xf]
    %v197 = vld [vmem:[#allocation2 + $0x1a0] sm:$0xf]
    %v198 = vld [vmem:[#allocation2 + $0x1a4] sm:$0xf]
    %v199 = vld [vmem:[#allocation2 + $0x1a8] sm:$0xf]
    %v200 = vld [vmem:[#allocation2 + $0x1ac] sm:$0xf]
    %v201 = vld [vmem:[#allocation2 + $0x1b0] sm:$0xf]
    %v202 = vld [vmem:[#allocation2 + $0x1b4] sm:$0xf]
    %v203 = vld [vmem:[#allocation2 + $0x1b8] sm:$0xf]
    %v204 = vld [vmem:[#allocation2 + $0x1bc] sm:$0xf]
    %v205 = vld [vmem:[#allocation2 + $0x1c0] sm:$0xf]
    %v206 = vld [vmem:[#allocation2 + $0x1c4] sm:$0xf]
    %v207 = vld [vmem:[#allocation2 + $0x1c8] sm:$0xf]
    %v208 = vld [vmem:[#allocation2 + $0x1cc] sm:$0xf]
    %v209 = vld [vmem:[#allocation2 + $0x1d0] sm:$0xf]
    %v210 = vld [vmem:[#allocation2 + $0x1d4] sm:$0xf]
    %v211 = vld [vmem:[#allocation2 + $0x1d8] sm:$0xf]
    %v212 = vld [vmem:[#allocation2 + $0x1dc] sm:$0xf]
    %v213 = vld [vmem:[#allocation2 + $0x1e0] sm:$0xf]
    %v214 = vld [vmem:[#allocation2 + $0x1e4] sm:$0xf]
    %v215 = vld [vmem:[#allocation2 + $0x1e8] sm:$0xf]
    %v216 = vld [vmem:[#allocation2 + $0x1ec] sm:$0xf]
    %v217 = vld [vmem:[#allocation2 + $0x1f0] sm:$0xf]
    %v218 = vld [vmem:[#allocation2 + $0x1f4] sm:$0xf]
    %v219 = vld [vmem:[#allocation2 + $0x1f8] sm:$0xf]
    %v220 = vld [vmem:[#allocation2 + $0x1fc] sm:$0xf]
    %v221 = vld [vmem:[#allocation4] sm:$0x1]
    %v223 = vlaneseq
    %v224 = vshrl.u32 %v223, 7
    %v225 = vsub.s32 0, %v224
    %v226 = vrot.slane %v221, %v225
    %v280 = vunpack.c.l.b16 %v41
    %v281 = vunpack.c.h.b16 %v41
    %v282 = vunpack.c.l.b16 %v42
    %v283 = vunpack.c.h.b16 %v42
    %v284 = vunpack.c.l.b16 %v43
    %v285 = vunpack.c.h.b16 %v43
    %v286 = vunpack.c.l.b16 %v44
    %v287 = vunpack.c.h.b16 %v44
    %v288 = vunpack.c.l.b16 %v45
    %v289 = vunpack.c.h.b16 %v45
    %v290 = vunpack.c.l.b16 %v46
    %v291 = vunpack.c.h.b16 %v46
    %v292 = vunpack.c.l.b16 %v47
    %v293 = vunpack.c.h.b16 %v47
    %v294 = vunpack.c.l.b16 %v48
    %v295 = vunpack.c.h.b16 %v48
    %v296 = vunpack.c.l.b16 %v49
    %v297 = vunpack.c.h.b16 %v49
    %v298 = vunpack.c.l.b16 %v50
    %v299 = vunpack.c.h.b16 %v50
    %v300 = vunpack.c.l.b16 %v51
    %v301 = vunpack.c.h.b16 %v51
    %v302 = vunpack.c.l.b16 %v52
    %v303 = vunpack.c.h.b16 %v52
    %v304 = vunpack.c.l.b16 %v53
    %v305 = vunpack.c.h.b16 %v53
    %v306 = vunpack.c.l.b16 %v54
    %v307 = vunpack.c.h.b16 %v54
    %v308 = vunpack.c.l.b16 %v55
    %v309 = vunpack.c.h.b16 %v55
    %v310 = vunpack.c.l.b16 %v56
    %v311 = vunpack.c.h.b16 %v56
    %v312 = vunpack.c.l.b16 %v57
    %v313 = vunpack.c.h.b16 %v57
    %v314 = vunpack.c.l.b16 %v58
    %v315 = vunpack.c.h.b16 %v58
    %v316 = vunpack.c.l.b16 %v59
    %v317 = vunpack.c.h.b16 %v59
    %v318 = vunpack.c.l.b16 %v60
    %v319 = vunpack.c.h.b16 %v60
    %v320 = vunpack.c.l.b16 %v61
    %v321 = vunpack.c.h.b16 %v61
    %v322 = vunpack.c.l.b16 %v62
    %v323 = vunpack.c.h.b16 %v62
    %v324 = vunpack.c.l.b16 %v63
    %v325 = vunpack.c.h.b16 %v63
    %v326 = vunpack.c.l.b16 %v64
    %v327 = vunpack.c.h.b16 %v64
    %v328 = vunpack.c.l.b16 %v65
    %v329 = vunpack.c.h.b16 %v65
    %v330 = vunpack.c.l.b16 %v66
    %v331 = vunpack.c.h.b16 %v66
    %v332 = vunpack.c.l.b16 %v67
    %v333 = vunpack.c.h.b16 %v67
    %v334 = vunpack.c.l.b16 %v68
    %v335 = vunpack.c.h.b16 %v68
    %v336 = vunpack.c.l.b16 %v69
    %v337 = vunpack.c.h.b16 %v69
    %v338 = vunpack.c.l.b16 %v70
    %v339 = vunpack.c.h.b16 %v70
    %v340 = vunpack.c.l.b16 %v71
    %v341 = vunpack.c.h.b16 %v71
    %v342 = vunpack.c.l.b16 %v72
    %v343 = vunpack.c.h.b16 %v72
    %v344 = vunpack.c.l.b16 %v73
    %v345 = vunpack.c.h.b16 %v73
    %v346 = vunpack.c.l.b16 %v74
    %v347 = vunpack.c.h.b16 %v74
    %v348 = vunpack.c.l.b16 %v75
    %v349 = vunpack.c.h.b16 %v75
    %v350 = vunpack.c.l.b16 %v76
    %v351 = vunpack.c.h.b16 %v76
    %v352 = vunpack.c.l.b16 %v77
    %v353 = vunpack.c.h.b16 %v77
    %v354 = vunpack.c.l.b16 %v78
    %v355 = vunpack.c.h.b16 %v78
    %v356 = vunpack.c.l.b16 %v79
    %v357 = vunpack.c.h.b16 %v79
    %v358 = vunpack.c.l.b16 %v80
    %v359 = vunpack.c.h.b16 %v80
    %v360 = vunpack.c.l.b16 %v81
    %v361 = vunpack.c.h.b16 %v81
    %v362 = vunpack.c.l.b16 %v82
    %v363 = vunpack.c.h.b16 %v82
    %v364 = vunpack.c.l.b16 %v83
    %v365 = vunpack.c.h.b16 %v83
    %v366 = vunpack.c.l.b16 %v84
    %v367 = vunpack.c.h.b16 %v84
    %v368 = vunpack.c.l.b16 %v85
    %v369 = vunpack.c.h.b16 %v85
    %v370 = vunpack.c.l.b16 %v86
    %v371 = vunpack.c.h.b16 %v86
    %v372 = vunpack.c.l.b16 %v87
    %v373 = vunpack.c.h.b16 %v87
    %v374 = vunpack.c.l.b16 %v88
    %v375 = vunpack.c.h.b16 %v88
    %v376 = vunpack.c.l.b16 %v89
    %v377 = vunpack.c.h.b16 %v89
    %v378 = vunpack.c.l.b16 %v90
    %v379 = vunpack.c.h.b16 %v90
    %v380 = vunpack.c.l.b16 %v91
    %v381 = vunpack.c.h.b16 %v91
    %v382 = vunpack.c.l.b16 %v92
    %v383 = vunpack.c.h.b16 %v92
    %v384 = vpack.c.b16 %v288, %v280
    %v385 = vpack.c.b16 %v289, %v281
    %v386 = vpack.c.b16 %v290, %v282
    %v387 = vpack.c.b16 %v291, %v283
    %v388 = vpack.c.b16 %v292, %v284
    %v389 = vpack.c.b16 %v293, %v285
    %v390 = vpack.c.b16 %v294, %v286
    %v391 = vpack.c.b16 %v295, %v287
    %v392 = vpack.c.b16 %v304, %v296
    %v393 = vpack.c.b16 %v305, %v297
    %v394 = vpack.c.b16 %v306, %v298
    %v395 = vpack.c.b16 %v307, %v299
    %v396 = vpack.c.b16 %v308, %v300
    %v397 = vpack.c.b16 %v309, %v301
    %v398 = vpack.c.b16 %v310, %v302
    %v399 = vpack.c.b16 %v311, %v303
    %v400 = vpack.c.b16 %v320, %v312
    %v401 = vpack.c.b16 %v321, %v313
    %v402 = vpack.c.b16 %v322, %v314
    %v403 = vpack.c.b16 %v323, %v315
    %v404 = vpack.c.b16 %v324, %v316
    %v405 = vpack.c.b16 %v325, %v317
    %v406 = vpack.c.b16 %v326, %v318
    %v407 = vpack.c.b16 %v327, %v319
    %v408 = vpack.c.b16 %v336, %v328
    %v409 = vpack.c.b16 %v337, %v329
    %v410 = vpack.c.b16 %v338, %v330
    %v411 = vpack.c.b16 %v339, %v331
    %v412 = vpack.c.b16 %v340, %v332
    %v413 = vpack.c.b16 %v341, %v333
    %v414 = vpack.c.b16 %v342, %v334
    %v415 = vpack.c.b16 %v343, %v335
    %v416 = vpack.c.b16 %v352, %v344
    %v417 = vpack.c.b16 %v353, %v345
    %v418 = vpack.c.b16 %v354, %v346
    %v419 = vpack.c.b16 %v355, %v347
    %v420 = vpack.c.b16 %v356, %v348
    %v421 = vpack.c.b16 %v357, %v349
    %v422 = vpack.c.b16 %v358, %v350
    %v423 = vpack.c.b16 %v359, %v351
    %v424 = vpack.c.b16 %v368, %v360
    %v425 = vpack.c.b16 %v369, %v361
    %v426 = vpack.c.b16 %v370, %v362
    %v427 = vpack.c.b16 %v371, %v363
    %v428 = vpack.c.b16 %v372, %v364
    %v429 = vpack.c.b16 %v373, %v365
    %v430 = vpack.c.b16 %v374, %v366
    %v431 = vpack.c.b16 %v375, %v367
    %v432 = vpack.c.b16 %v376, %v376
    %v433 = vpack.c.b16 %v377, %v377
    %v434 = vpack.c.b16 %v378, %v378
    %v435 = vpack.c.b16 %v379, %v379
    %v436 = vpack.c.b16 %v380, %v380
    %v437 = vpack.c.b16 %v381, %v381
    %v438 = vpack.c.b16 %v382, %v382
    %v439 = vpack.c.b16 %v383, %v383
    %v624 = vunpack.c.l.b16 %v93
    %v625 = vunpack.c.l.b16 %v94
    %v626 = vunpack.c.l.b16 %v95
    %v627 = vunpack.c.l.b16 %v96
    %v628 = vunpack.c.l.b16 %v97
    %v629 = vunpack.c.l.b16 %v98
    %v630 = vunpack.c.l.b16 %v99
    %v631 = vunpack.c.l.b16 %v100
    %v632 = vunpack.c.l.b16 %v101
    %v633 = vunpack.c.l.b16 %v102
    %v634 = vunpack.c.l.b16 %v103
    %v635 = vunpack.c.l.b16 %v104
    %v636 = vunpack.c.l.b16 %v105
    %v637 = vunpack.c.l.b16 %v106
    %v638 = vunpack.c.l.b16 %v107
    %v639 = vunpack.c.l.b16 %v108
    %v640 = vunpack.c.l.b16 %v109
    %v641 = vunpack.c.l.b16 %v110
    %v642 = vunpack.c.l.b16 %v111
    %v643 = vunpack.c.l.b16 %v112
    %v644 = vunpack.c.l.b16 %v113
    %v645 = vunpack.c.l.b16 %v114
    %v646 = vunpack.c.l.b16 %v115
    %v647 = vunpack.c.l.b16 %v116
    %v648 = vunpack.c.l.b16 %v117
    %v649 = vunpack.c.l.b16 %v118
    %v650 = vunpack.c.l.b16 %v119
    %v651 = vunpack.c.l.b16 %v120
    %v652 = vunpack.c.l.b16 %v121
    %v653 = vunpack.c.l.b16 %v122
    %v654 = vunpack.c.l.b16 %v123
    %v655 = vunpack.c.l.b16 %v124
    %v656 = vunpack.c.l.b16 %v125
    %v657 = vunpack.c.l.b16 %v126
    %v658 = vunpack.c.l.b16 %v127
    %v659 = vunpack.c.l.b16 %v128
    %v660 = vunpack.c.l.b16 %v129
    %v661 = vunpack.c.l.b16 %v130
    %v662 = vunpack.c.l.b16 %v131
    %v663 = vunpack.c.l.b16 %v132
    %v664 = vunpack.c.l.b16 %v133
    %v665 = vunpack.c.l.b16 %v134
    %v666 = vunpack.c.l.b16 %v135
    %v667 = vunpack.c.l.b16 %v136
    %v668 = vunpack.c.l.b16 %v137
    %v669 = vunpack.c.l.b16 %v138
    %v670 = vunpack.c.l.b16 %v139
    %v671 = vunpack.c.l.b16 %v140
    %v672 = vunpack.c.l.b16 %v141
    %v673 = vunpack.c.l.b16 %v142
    %v674 = vunpack.c.l.b16 %v143
    %v675 = vunpack.c.l.b16 %v144
    %v676 = vunpack.c.l.b16 %v145
    %v677 = vunpack.c.l.b16 %v146
    %v678 = vunpack.c.l.b16 %v147
    %v679 = vunpack.c.l.b16 %v148
    %v680 = vunpack.c.l.b16 %v149
    %v681 = vunpack.c.l.b16 %v150
    %v682 = vunpack.c.l.b16 %v151
    %v683 = vunpack.c.l.b16 %v152
    %v684 = vunpack.c.l.b16 %v153
    %v685 = vunpack.c.l.b16 %v154
    %v686 = vunpack.c.l.b16 %v155
    %v687 = vunpack.c.l.b16 %v156
    %v688 = vunpack.c.l.b16 %v157
    %v689 = vunpack.c.l.b16 %v158
    %v690 = vunpack.c.l.b16 %v159
    %v691 = vunpack.c.l.b16 %v160
    %v692 = vunpack.c.l.b16 %v161
    %v693 = vunpack.c.l.b16 %v162
    %v694 = vunpack.c.l.b16 %v163
    %v695 = vunpack.c.l.b16 %v164
    %v696 = vunpack.c.l.b16 %v165
    %v697 = vunpack.c.l.b16 %v166
    %v698 = vunpack.c.l.b16 %v167
    %v699 = vunpack.c.l.b16 %v168
    %v700 = vunpack.c.l.b16 %v169
    %v701 = vunpack.c.l.b16 %v170
    %v702 = vunpack.c.l.b16 %v171
    %v703 = vunpack.c.l.b16 %v172
    %v704 = vunpack.c.l.b16 %v173
    %v705 = vunpack.c.l.b16 %v174
    %v706 = vunpack.c.l.b16 %v175
    %v707 = vunpack.c.l.b16 %v176
    %v708 = vunpack.c.l.b16 %v177
    %v709 = vunpack.c.l.b16 %v178
    %v710 = vunpack.c.l.b16 %v179
    %v711 = vunpack.c.l.b16 %v180
    %v712 = vunpack.c.l.b16 %v181
    %v713 = vunpack.c.l.b16 %v182
    %v714 = vunpack.c.l.b16 %v183
    %v715 = vunpack.c.l.b16 %v184
    %v716 = vunpack.c.l.b16 %v185
    %v717 = vunpack.c.l.b16 %v186
    %v718 = vunpack.c.l.b16 %v187
    %v719 = vunpack.c.l.b16 %v188
    %v720 = vunpack.c.l.b16 %v189
    %v721 = vunpack.c.l.b16 %v190
    %v722 = vunpack.c.l.b16 %v191
    %v723 = vunpack.c.l.b16 %v192
    %v724 = vunpack.c.l.b16 %v193
    %v725 = vunpack.c.l.b16 %v194
    %v726 = vunpack.c.l.b16 %v195
    %v727 = vunpack.c.l.b16 %v196
    %v728 = vunpack.c.l.b16 %v197
    %v729 = vunpack.c.l.b16 %v198
    %v730 = vunpack.c.l.b16 %v199
    %v731 = vunpack.c.l.b16 %v200
    %v732 = vunpack.c.l.b16 %v201
    %v733 = vunpack.c.l.b16 %v202
    %v734 = vunpack.c.l.b16 %v203
    %v735 = vunpack.c.l.b16 %v204
    %v736 = vunpack.c.l.b16 %v205
    %v737 = vunpack.c.l.b16 %v206
    %v738 = vunpack.c.l.b16 %v207
    %v739 = vunpack.c.l.b16 %v208
    %v740 = vunpack.c.l.b16 %v209
    %v741 = vunpack.c.l.b16 %v210
    %v742 = vunpack.c.l.b16 %v211
    %v743 = vunpack.c.l.b16 %v212
    %v744 = vunpack.c.l.b16 %v213
    %v745 = vunpack.c.l.b16 %v214
    %v746 = vunpack.c.l.b16 %v215
    %v747 = vunpack.c.l.b16 %v216
    %v748 = vunpack.c.l.b16 %v217
    %v749 = vunpack.c.l.b16 %v218
    %v750 = vunpack.c.l.b16 %v219
    %v751 = vunpack.c.l.b16 %v220
    %v752 = vpack.c.b16 %v625, %v624
    %v753 = vpack.c.b16 %v627, %v626
    %v754 = vpack.c.b16 %v629, %v628
    %v755 = vpack.c.b16 %v631, %v630
    %v756 = vpack.c.b16 %v633, %v632
    %v757 = vpack.c.b16 %v635, %v634
    %v758 = vpack.c.b16 %v637, %v636
    %v759 = vpack.c.b16 %v639, %v638
    %v760 = vpack.c.b16 %v641, %v640
    %v761 = vpack.c.b16 %v643, %v642
    %v762 = vpack.c.b16 %v645, %v644
    %v763 = vpack.c.b16 %v647, %v646
    %v764 = vpack.c.b16 %v649, %v648
    %v765 = vpack.c.b16 %v651, %v650
    %v766 = vpack.c.b16 %v653, %v652
    %v767 = vpack.c.b16 %v655, %v654
    %v768 = vpack.c.b16 %v657, %v656
    %v769 = vpack.c.b16 %v659, %v658
    %v770 = vpack.c.b16 %v661, %v660
    %v771 = vpack.c.b16 %v663, %v662
    %v772 = vpack.c.b16 %v665, %v664
    %v773 = vpack.c.b16 %v667, %v666
    %v774 = vpack.c.b16 %v669, %v668
    %v775 = vpack.c.b16 %v671, %v670
    %v776 = vpack.c.b16 %v673, %v672
    %v777 = vpack.c.b16 %v675, %v674
    %v778 = vpack.c.b16 %v677, %v676
    %v779 = vpack.c.b16 %v679, %v678
    %v780 = vpack.c.b16 %v681, %v680
    %v781 = vpack.c.b16 %v683, %v682
    %v782 = vpack.c.b16 %v685, %v684
    %v783 = vpack.c.b16 %v687, %v686
    %v784 = vpack.c.b16 %v689, %v688
    %v785 = vpack.c.b16 %v691, %v690
    %v786 = vpack.c.b16 %v693, %v692
    %v787 = vpack.c.b16 %v695, %v694
    %v788 = vpack.c.b16 %v697, %v696
    %v789 = vpack.c.b16 %v699, %v698
    %v790 = vpack.c.b16 %v701, %v700
    %v791 = vpack.c.b16 %v703, %v702
    %v792 = vpack.c.b16 %v705, %v704
    %v793 = vpack.c.b16 %v707, %v706
    %v794 = vpack.c.b16 %v709, %v708
    %v795 = vpack.c.b16 %v711, %v710
    %v796 = vpack.c.b16 %v713, %v712
    %v797 = vpack.c.b16 %v715, %v714
    %v798 = vpack.c.b16 %v717, %v716
    %v799 = vpack.c.b16 %v719, %v718
    %v800 = vpack.c.b16 %v721, %v720
    %v801 = vpack.c.b16 %v723, %v722
    %v802 = vpack.c.b16 %v725, %v724
    %v803 = vpack.c.b16 %v727, %v726
    %v804 = vpack.c.b16 %v729, %v728
    %v805 = vpack.c.b16 %v731, %v730
    %v806 = vpack.c.b16 %v733, %v732
    %v807 = vpack.c.b16 %v735, %v734
    %v808 = vpack.c.b16 %v737, %v736
    %v809 = vpack.c.b16 %v739, %v738
    %v810 = vpack.c.b16 %v741, %v740
    %v811 = vpack.c.b16 %v743, %v742
    %v812 = vpack.c.b16 %v745, %v744
    %v813 = vpack.c.b16 %v747, %v746
    %v814 = vpack.c.b16 %v749, %v748
    %v815 = vpack.c.b16 %v751, %v750
    %880 = vmatprep.subr.bf16.mxu0 0
    %881 = vmatpush1.bf16.msra.mxu0 %v759
    %882 = vmatprep.subr.bf16.mxu0 0
    %883 = vmatpush1.bf16.msra.mxu0 %v758
    %884 = vmatprep.subr.bf16.mxu0 0
    %885 = vmatpush1.bf16.msra.mxu0 %v757
    %886 = vmatprep.subr.bf16.mxu0 0
    %887 = vmatpush1.bf16.msra.mxu0 %v756
    %888 = vmatprep.subr.bf16.mxu0 0
    %889 = vmatpush1.bf16.msra.mxu0 %v755
    %890 = vmatprep.subr.bf16.mxu0 0
    %891 = vmatpush1.bf16.msra.mxu0 %v754
    %892 = vmatprep.subr.bf16.mxu0 0
    %893 = vmatpush1.bf16.msra.mxu0 %v753
    %894 = vmatprep.subr.bf16.mxu0 0
    %895 = vmatpush1.bf16.msra.mxu0 %v752
    %896 = vmatprep.subr.bf16.mxu0 0
    %897 = vmatpush2.bf16.msra.mxu0 %v767
    %898 = vmatprep.subr.bf16.mxu0 0
    %899 = vmatpush2.bf16.msra.mxu0 %v766
    %900 = vmatprep.subr.bf16.mxu0 0
    %901 = vmatpush2.bf16.msra.mxu0 %v765
    %902 = vmatprep.subr.bf16.mxu0 0
    %903 = vmatpush2.bf16.msra.mxu0 %v764
    %904 = vmatprep.subr.bf16.mxu0 0
    %905 = vmatpush2.bf16.msra.mxu0 %v763
    %906 = vmatprep.subr.bf16.mxu0 0
    %907 = vmatpush2.bf16.msra.mxu0 %v762
    %908 = vmatprep.subr.bf16.mxu0 0
    %909 = vmatpush2.bf16.msra.mxu0 %v761
    %910 = vmatprep.subr.bf16.mxu0 0
    %911 = vmatpush2.bf16.msra.mxu0 %v760
    %912 = vmatprep.mubr.bf16.mxu0 %v385
    %913 = vmatmul.mubr.bf16.gmra.mxu0 %v384
    %v914 = vpop.f32.mrf.mxu0
    %v915 = vadd.f32 %v226, %v914
    %v916 = vpop.f32.mrf.mxu0
    %v917 = vpop.f32.mrf.mxu0
    %v918 = vadd.f32 %v226, %v917
    %v919 = vpop.f32.mrf.mxu0
    %920 = vmatprep.mubr.bf16.mxu0 %v393
    %921 = vmatmul.mubr.bf16.gmra.mxu0 %v392
    %v922 = vpop.f32.mrf.mxu0
    %v923 = vadd.f32 %v226, %v922
    %v924 = vpop.f32.mrf.mxu0
    %v925 = vpop.f32.mrf.mxu0
    %v926 = vadd.f32 %v226, %v925
    %v927 = vpop.f32.mrf.mxu0
    %928 = vmatprep.mubr.bf16.mxu0 %v401
    %929 = vmatmul.mubr.bf16.gmra.mxu0 %v400
    %v930 = vpop.f32.mrf.mxu0
    %v931 = vadd.f32 %v226, %v930
    %v932 = vpop.f32.mrf.mxu0
    %v933 = vpop.f32.mrf.mxu0
    %v934 = vadd.f32 %v226, %v933
    %v935 = vpop.f32.mrf.mxu0
    %936 = vmatprep.mubr.bf16.mxu0 %v409
    %937 = vmatmul.mubr.bf16.gmra.mxu0 %v408
    %v938 = vpop.f32.mrf.mxu0
    %v939 = vadd.f32 %v226, %v938
    %v940 = vpop.f32.mrf.mxu0
    %v941 = vpop.f32.mrf.mxu0
    %v942 = vadd.f32 %v226, %v941
    %v943 = vpop.f32.mrf.mxu0
    %944 = vmatprep.mubr.bf16.mxu0 %v417
    %945 = vmatmul.mubr.bf16.gmra.mxu0 %v416
    %v946 = vpop.f32.mrf.mxu0
    %v947 = vadd.f32 %v226, %v946
    %v948 = vpop.f32.mrf.mxu0
    %v949 = vpop.f32.mrf.mxu0
    %v950 = vadd.f32 %v226, %v949
    %v951 = vpop.f32.mrf.mxu0
    %952 = vmatprep.mubr.bf16.mxu0 %v425
    %953 = vmatmul.mubr.bf16.gmra.mxu0 %v424
    %v954 = vpop.f32.mrf.mxu0
    %v955 = vadd.f32 %v226, %v954
    %v956 = vpop.f32.mrf.mxu0
    %v957 = vpop.f32.mrf.mxu0
    %v958 = vadd.f32 %v226, %v957
    %v959 = vpop.f32.mrf.mxu0
    %960 = vmatprep.mubr.bf16.mxu0 %v433
    %961 = vmatmul.mubr.bf16.gmra.mxu0 %v432
    %v962 = vpop.f32.mrf.mxu0
    %v963 = vadd.f32 %v226, %v962
    %v964 = vpop.f32.mrf.mxu0
    %v965 = vpop.f32.mrf.mxu0
    %v966 = vpop.f32.mrf.mxu0
    %967 = vdwg.mxu0
    %968 = vmatprep.subr.bf16.mxu0 0
    %969 = vmatpush1.bf16.msra.mxu0 %v775
    %970 = vmatprep.subr.bf16.mxu0 0
    %971 = vmatpush1.bf16.msra.mxu0 %v774
    %972 = vmatprep.subr.bf16.mxu0 0
    %973 = vmatpush1.bf16.msra.mxu0 %v773
    %974 = vmatprep.subr.bf16.mxu0 0
    %975 = vmatpush1.bf16.msra.mxu0 %v772
    %976 = vmatprep.subr.bf16.mxu0 0
    %977 = vmatpush1.bf16.msra.mxu0 %v771
    %978 = vmatprep.subr.bf16.mxu0 0
    %979 = vmatpush1.bf16.msra.mxu0 %v770
    %980 = vmatprep.subr.bf16.mxu0 0
    %981 = vmatpush1.bf16.msra.mxu0 %v769
    %982 = vmatprep.subr.bf16.mxu0 0
    %983 = vmatpush1.bf16.msra.mxu0 %v768
    %984 = vmatprep.subr.bf16.mxu0 0
    %985 = vmatpush2.bf16.msra.mxu0 %v783
    %986 = vmatprep.subr.bf16.mxu0 0
    %987 = vmatpush2.bf16.msra.mxu0 %v782
    %988 = vmatprep.subr.bf16.mxu0 0
    %989 = vmatpush2.bf16.msra.mxu0 %v781
    %990 = vmatprep.subr.bf16.mxu0 0
    %991 = vmatpush2.bf16.msra.mxu0 %v780
    %992 = vmatprep.subr.bf16.mxu0 0
    %993 = vmatpush2.bf16.msra.mxu0 %v779
    %994 = vmatprep.subr.bf16.mxu0 0
    %995 = vmatpush2.bf16.msra.mxu0 %v778
    %996 = vmatprep.subr.bf16.mxu0 0
    %997 = vmatpush2.bf16.msra.mxu0 %v777
    %998 = vmatprep.subr.bf16.mxu0 0
    %999 = vmatpush2.bf16.msra.mxu0 %v776
    %1000 = vmatprep.mubr.bf16.mxu0 %v387
    %1001 = vmatmul.mubr.bf16.gmra.mxu0 %v386
    %v1002 = vpop.f32.mrf.mxu0
    %v1003 = vadd.f32 %v915, %v1002
    %v1004 = vpop.f32.mrf.mxu0
    %v1005 = vpop.f32.mrf.mxu0
    %v1006 = vadd.f32 %v918, %v1005
    %v1007 = vpop.f32.mrf.mxu0
    %1008 = vmatprep.mubr.bf16.mxu0 %v395
    %1009 = vmatmul.mubr.bf16.gmra.mxu0 %v394
    %v1010 = vpop.f32.mrf.mxu0
    %v1011 = vadd.f32 %v923, %v1010
    %v1012 = vpop.f32.mrf.mxu0
    %v1013 = vpop.f32.mrf.mxu0
    %v1014 = vadd.f32 %v926, %v1013
    %v1015 = vpop.f32.mrf.mxu0
    %1016 = vmatprep.mubr.bf16.mxu0 %v403
    %1017 = vmatmul.mubr.bf16.gmra.mxu0 %v402
    %v1018 = vpop.f32.mrf.mxu0
    %v1019 = vadd.f32 %v931, %v1018
    %v1020 = vpop.f32.mrf.mxu0
    %v1021 = vpop.f32.mrf.mxu0
    %v1022 = vadd.f32 %v934, %v1021
    %v1023 = vpop.f32.mrf.mxu0
    %1024 = vmatprep.mubr.bf16.mxu0 %v411
    %1025 = vmatmul.mubr.bf16.gmra.mxu0 %v410
    %v1026 = vpop.f32.mrf.mxu0
    %v1027 = vadd.f32 %v939, %v1026
    %v1028 = vpop.f32.mrf.mxu0
    %v1029 = vpop.f32.mrf.mxu0
    %v1030 = vadd.f32 %v942, %v1029
    %v1031 = vpop.f32.mrf.mxu0
    %1032 = vmatprep.mubr.bf16.mxu0 %v419
    %1033 = vmatmul.mubr.bf16.gmra.mxu0 %v418
    %v1034 = vpop.f32.mrf.mxu0
    %v1035 = vadd.f32 %v947, %v1034
    %v1036 = vpop.f32.mrf.mxu0
    %v1037 = vpop.f32.mrf.mxu0
    %v1038 = vadd.f32 %v950, %v1037
    %v1039 = vpop.f32.mrf.mxu0
    %1040 = vmatprep.mubr.bf16.mxu0 %v427
    %1041 = vmatmul.mubr.bf16.gmra.mxu0 %v426
    %v1042 = vpop.f32.mrf.mxu0
    %v1043 = vadd.f32 %v955, %v1042
    %v1044 = vpop.f32.mrf.mxu0
    %v1045 = vpop.f32.mrf.mxu0
    %v1046 = vadd.f32 %v958, %v1045
    %v1047 = vpop.f32.mrf.mxu0
    %1048 = vmatprep.mubr.bf16.mxu0 %v435
    %1049 = vmatmul.mubr.bf16.gmra.mxu0 %v434
    %v1050 = vpop.f32.mrf.mxu0
    %v1051 = vadd.f32 %v963, %v1050
    %v1052 = vpop.f32.mrf.mxu0
    %v1053 = vpop.f32.mrf.mxu0
    %v1054 = vpop.f32.mrf.mxu0
    %1055 = vdwg.mxu0
    %1056 = vmatprep.subr.bf16.mxu0 0
    %1057 = vmatpush1.bf16.msra.mxu0 %v791
    %1058 = vmatprep.subr.bf16.mxu0 0
    %1059 = vmatpush1.bf16.msra.mxu0 %v790
    %1060 = vmatprep.subr.bf16.mxu0 0
    %1061 = vmatpush1.bf16.msra.mxu0 %v789
    %1062 = vmatprep.subr.bf16.mxu0 0
    %1063 = vmatpush1.bf16.msra.mxu0 %v788
    %1064 = vmatprep.subr.bf16.mxu0 0
    %1065 = vmatpush1.bf16.msra.mxu0 %v787
    %1066 = vmatprep.subr.bf16.mxu0 0
    %1067 = vmatpush1.bf16.msra.mxu0 %v786
    %1068 = vmatprep.subr.bf16.mxu0 0
    %1069 = vmatpush1.bf16.msra.mxu0 %v785
    %1070 = vmatprep.subr.bf16.mxu0 0
    %1071 = vmatpush1.bf16.msra.mxu0 %v784
    %1072 = vmatprep.subr.bf16.mxu0 0
    %1073 = vmatpush2.bf16.msra.mxu0 %v799
    %1074 = vmatprep.subr.bf16.mxu0 0
    %1075 = vmatpush2.bf16.msra.mxu0 %v798
    %1076 = vmatprep.subr.bf16.mxu0 0
    %1077 = vmatpush2.bf16.msra.mxu0 %v797
    %1078 = vmatprep.subr.bf16.mxu0 0
    %1079 = vmatpush2.bf16.msra.mxu0 %v796
    %1080 = vmatprep.subr.bf16.mxu0 0
    %1081 = vmatpush2.bf16.msra.mxu0 %v795
    %1082 = vmatprep.subr.bf16.mxu0 0
    %1083 = vmatpush2.bf16.msra.mxu0 %v794
    %1084 = vmatprep.subr.bf16.mxu0 0
    %1085 = vmatpush2.bf16.msra.mxu0 %v793
    %1086 = vmatprep.subr.bf16.mxu0 0
    %1087 = vmatpush2.bf16.msra.mxu0 %v792
    %1088 = vmatprep.mubr.bf16.mxu0 %v389
    %1089 = vmatmul.mubr.bf16.gmra.mxu0 %v388
    %v1090 = vpop.f32.mrf.mxu0
    %v1091 = vadd.f32 %v1003, %v1090
    %v1092 = vpop.f32.mrf.mxu0
    %v1093 = vpop.f32.mrf.mxu0
    %v1094 = vadd.f32 %v1006, %v1093
    %v1095 = vpop.f32.mrf.mxu0
    %1096 = vmatprep.mubr.bf16.mxu0 %v397
    %1097 = vmatmul.mubr.bf16.gmra.mxu0 %v396
    %v1098 = vpop.f32.mrf.mxu0
    %v1099 = vadd.f32 %v1011, %v1098
    %v1100 = vpop.f32.mrf.mxu0
    %v1101 = vpop.f32.mrf.mxu0
    %v1102 = vadd.f32 %v1014, %v1101
    %v1103 = vpop.f32.mrf.mxu0
    %1104 = vmatprep.mubr.bf16.mxu0 %v405
    %1105 = vmatmul.mubr.bf16.gmra.mxu0 %v404
    %v1106 = vpop.f32.mrf.mxu0
    %v1107 = vadd.f32 %v1019, %v1106
    %v1108 = vpop.f32.mrf.mxu0
    %v1109 = vpop.f32.mrf.mxu0
    %v1110 = vadd.f32 %v1022, %v1109
    %v1111 = vpop.f32.mrf.mxu0
    %1112 = vmatprep.mubr.bf16.mxu0 %v413
    %1113 = vmatmul.mubr.bf16.gmra.mxu0 %v412
    %v1114 = vpop.f32.mrf.mxu0
    %v1115 = vadd.f32 %v1027, %v1114
    %v1116 = vpop.f32.mrf.mxu0
    %v1117 = vpop.f32.mrf.mxu0
    %v1118 = vadd.f32 %v1030, %v1117
    %v1119 = vpop.f32.mrf.mxu0
    %1120 = vmatprep.mubr.bf16.mxu0 %v421
    %1121 = vmatmul.mubr.bf16.gmra.mxu0 %v420
    %v1122 = vpop.f32.mrf.mxu0
    %v1123 = vadd.f32 %v1035, %v1122
    %v1124 = vpop.f32.mrf.mxu0
    %v1125 = vpop.f32.mrf.mxu0
    %v1126 = vadd.f32 %v1038, %v1125
    %v1127 = vpop.f32.mrf.mxu0
    %1128 = vmatprep.mubr.bf16.mxu0 %v429
    %1129 = vmatmul.mubr.bf16.gmra.mxu0 %v428
    %v1130 = vpop.f32.mrf.mxu0
    %v1131 = vadd.f32 %v1043, %v1130
    %v1132 = vpop.f32.mrf.mxu0
    %v1133 = vpop.f32.mrf.mxu0
    %v1134 = vadd.f32 %v1046, %v1133
    %v1135 = vpop.f32.mrf.mxu0
    %1136 = vmatprep.mubr.bf16.mxu0 %v437
    %1137 = vmatmul.mubr.bf16.gmra.mxu0 %v436
    %v1138 = vpop.f32.mrf.mxu0
    %v1139 = vadd.f32 %v1051, %v1138
    %v1140 = vpop.f32.mrf.mxu0
    %v1141 = vpop.f32.mrf.mxu0
    %v1142 = vpop.f32.mrf.mxu0
    %1143 = vdwg.mxu0
    %1144 = vmatprep.subr.bf16.mxu0 0
    %1145 = vmatpush1.bf16.msra.mxu0 %v807
    %1146 = vmatprep.subr.bf16.mxu0 0
    %1147 = vmatpush1.bf16.msra.mxu0 %v806
    %1148 = vmatprep.subr.bf16.mxu0 0
    %1149 = vmatpush1.bf16.msra.mxu0 %v805
    %1150 = vmatprep.subr.bf16.mxu0 0
    %1151 = vmatpush1.bf16.msra.mxu0 %v804
    %1152 = vmatprep.subr.bf16.mxu0 0
    %1153 = vmatpush1.bf16.msra.mxu0 %v803
    %1154 = vmatprep.subr.bf16.mxu0 0
    %1155 = vmatpush1.bf16.msra.mxu0 %v802
    %1156 = vmatprep.subr.bf16.mxu0 0
    %1157 = vmatpush1.bf16.msra.mxu0 %v801
    %1158 = vmatprep.subr.bf16.mxu0 0
    %1159 = vmatpush1.bf16.msra.mxu0 %v800
    %1160 = vmatprep.subr.bf16.mxu0 0
    %1161 = vmatpush2.bf16.msra.mxu0 %v815
    %1162 = vmatprep.subr.bf16.mxu0 0
    %1163 = vmatpush2.bf16.msra.mxu0 %v814
    %1164 = vmatprep.subr.bf16.mxu0 0
    %1165 = vmatpush2.bf16.msra.mxu0 %v813
    %1166 = vmatprep.subr.bf16.mxu0 0
    %1167 = vmatpush2.bf16.msra.mxu0 %v812
    %1168 = vmatprep.subr.bf16.mxu0 0
    %1169 = vmatpush2.bf16.msra.mxu0 %v811
    %1170 = vmatprep.subr.bf16.mxu0 0
    %1171 = vmatpush2.bf16.msra.mxu0 %v810
    %1172 = vmatprep.subr.bf16.mxu0 0
    %1173 = vmatpush2.bf16.msra.mxu0 %v809
    %1174 = vmatprep.subr.bf16.mxu0 0
    %1175 = vmatpush2.bf16.msra.mxu0 %v808
    %1176 = vmatprep.mubr.bf16.mxu0 %v391
    %1177 = vmatmul.mubr.bf16.gmra.mxu0 %v390
    %v1178 = vpop.f32.mrf.mxu0
    %v1179 = vadd.f32 %v1091, %v1178
    %v1180 = vpop.f32.mrf.mxu0
    %v1181 = vpop.f32.mrf.mxu0
    %v1182 = vadd.f32 %v1094, %v1181
    %v1183 = vpop.f32.mrf.mxu0
    %1184 = vmatprep.mubr.bf16.mxu0 %v399
    %1185 = vmatmul.mubr.bf16.gmra.mxu0 %v398
    %v1186 = vpop.f32.mrf.mxu0
    %v1187 = vadd.f32 %v1099, %v1186
    %v1188 = vpop.f32.mrf.mxu0
    %v1189 = vpop.f32.mrf.mxu0
    %v1190 = vadd.f32 %v1102, %v1189
    %v1191 = vpop.f32.mrf.mxu0
    %1192 = vmatprep.mubr.bf16.mxu0 %v407
    %1193 = vmatmul.mubr.bf16.gmra.mxu0 %v406
    %v1194 = vpop.f32.mrf.mxu0
    %v1195 = vadd.f32 %v1107, %v1194
    %v1196 = vpop.f32.mrf.mxu0
    %v1197 = vpop.f32.mrf.mxu0
    %v1198 = vadd.f32 %v1110, %v1197
    %v1199 = vpop.f32.mrf.mxu0
    %1200 = vmatprep.mubr.bf16.mxu0 %v415
    %1201 = vmatmul.mubr.bf16.gmra.mxu0 %v414
    %v1202 = vpop.f32.mrf.mxu0
    %v1203 = vadd.f32 %v1115, %v1202
    %v1204 = vpop.f32.mrf.mxu0
    %v1205 = vpop.f32.mrf.mxu0
    %v1206 = vadd.f32 %v1118, %v1205
    %v1207 = vpop.f32.mrf.mxu0
    %1208 = vmatprep.mubr.bf16.mxu0 %v423
    %1209 = vmatmul.mubr.bf16.gmra.mxu0 %v422
    %v1210 = vpop.f32.mrf.mxu0
    %v1211 = vadd.f32 %v1123, %v1210
    %v1212 = vpop.f32.mrf.mxu0
    %v1213 = vpop.f32.mrf.mxu0
    %v1214 = vadd.f32 %v1126, %v1213
    %v1215 = vpop.f32.mrf.mxu0
    %1216 = vmatprep.mubr.bf16.mxu0 %v431
    %1217 = vmatmul.mubr.bf16.gmra.mxu0 %v430
    %v1218 = vpop.f32.mrf.mxu0
    %v1219 = vadd.f32 %v1131, %v1218
    %v1220 = vpop.f32.mrf.mxu0
    %v1221 = vpop.f32.mrf.mxu0
    %v1222 = vadd.f32 %v1134, %v1221
    %v1223 = vpop.f32.mrf.mxu0
    %1224 = vmatprep.mubr.bf16.mxu0 %v439
    %1225 = vmatmul.mubr.bf16.gmra.mxu0 %v438
    %v1226 = vpop.f32.mrf.mxu0
    %v1227 = vadd.f32 %v1139, %v1226
    %v1228 = vpop.f32.mrf.mxu0
    %v1229 = vpop.f32.mrf.mxu0
    %v1230 = vpop.f32.mrf.mxu0
    %1231 = vdwg.mxu0
    %v1232 = vmax.f32 %v1179, 0.0
    %v1233 = vmax.f32 %v1182, 0.0
    %v1234 = vmax.f32 %v1187, 0.0
    %v1235 = vmax.f32 %v1190, 0.0
    %v1236 = vmax.f32 %v1195, 0.0
    %v1237 = vmax.f32 %v1198, 0.0
    %v1238 = vmax.f32 %v1203, 0.0
    %v1239 = vmax.f32 %v1206, 0.0
    %v1240 = vmax.f32 %v1211, 0.0
    %v1241 = vmax.f32 %v1214, 0.0
    %v1242 = vmax.f32 %v1219, 0.0
    %v1243 = vmax.f32 %v1222, 0.0
    %v1244 = vmax.f32 %v1227, 0.0
    %v1245 = vpack.c.bf16 %v1233, %v1232
    %v1246 = vpack.c.bf16 %v1235, %v1234
    %v1247 = vpack.c.bf16 %v1237, %v1236
    %v1248 = vpack.c.bf16 %v1239, %v1238
    %v1249 = vpack.c.bf16 %v1241, %v1240
    %v1250 = vpack.c.bf16 %v1243, %v1242
    %v1251 = vpack.c.bf16 %v1244, %v1244
    %v1259 = vunpack.c.l.b16 %v1245
    %v1260 = vunpack.c.h.b16 %v1245
    %v1261 = vunpack.c.l.b16 %v1246
    %v1262 = vunpack.c.h.b16 %v1246
    %v1263 = vunpack.c.l.b16 %v1247
    %v1264 = vunpack.c.h.b16 %v1247
    %v1265 = vunpack.c.l.b16 %v1248
    %v1266 = vunpack.c.h.b16 %v1248
    %v1267 = vunpack.c.l.b16 %v1249
    %v1268 = vunpack.c.h.b16 %v1249
    %v1269 = vunpack.c.l.b16 %v1250
    %v1270 = vunpack.c.h.b16 %v1250
    %v1271 = vunpack.c.l.b16 %v1251
    %v1272 = vpack.c.b16 %v1259, %v1259
    %v1273 = vpack.c.b16 %v1260, %v1260
    %v1274 = vpack.c.b16 %v1261, %v1261
    %v1275 = vpack.c.b16 %v1262, %v1262
    %v1276 = vpack.c.b16 %v1263, %v1263
    %v1277 = vpack.c.b16 %v1264, %v1264
    %v1278 = vpack.c.b16 %v1265, %v1265
    %v1279 = vpack.c.b16 %v1266, %v1266
    %v1280 = vpack.c.b16 %v1267, %v1267
    %v1281 = vpack.c.b16 %v1268, %v1268
    %v1282 = vpack.c.b16 %v1269, %v1269
    %v1283 = vpack.c.b16 %v1270, %v1270
    %v1284 = vpack.c.b16 %v1271, %v1271
    %1298 = vst [vmem:[%s3] sm:$0xf] %v1272
    %1299 = vst [vmem:[%s3 + $0x4] sm:$0xf] %v1273
    %1300 = vst [vmem:[%s3 + $0x8] sm:$0xf] %v1274
    %1301 = vst [vmem:[%s3 + $0xc] sm:$0xf] %v1275
    %1302 = vst [vmem:[%s3 + $0x10] sm:$0xf] %v1276
    %1303 = vst [vmem:[%s3 + $0x14] sm:$0xf] %v1277
    %1304 = vst [vmem:[%s3 + $0x18] sm:$0xf] %v1278
    %1305 = vst [vmem:[%s3 + $0x1c] sm:$0xf] %v1279
    %1306 = vst [vmem:[%s3 + $0x20] sm:$0xf] %v1280
    %1307 = vst [vmem:[%s3 + $0x24] sm:$0xf] %v1281
    %1308 = vst [vmem:[%s3 + $0x28] sm:$0xf] %v1282
    %1309 = vst [vmem:[%s3 + $0x2c] sm:$0xf] %v1283
    %1310 = vst [vmem:[%s3 + $0x30] sm:$0x1] %v1284
    // Predicated region
    $region22: #{encoder_forward.11} parent=1 // pred_check
      _
    $region23: #{encoder_forward.11} parent=1 // pred_check_branch
      %1312 = sbr.rel (0) target = $region25
    $region24: #{encoder_forward.11} parent=1 // pred_region
      _
    $region25: #{encoder_forward.11} parent=1 // pred_fallthru
      _
    // Predicated region
    $region26: #{encoder_forward.11} parent=1 // pred_check
      _
    $region27: #{encoder_forward.11} parent=1 // pred_check_branch
      %1314 = sbr.rel (0) target = $region29
    $region28: #{encoder_forward.11} parent=1 // pred_region
      _
    $region29: #{encoder_forward.11} parent=1 // pred_fallthru
      _
    %1315 = vsyncpa [#allocation3], 1
    %1316 = vsyncpa [#allocation5], 1

// kernel: encoder_forward.13
$region0: #{encoder_forward.13}
  #allocation0 [shape = 'u32[]', space=smem, size = 0x4, offset = 0x4, fixed_abs, tag = 'smem constant byte address 0x4 - core index']
  #allocation1 [shape = 'u32[144,128]{1,0:T(1,128)}', space=vmem, size = 0x12000, scoped, tag = 'internal scratch']
  %s0 = inlined_call_operand.vmem [shape: f32[2,64], index: 0, kind: input, shape index: {}]
  %s1 = inlined_call_operand.vmem [shape: f32[2,2], index: 1, kind: input, shape index: {}]
  %s2 = inlined_call_operand.vmem [shape: f32[2,64], index: 2, kind: input, shape index: {}]
  %s3 = inlined_call_operand.vmem [shape: f32[2,64], index: 3, kind: output, shape index: {}]
  %s4 = sld [smem:[#allocation0]]
  $region22: #{encoder_forward.13} parent=0
    _
  %s6 = ssub.s32 1, %s4
  %s7 = scalar_select 0, %s6, %s4
  // Predicated region
  $region2: #{encoder_forward.13} parent=0 // pred_check
    _
  $region3: #{encoder_forward.13} parent=0 // pred_check_branch
    %9 = sbr.rel (0) target = $region5
  $region4: #{encoder_forward.13} parent=0 // pred_region
    _
  $region5: #{encoder_forward.13} parent=0 // pred_fallthru
    _
  // Predicated region
  $region6: #{encoder_forward.13} parent=0 // pred_check
    _
  $region7: #{encoder_forward.13} parent=0 // pred_check_branch
    %11 = sbr.rel (0) target = $region9
  $region8: #{encoder_forward.13} parent=0 // pred_region
    _
  $region9: #{encoder_forward.13} parent=0 // pred_fallthru
    _
  // Predicated region
  $region10: #{encoder_forward.13} parent=0 // pred_check
    _
  $region11: #{encoder_forward.13} parent=0 // pred_check_branch
    %13 = sbr.rel (0) target = $region13
  $region12: #{encoder_forward.13} parent=0 // pred_region
    _
  $region13: #{encoder_forward.13} parent=0 // pred_fallthru
    _
  %v14 = vld [vmem:[%s0] sm:$0x3]
  %v15 = vld [vmem:[%s2] sm:$0x3]
  %v16 = vlaneseq
  %v17 = vand.u32 %v16, 127
  %vm18 = vcmp.ge.s32.totalorder %v17, 7
  %vm19 = vcmp.eq.s32.totalorder %v17, 0
  %vm20 = vcmp.eq.s32.totalorder %v17, 7
  %vm21 = vmor %vm19, %vm20
  %v22 = vld [vmem:[%s1] sm:$0x3]
  %24 = vset.pattern.permute.xlu0 1
  %25 = vperm.xlu0 %24, %v22
  %v26 = vpop.permute.xlu0 %25
  %28 = vset.pattern.permute.xlu0 0
  %29 = vperm.xlu0 %28, %v22
  %v30 = vpop.permute.xlu0 %29
  %v32 = vsel %vm18, %v26, %v30
  %v33 = vsel %vm21, 0.0, %v15
  %v34 = vmul.f32 %v33, %v33
  %v35 = vsel %vm18, 0.0, %v34
  %vm36 = vcmask 517120
  %v37 = vsel %vm36, %v35, 0.0
  %38 = vadd.xlane.f32.xlu0 %v37
  %v39 = vpop.xlane.xlu0 %38
  %v40 = vsel %vm18, %v34, 0.0
  %v41 = vsel %vm36, %v40, 0.0
  %42 = vadd.xlane.f32.xlu0 %v41
  %v43 = vpop.xlane.xlu0 %42
  %v44 = vsel %vm18, %v43, %v39
  %v45 = vmax.f32 %v44, 1e-12
  %v46 = vrsqrt.pop %v45
  %v47 = vmul.f32 %v33, %v46
  %v48 = vmul.f32 %v32, %v32
  %v49 = vsub.f32 1.0, %v48
  %v50 = vmax.f32 %v49, 0.0
  %v51 = vrsqrt.pop %v50
  %v52 = vmul.f32 %v50, %v51
  %vm53 = vcmp.eq.f32.partialorder %v50, inf
  %v54 = vsel %vm53, %v50, %v52
  %vm55 = vcmp.eq.f32.partialorder %v50, 0.0
  %v56 = vand.u32 %v50, 2147483648
  %v57 = vsel %vm55, %v56, %v54
  %v58 = vmul.f32 %v47, %v57
  %v59 = vsel %vm21, %v32, %v58
  %v60 = vsel %vm21, 1.0, 0.0
  %v61 = vsub.f32 %v60, %v14
  %v62 = vmul.f32 %v61, %v61
  %v63 = vsel %vm18, 0.0, %v62
  %v64 = vsel %vm36, %v63, 0.0
  %65 = vadd.xlane.f32.xlu0 %v64
  %v66 = vpop.xlane.xlu0 %65
  %v67 = vsel %vm18, %v62, 0.0
  %v68 = vsel %vm36, %v67, 0.0
  %69 = vadd.xlane.f32.xlu0 %v68
  %v70 = vpop.xlane.xlu0 %69
  %v71 = vsel %vm18, %v70, %v66
  %vm72 = vcmp.gt.f32.partialorder %v71, 1e-12
  %v73 = vmax.f32 %v71, 1e-12
  %v74 = vrsqrt.pop %v73
  %v75 = vsel %vm72, %v74, 0.0
  %v76 = vmul.f32 %v61, %v75
  %v77 = vmul.f32 %v59, %v76
  %v78 = vsel %vm18, 0.0, %v77
  %v79 = vsel %vm36, %v78, 0.0
  %80 = vadd.xlane.f32.xlu0 %v79
  %v81 = vpop.xlane.xlu0 %80
  %v82 = vsel %vm18, %v77, 0.0
  %v83 = vsel %vm36, %v82, 0.0
  %84 = vadd.xlane.f32.xlu0 %v83
  %v85 = vpop.xlane.xlu0 %84
  %v86 = vsel %vm18, %v85, %v81
  %v87 = vmul.f32 %v86, 2.0
  %v88 = vmul.f32 %v87, %v76
  %v89 = vsub.f32 %v59, %v88
  %90 = vst.msk [vmem:[%s3] sm:$0x3] %vm36, %v89
  // Predicated region
  $region14: #{encoder_forward.13} parent=0 // pred_check
    _
  $region15: #{encoder_forward.13} parent=0 // pred_check_branch
    %92 = sbr.rel (0) target = $region17
  $region16: #{encoder_forward.13} parent=0 // pred_region
    _
  $region17: #{encoder_forward.13} parent=0 // pred_fallthru
    _
  // Predicated region
  $region18: #{encoder_forward.13} parent=0 // pred_check
    _
  $region19: #{encoder_forward.13} parent=0 // pred_check_branch
    %94 = sbr.rel (0) target = $region21
  $region20: #{encoder_forward.13} parent=0 // pred_region
    _
  $region21: #{encoder_forward.13} parent=0 // pred_fallthru
    _

// kernel: encoder_forward.12
$region0: #{encoder_forward.12}
  #allocation0 [shape = 'u32[]', space=smem, size = 0x4, offset = 0x4, fixed_abs, tag = 'smem constant byte address 0x4 - core index']
  #allocation1 [shape = 'u32[144,128]{1,0:T(1,128)}', space=vmem, size = 0x12000, scoped, tag = 'internal scratch']
  #allocation2 [shape = 'f32[2,1024]{1,0:T(2,128)}', space=vmem, size = 0x2000, scoped, tag = 'scratch operand']
  %s0 = inlined_call_operand.vmem [shape: bf16[2,6272], index: 0, kind: input, shape index: {}]
  %s1 = inlined_call_operand.hbm [shape: bf16[6272,1024], index: 1, kind: input, shape index: {}]
  %s2 = inlined_call_operand.hbm [shape: f32[1,1024], index: 2, kind: input, shape index: {}]
  %s3 = inlined_call_operand.hbm [shape: bf16[1024,128], index: 3, kind: input, shape index: {}]
  %s4 = inlined_call_operand.hbm [shape: f32[1,128], index: 4, kind: input, shape index: {}]
  %s5 = inlined_call_operand.vmem [shape: f32[2,128], index: 5, kind: output, shape index: {}]
  %s6 = sld [smem:[#allocation0]]
  $region77: #{encoder_forward.12} parent=0
    _
  %s8 = ssub.s32 1, %s6
  %s9 = scalar_select 0, %s8, %s6
  $region1: #{encoder_forward.12} parent=0
    #allocation3 [shape = 'u8[3670016]{0}', space=vmem, size = 0x380000, scoped, tag = 'input window, operand 1']
    #allocation4 [shape = 's32[2]{0}', space=sflag, size = 0x8, scoped, tag = 'scoped memory for encoder_forward.12']
    #allocation5 [shape = 'u8[4096]{0}', space=vmem, size = 0x1000, scoped, tag = 'input window, operand 2, single buffered']
    #allocation6 [shape = 's32[1]{0}', space=sflag, size = 0x4, scoped, tag = 'scoped memory for encoder_forward.12']
    #allocation7 [shape = 'u8[262144]{0}', space=vmem, size = 0x40000, scoped, tag = 'input window, operand 3, single buffered']
    #allocation8 [shape = 'u8[512]{0}', space=vmem, size = 0x400, scoped, tag = 'input window, operand 4, single buffered']
    #allocation9 [shape = 's32[1]{0}', space=sflag, size = 0x4, scoped, tag = 'scoped memory for encoder_forward.12']
    %10 = vsyncpa [#allocation4], 0
    %s11 = scalar_lea.sflag [#allocation4], 1
    %12 = vsyncpa %s11, 0
    %13 = vsyncpa [#allocation6], 0
    %14 = vsyncpa [#allocation9], 0
    loop: start=0, step=1, limit=9
    $region2: #{encoder_forward.12} parent=1 // loop_pre_header
      _
    $region3: #{encoder_forward.12} parent=1 // loop_header
      %s16 = sphi 0, %s20
      %p17 = scmp.ge.s32.totalorder %s16, 9
      %s23 = sphi 0, %s35
      %s24 = sphi 0, %s31
      %s25 = sphi 0, %s23
      %s26 = sphi 0, %s24
      %s27 = sphi 0, %s25
      %s28 = sphi 0, %s26
      %s40 = sphi 0, %s42
      %s43 = sphi 0, %s40
      %s44 = sphi 0, %s43
      %s60 = sphi 0, %s44
      %s66 = sphi 0, %s68
      %s69 = sphi 0, %s66
      %s70 = sphi 0, %s69
      %s86 = sphi 0, %s70
      %s90 = sphi 0, %s90
      %s92 = sphi 0, %s90
      %s93 = sphi 0, %s92
      %s107 = sphi 0, %s93
      %s111 = sphi 0, %s111
      %s113 = sphi 0, %s111
      %s114 = sphi 0, %s113
      %s128 = sphi 0, %s114
      %s132 = sphi 0, %s132
      %s134 = sphi 0, %s132
      %s135 = sphi 0, %s134
      %s149 = sphi 0, %s135
      %s155 = sphi 0, %s157
      %s158 = sphi 0, %s155
      %s159 = sphi 0, %s158
      %s175 = sphi 0, %s159
    $region4: #{encoder_forward.12} parent=1 // loop_header_branch
      %19 = sbr.rel (%p17) target = $region8
    $region5: #{encoder_forward.12} parent=1 // loop_body
      %s21 = ssub.s32 %s16, 1
      %s22 = ssub.s32 %s16, 2
      %s29 = sadd.s32 1, %s24
      %p30 = scmp.ge.s32.totalorder %s29, 7
      %s31 = scalar_select %p30, 0, %s29
      %s32 = sadd.s32 1, %s23
      %s33 = scalar_select %p30, %s32, %s23
      %p34 = scmp.ge.s32.totalorder %s33, 1
      %s35 = scalar_select %p34, 0, %s33
      %s36 = ssub.s32 %s23, %s35
      %s37 = ssub.s32 %s24, %s31
      %s38 = sor.u32 %s36, %s37
      %p39 = scmp.eq.s32.totalorder %s38, 0
      %s41 = sadd.s32 %s40, 1
      %s42 = scalar_select %p39, %s40, %s41
      %p45 = pneg %p39
      %p46 = scmp.eq.s32.totalorder %s16, 6
      %p47 = por %p45, %p46
      %p48 = scmp.ne.s32.totalorder %s40, %s43
      %p49 = scmp.eq.s32.totalorder %s16, 0
      %p50 = por %p48, %p49
      %p51 = scmp.ne.s32.totalorder %s40, %s43
      %p52 = scmp.eq.s32.totalorder %s21, 6
      %p53 = por %p51, %p52
      %p54 = scmp.ne.s32.totalorder %s43, %s44
      %p55 = scmp.eq.s32.totalorder %s21, 0
      %p56 = por %p54, %p55
      %p57 = scmp.ne.s32.totalorder %s43, %s44
      %p58 = scmp.eq.s32.totalorder %s22, 6
      %p59 = por %p57, %p58
      %p61 = scmp.ne.s32.totalorder %s44, %s60
      %p62 = scmp.eq.s32.totalorder %s22, 0
      %p63 = por %p61, %p62
      %s64 = ssub.s32 %s24, %s31
      %p65 = scmp.eq.s32.totalorder %s64, 0
      %s67 = sadd.s32 %s66, 1
      %s68 = scalar_select %p65, %s66, %s67
      %p71 = pneg %p65
      %p72 = scmp.eq.s32.totalorder %s16, 6
      %p73 = por %p71, %p72
      %p74 = scmp.ne.s32.totalorder %s66, %s69
      %p75 = scmp.eq.s32.totalorder %s16, 0
      %p76 = por %p74, %p75
      %p77 = scmp.ne.s32.totalorder %s66, %s69
      %p78 = scmp.eq.s32.totalorder %s21, 6
      %p79 = por %p77, %p78
      %p80 = scmp.ne.s32.totalorder %s69, %s70
      %p81 = scmp.eq.s32.totalorder %s21, 0
      %p82 = por %p80, %p81
      %p83 = scmp.ne.s32.totalorder %s69, %s70
      %p84 = scmp.eq.s32.totalorder %s22, 6
      %p85 = por %p83, %p84
      %p87 = scmp.ne.s32.totalorder %s70, %s86
      %p88 = scmp.eq.s32.totalorder %s22, 0
      %p89 = por %p87, %p88
      %s91 = sadd.s32 %s90, 1
      %p94 = scmp.eq.s32.totalorder %s16, 6
      %p95 = scmp.ne.s32.totalorder %s90, %s92
      %p96 = scmp.eq.s32.totalorder %s16, 0
      %p97 = por %p95, %p96
      %p98 = scmp.ne.s32.totalorder %s90, %s92
      %p99 = scmp.eq.s32.totalorder %s21, 6
      %p100 = por %p98, %p99
      %p101 = scmp.ne.s32.totalorder %s92, %s93
      %p102 = scmp.eq.s32.totalorder %s21, 0
      %p103 = por %p101, %p102
      %p104 = scmp.ne.s32.totalorder %s92, %s93
      %p105 = scmp.eq.s32.totalorder %s22, 6
      %p106 = por %p104, %p105
      %p108 = scmp.ne.s32.totalorder %s93, %s107
      %p109 = scmp.eq.s32.totalorder %s22, 0
      %p110 = por %p108, %p109
      %s112 = sadd.s32 %s111, 1
      %p115 = scmp.eq.s32.totalorder %s16, 6
      %p116 = scmp.ne.s32.totalorder %s111, %s113
      %p117 = scmp.eq.s32.totalorder %s16, 0
      %p118 = por %p116, %p117
      %p119 = scmp.ne.s32.totalorder %s111, %s113
      %p120 = scmp.eq.s32.totalorder %s21, 6
      %p121 = por %p119, %p120
      %p122 = scmp.ne.s32.totalorder %s113, %s114
      %p123 = scmp.eq.s32.totalorder %s21, 0
      %p124 = por %p122, %p123
      %p125 = scmp.ne.s32.totalorder %s113, %s114
      %p126 = scmp.eq.s32.totalorder %s22, 6
      %p127 = por %p125, %p126
      %p129 = scmp.ne.s32.totalorder %s114, %s128
      %p130 = scmp.eq.s32.totalorder %s22, 0
      %p131 = por %p129, %p130
      %s133 = sadd.s32 %s132, 1
      %p136 = scmp.eq.s32.totalorder %s16, 6
      %p137 = scmp.ne.s32.totalorder %s132, %s134
      %p138 = scmp.eq.s32.totalorder %s16, 0
      %p139 = por %p137, %p138
      %p140 = scmp.ne.s32.totalorder %s132, %s134
      %p141 = scmp.eq.s32.totalorder %s21, 6
      %p142 = por %p140, %p141
      %p143 = scmp.ne.s32.totalorder %s134, %s135
      %p144 = scmp.eq.s32.totalorder %s21, 0
      %p145 = por %p143, %p144
      %p146 = scmp.ne.s32.totalorder %s134, %s135
      %p147 = scmp.eq.s32.totalorder %s22, 6
      %p148 = por %p146, %p147
      %p150 = scmp.ne.s32.totalorder %s135, %s149
      %p151 = scmp.eq.s32.totalorder %s22, 0
      %p152 = por %p150, %p151
      %s153 = ssub.s32 %s23, %s35
      %p154 = scmp.eq.s32.totalorder %s153, 0
      %s156 = sadd.s32 %s155, 1
      %s157 = scalar_select %p154, %s155, %s156
      %p160 = pneg %p154
      %p161 = scmp.eq.s32.totalorder %s16, 6
      %p162 = por %p160, %p161
      %p163 = scmp.ne.s32.totalorder %s155, %s158
      %p164 = scmp.eq.s32.totalorder %s16, 0
      %p165 = por %p163, %p164
      %p166 = scmp.ne.s32.totalorder %s155, %s158
      %p167 = scmp.eq.s32.totalorder %s21, 6
      %p168 = por %p166, %p167
      %p169 = scmp.ne.s32.totalorder %s158, %s159
      %p170 = scmp.eq.s32.totalorder %s21, 0
      %p171 = por %p169, %p170
      %p172 = scmp.ne.s32.totalorder %s158, %s159
      %p173 = scmp.eq.s32.totalorder %s22, 6
      %p174 = por %p172, %p173
      %p176 = scmp.ne.s32.totalorder %s159, %s175
      %p177 = scmp.eq.s32.totalorder %s22, 0
      %p178 = por %p176, %p177
      %p179 = scmp.le.s32.totalorder 1, %s16
      %p180 = scmp.lt.s32.totalorder %s16, 8
      %p181 = pnand %p179, %p180
      %p182 = pneg %p181
      // Predicated region
      $region9: #{encoder_forward.12} parent=5 // pred_check
        _
      $region10: #{encoder_forward.12} parent=5 // pred_check_branch
        %184 = sbr.rel (%p181) target = $region12
      $region11: #{encoder_forward.12} parent=5 // pred_region
        %s185 = ssub.s32 %s16, 1
        // Predicated region
        $region13: #{encoder_forward.12} parent=11 // pred_check
          %p186 = pneg %p103
        $region14: #{encoder_forward.12} parent=11 // pred_check_branch
          %188 = sbr.rel (%p186) target = $region16
        $region15: #{encoder_forward.12} parent=11 // pred_region
          %s190 = ssub.s32 128, 128
          %191 = vsyncadd [#allocation6], %s190
          %s193 = sshll.u32 [#allocation5], 4
          %s194 = int_to_ptr.vmem [resolvable:$true] %s193
          %196 = dma.hbm_to_vmem [thread:$0]  %s2, 128, %s194, [#allocation6]
        $region16: #{encoder_forward.12} parent=11 // pred_fallthru
          _
        // Predicated region
        $region17: #{encoder_forward.12} parent=11 // pred_check
          %p197 = pneg %p124
        $region18: #{encoder_forward.12} parent=11 // pred_check_branch
          %199 = sbr.rel (%p197) target = $region20
        $region19: #{encoder_forward.12} parent=11 // pred_region
          %s201 = ssub.s32 8192, 8192
          %202 = vsyncadd [#allocation6], %s201
          %s203 = sshll.u32 [#allocation7], 4
          %s204 = int_to_ptr.vmem [resolvable:$true] %s203
          %209 = dma.hbm_to_vmem [thread:$0]  %s3, 8192, %s204, [#allocation6], 64, 64, 4
        $region20: #{encoder_forward.12} parent=11 // pred_fallthru
          _
        // Predicated region
        $region21: #{encoder_forward.12} parent=11 // pred_check
          %p210 = pneg %p145
        $region22: #{encoder_forward.12} parent=11 // pred_check_branch
          %212 = sbr.rel (%p210) target = $region24
        $region23: #{encoder_forward.12} parent=11 // pred_region
          %s214 = ssub.s32 16, 16
          %215 = vsyncadd [#allocation9], %s214
          %s217 = sshll.u32 [#allocation8], 4
          %s218 = int_to_ptr.vmem [resolvable:$true] %s217
          %220 = dma.hbm_to_vmem [thread:$0]  %s4, 16, %s218, [#allocation9]
        $region24: #{encoder_forward.12} parent=11 // pred_fallthru
          _
      $region12: #{encoder_forward.12} parent=5 // pred_fallthru
        _
      %p221 = scmp.lt.s32.totalorder %s16, 7
      // Predicated region
      $region25: #{encoder_forward.12} parent=5 // pred_check
        %p222 = pneg %p221
      $region26: #{encoder_forward.12} parent=5 // pred_check_branch
        %224 = sbr.rel (%p222) target = $region28
      $region27: #{encoder_forward.12} parent=5 // pred_region
        // Predicated region
        $region29: #{encoder_forward.12} parent=27 // pred_check
          %p225 = pneg %p50
        $region30: #{encoder_forward.12} parent=27 // pred_check_branch
          %227 = sbr.rel (%p225) target = $region32
        $region31: #{encoder_forward.12} parent=27 // pred_region
          %s228 = smul.u32 7, %s24
          %p229 = scmp.lt.s32.totalorder %s23, 0
          %s230 = scalar_select %p229, %s23, 0
          %p231 = scmp.lt.s32.totalorder %s228, 48
          %s232 = scalar_select %p231, %s228, 48
          %s233 = smul.addr %s230, 49
          %s234 = sadd.s32 %s232, %s233
          %s235 = scalar_lea.vmem %s0, %s234
          %s236 = smul.u32 7, %s24
        $region32: #{encoder_forward.12} parent=27 // pred_fallthru
          _
        // Predicated region
        $region33: #{encoder_forward.12} parent=27 // pred_check
          %p237 = pneg %p76
        $region34: #{encoder_forward.12} parent=27 // pred_check_branch
          %239 = sbr.rel (%p237) target = $region36
        $region35: #{encoder_forward.12} parent=27 // pred_region
          %s240 = sand.u32 %s66, 1
          %s241 = scalar_lea.sflag [#allocation4], %s240
          %s242 = sand.u32 %s66, 1
          %s243 = smul.addr %s242, 3584
          %s244 = scalar_lea.vmem [#allocation3], %s243
          %s245 = smul.u32 112, %s24
          %s247 = ssub.s32 57344, 57344
          %248 = vsyncadd %s241, %s247
          %s249 = smul.addr %s245, 8
          %s250 = smul.addr %s249, 64
          %s251 = scalar_lea.hbm %s1, %s250
          %s252 = sshll.u32 %s244, 4
          %s253 = int_to_ptr.vmem [resolvable:$true] %s252
          %258 = dma.hbm_to_vmem [thread:$0]  %s251, 57344, %s253, %s241, 512, 512, 32
        $region36: #{encoder_forward.12} parent=27 // pred_fallthru
          _
      $region28: #{encoder_forward.12} parent=5 // pred_fallthru
        _
      %p259 = scmp.le.s32.totalorder 1, %s16
      %p260 = scmp.lt.s32.totalorder %s16, 8
      %p261 = pnand %p259, %p260
      %p262 = pneg %p261
      // Predicated region
      $region37: #{encoder_forward.12} parent=5 // pred_check
        _
      $region38: #{encoder_forward.12} parent=5 // pred_check_branch
        %264 = sbr.rel (%p261) target = $region40
      $region39: #{encoder_forward.12} parent=5 // pred_region
        %s265 = ssub.s32 %s16, 1
        %s266 = sand.u32 %s69, 1
        %s267 = scalar_lea.sflag [#allocation4], %s266
        %s268 = sand.u32 %s69, 1
        %s269 = smul.addr %s268, 3584
        %s270 = scalar_lea.vmem [#allocation3], %s269
        // Predicated region
        $region41: #{encoder_forward.12} parent=39 // pred_check
          %p271 = pneg %p82
        $region42: #{encoder_forward.12} parent=39 // pred_check_branch
          %273 = sbr.rel (%p271) target = $region44
        $region43: #{encoder_forward.12} parent=39 // pred_region
          %274 = dma.done %s267, 57344
        $region44: #{encoder_forward.12} parent=39 // pred_fallthru
          _
        // Predicated region
        $region45: #{encoder_forward.12} parent=39 // pred_check
          %p275 = pneg %p103
        $region46: #{encoder_forward.12} parent=39 // pred_check_branch
          %277 = sbr.rel (%p275) target = $region48
        $region47: #{encoder_forward.12} parent=39 // pred_region
          %278 = dma.done [#allocation6], 128
        $region48: #{encoder_forward.12} parent=39 // pred_fallthru
          _
        // Predicated region
        $region49: #{encoder_forward.12} parent=39 // pred_check
          %p279 = pneg %p124
        $region50: #{encoder_forward.12} parent=39 // pred_check_branch
          %281 = sbr.rel (%p279) target = $region52
        $region51: #{encoder_forward.12} parent=39 // pred_region
          %282 = dma.done [#allocation6], 8192
        $region52: #{encoder_forward.12} parent=39 // pred_fallthru
          _
        // Predicated region
        $region53: #{encoder_forward.12} parent=39 // pred_check
          %p283 = pneg %p145
        $region54: #{encoder_forward.12} parent=39 // pred_check_branch
          %285 = sbr.rel (%p283) target = $region56
        $region55: #{encoder_forward.12} parent=39 // pred_region
          %286 = dma.done [#allocation9], 16
        $region56: #{encoder_forward.12} parent=39 // pred_fallthru
          _
        %s287 = smul.u32 7, %s26
        %p288 = scmp.lt.s32.totalorder %s25, 0
        %s289 = scalar_select %p288, %s25, 0
        %p290 = scmp.lt.s32.totalorder %s287, 48
        %s291 = scalar_select %p290, %s287, 48
        %s292 = smul.addr %s289, 49
        %s293 = sadd.s32 %s291, %s292
        %s294 = scalar_lea.vmem %s0, %s293
        %p295 = pneg %p56
        %p296 = pneg %p53
        %s297 = sand.u32 %s69, 1
        %s298 = scalar_lea.sflag [#allocation4], %s297
        %s299 = sand.u32 %s69, 1
        %s300 = smul.addr %s299, 3584
        %s301 = scalar_lea.vmem [#allocation3], %s300
        %p302 = pneg %p82
        %p303 = pneg %p79
        %p304 = pneg %p103
        %p305 = pneg %p100
        %p306 = pneg %p124
        %p307 = pneg %p121
        %p308 = pneg %p145
        %p309 = pneg %p142
        %p310 = pneg %p171
        %p311 = pneg %p168
        %p312 = scmp.lt.s32.totalorder %s25, 0
        %s313 = scalar_select %p312, %s25, 0
        %s314 = smul.addr %s313, 2
        %s315 = scalar_lea.vmem %s5, %s314
        %s316 = smul.u32 7, %s26
        %p317 = scmp.lt.s32.totalorder %s25, 0
        %s318 = scalar_select %p317, %s25, 0
        %p319 = scmp.lt.s32.totalorder %s316, 48
        %s320 = scalar_select %p319, %s316, 48
        %s321 = smul.addr %s318, 49
        %s322 = sadd.s32 %s320, %s321
        %s323 = scalar_lea.vmem %s0, %s322
        %s324 = smul.u32 7, %s26
        %s325 = smul.u32 112, %s26
        %p326 = scmp.lt.s32.totalorder %s25, 0
        %s327 = scalar_select %p326, %s25, 0
        %s328 = smul.addr %s327, 2
        %s329 = scalar_lea.vmem %s5, %s328
        %p331 = scmp.eq.s32.totalorder %s26, 0
        // Predicated region
        $region57: #{encoder_forward.12} parent=39 // pred_check
          %p332 = pneg %p331
        $region58: #{encoder_forward.12} parent=39 // pred_check_branch
          %334 = sbr.rel (%p332) target = $region60
        $region59: #{encoder_forward.12} parent=39 // pred_region
          %335 = vst [vmem:[#allocation2] sm:$0xff] 0.0
          %336 = vst [vmem:[#allocation2 + $0x8] sm:$0xff] 0.0
        $region60: #{encoder_forward.12} parent=39 // pred_fallthru
          _
        %v337 = vld [vmem:[#allocation2] sm:$0xff]
        %v338 = vld [vmem:[#allocation2 + $0x8] sm:$0xff]
        %v339 = vld [vmem:[%s323] sm:$0x7f]
        %v340 = vld [vmem:[%s270] sm:$0xff]
        %v341 = vld [vmem:[%s270 + $0x8] sm:$0xff]
        %v342 = vld [vmem:[%s270 + $0x10] sm:$0xff]
        %v343 = vld [vmem:[%s270 + $0x18] sm:$0xff]
        %v344 = vld [vmem:[%s270 + $0x20] sm:$0xff]
        %v345 = vld [vmem:[%s270 + $0x28] sm:$0xff]
        %v346 = vld [vmem:[%s270 + $0x30] sm:$0xff]
        %v347 = vld [vmem:[%s270 + $0x38] sm:$0xff]
        %v348 = vld [vmem:[%s270 + $0x40] sm:$0xff]
        %v349 = vld [vmem:[%s270 + $0x48] sm:$0xff]
        %v350 = vld [vmem:[%s270 + $0x50] sm:$0xff]
        %v351 = vld [vmem:[%s270 + $0x58] sm:$0xff]
        %v352 = vld [vmem:[%s270 + $0x60] sm:$0xff]
        %v353 = vld [vmem:[%s270 + $0x68] sm:$0xff]
        %v354 = vld [vmem:[%s270 + $0x70] sm:$0xff]
        %v355 = vld [vmem:[%s270 + $0x78] sm:$0xff]
        %v356 = vld [vmem:[%s270 + $0x80] sm:$0xff]
        %v357 = vld [vmem:[%s270 + $0x88] sm:$0xff]
        %v358 = vld [vmem:[%s270 + $0x90] sm:$0xff]
        %v359 = vld [vmem:[%s270 + $0x98] sm:$0xff]
        %v360 = vld [vmem:[%s270 + $0xa0] sm:$0xff]
        %v361 = vld [vmem:[%s270 + $0xa8] sm:$0xff]
        %v362 = vld [vmem:[%s270 + $0xb0] sm:$0xff]
        %v363 = vld [vmem:[%s270 + $0xb8] sm:$0xff]
        %v364 = vld [vmem:[%s270 + $0xc0] sm:$0xff]
        %v365 = vld [vmem:[%s270 + $0xc8] sm:$0xff]
        %v366 = vld [vmem:[%s270 + $0xd0] sm:$0xff]
        %v367 = vld [vmem:[%s270 + $0xd8] sm:$0xff]
        %v368 = vld [vmem:[%s270 + $0xe0] sm:$0xff]
        %v369 = vld [vmem:[%s270 + $0xe8] sm:$0xff]
        %v370 = vld [vmem:[%s270 + $0xf0] sm:$0xff]
        %v371 = vld [vmem:[%s270 + $0xf8] sm:$0xff]
        %v372 = vld [vmem:[%s270 + $0x100] sm:$0xff]
        %v373 = vld [vmem:[%s270 + $0x108] sm:$0xff]
        %v374 = vld [vmem:[%s270 + $0x110] sm:$0xff]
        %v375 = vld [vmem:[%s270 + $0x118] sm:$0xff]
        %v376 = vld [vmem:[%s270 + $0x120] sm:$0xff]
        %v377 = vld [vmem:[%s270 + $0x128] sm:$0xff]
        %v378 = vld [vmem:[%s270 + $0x130] sm:$0xff]
        %v379 = vld [vmem:[%s270 + $0x138] sm:$0xff]
        %v380 = vld [vmem:[%s270 + $0x140] sm:$0xff]
        %v381 = vld [vmem:[%s270 + $0x148] sm:$0xff]
        %v382 = vld [vmem:[%s270 + $0x150] sm:$0xff]
        %v383 = vld [vmem:[%s270 + $0x158] sm:$0xff]
        %v384 = vld [vmem:[%s270 + $0x160] sm:$0xff]
        %v385 = vld [vmem:[%s270 + $0x168] sm:$0xff]
        %v386 = vld [vmem:[%s270 + $0x170] sm:$0xff]
        %v387 = vld [vmem:[%s270 + $0x178] sm:$0xff]
        %v388 = vld [vmem:[%s270 + $0x180] sm:$0xff]
        %v389 = vld [vmem:[%s270 + $0x188] sm:$0xff]
        %v390 = vld [vmem:[%s270 + $0x190] sm:$0xff]
        %v391 = vld [vmem:[%s270 + $0x198] sm:$0xff]
        %v392 = vld [vmem:[%s270 + $0x1a0] sm:$0xff]
        %v393 = vld [vmem:[%s270 + $0x1a8] sm:$0xff]
        %v394 = vld [vmem:[%s270 + $0x1b0] sm:$0xff]
        %v395 = vld [vmem:[%s270 + $0x1b8] sm:$0xff]
        %v396 = vld [vmem:[%s270 + $0x1c0] sm:$0xff]
        %v397 = vld [vmem:[%s270 + $0x1c8] sm:$0xff]
        %v398 = vld [vmem:[%s270 + $0x1d0] sm:$0xff]
        %v399 = vld [vmem:[%s270 + $0x1d8] sm:$0xff]
        %v400 = vld [vmem:[%s270 + $0x1e0] sm:$0xff]
        %v401 = vld [vmem:[%s270 + $0x1e8] sm:$0xff]
        %v402 = vld [vmem:[%s270 + $0x1f0] sm:$0xff]
        %v403 = vld [vmem:[%s270 + $0x1f8] sm:$0xff]
        %v404 = vld [vmem:[%s270 + $0x200] sm:$0xff]
        %v405 = vld [vmem:[%s270 + $0x208] sm:$0xff]
        %v406 = vld [vmem:[%s270 + $0x210] sm:$0xff]
        %v407 = vld [vmem:[%s270 + $0x218] sm:$0xff]
        %v408 = vld [vmem:[%s270 + $0x220] sm:$0xff]
        %v409 = vld [vmem:[%s270 + $0x228] sm:$0xff]
        %v410 = vld [vmem:[%s270 + $0x230] sm:$0xff]
        %v411 = vld [vmem:[%s270 + $0x238] sm:$0xff]
        %v412 = vld [vmem:[%s270 + $0x240] sm:$0xff]
        %v413 = vld [vmem:[%s270 + $0x248] sm:$0xff]
        %v414 = vld [vmem:[%s270 + $0x250] sm:$0xff]
        %v415 = vld [vmem:[%s270 + $0x258] sm:$0xff]
        %v416 = vld [vmem:[%s270 + $0x260] sm:$0xff]
        %v417 = vld [vmem:[%s270 + $0x268] sm:$0xff]
        %v418 = vld [vmem:[%s270 + $0x270] sm:$0xff]
        %v419 = vld [vmem:[%s270 + $0x278] sm:$0xff]
        %v420 = vld [vmem:[%s270 + $0x280] sm:$0xff]
        %v421 = vld [vmem:[%s270 + $0x288] sm:$0xff]
        %v422 = vld [vmem:[%s270 + $0x290] sm:$0xff]
        %v423 = vld [vmem:[%s270 + $0x298] sm:$0xff]
        %v424 = vld [vmem:[%s270 + $0x2a0] sm:$0xff]
        %v425 = vld [vmem:[%s270 + $0x2a8] sm:$0xff]
        %v426 = vld [vmem:[%s270 + $0x2b0] sm:$0xff]
        %v427 = vld [vmem:[%s270 + $0x2b8] sm:$0xff]
        %v428 = vld [vmem:[%s270 + $0x2c0] sm:$0xff]
        %v429 = vld [vmem:[%s270 + $0x2c8] sm:$0xff]
        %v430 = vld [vmem:[%s270 + $0x2d0] sm:$0xff]
        %v431 = vld [vmem:[%s270 + $0x2d8] sm:$0xff]
        %v432 = vld [vmem:[%s270 + $0x2e0] sm:$0xff]
        %v433 = vld [vmem:[%s270 + $0x2e8] sm:$0xff]
        %v434 = vld [vmem:[%s270 + $0x2f0] sm:$0xff]
        %v435 = vld [vmem:[%s270 + $0x2f8] sm:$0xff]
        %v436 = vld [vmem:[%s270 + $0x300] sm:$0xff]
        %v437 = vld [vmem:[%s270 + $0x308] sm:$0xff]
        %v438 = vld [vmem:[%s270 + $0x310] sm:$0xff]
        %v439 = vld [vmem:[%s270 + $0x318] sm:$0xff]
        %v440 = vld [vmem:[%s270 + $0x320] sm:$0xff]
        %v441 = vld [vmem:[%s270 + $0x328] sm:$0xff]
        %v442 = vld [vmem:[%s270 + $0x330] sm:$0xff]
        %v443 = vld [vmem:[%s270 + $0x338] sm:$0xff]
        %v444 = vld [vmem:[%s270 + $0x340] sm:$0xff]
        %v445 = vld [vmem:[%s270 + $0x348] sm:$0xff]
        %v446 = vld [vmem:[%s270 + $0x350] sm:$0xff]
        %v447 = vld [vmem:[%s270 + $0x358] sm:$0xff]
        %v448 = vld [vmem:[%s270 + $0x360] sm:$0xff]
        %v449 = vld [vmem:[%s270 + $0x368] sm:$0xff]
        %v450 = vld [vmem:[%s270 + $0x370] sm:$0xff]
        %v451 = vld [vmem:[%s270 + $0x378] sm:$0xff]
        %v452 = vld [vmem:[%s270 + $0x380] sm:$0xff]
        %v453 = vld [vmem:[%s270 + $0x388] sm:$0xff]
        %v454 = vld [vmem:[%s270 + $0x390] sm:$0xff]
        %v455 = vld [vmem:[%s270 + $0x398] sm:$0xff]
        %v456 = vld [vmem:[%s270 + $0x3a0] sm:$0xff]
        %v457 = vld [vmem:[%s270 + $0x3a8] sm:$0xff]
        %v458 = vld [vmem:[%s270 + $0x3b0] sm:$0xff]
        %v459 = vld [vmem:[%s270 + $0x3b8] sm:$0xff]
        %v460 = vld [vmem:[%s270 + $0x3c0] sm:$0xff]
        %v461 = vld [vmem:[%s270 + $0x3c8] sm:$0xff]
        %v462 = vld [vmem:[%s270 + $0x3d0] sm:$0xff]
        %v463 = vld [vmem:[%s270 + $0x3d8] sm:$0xff]
        %v464 = vld [vmem:[%s270 + $0x3e0] sm:$0xff]
        %v465 = vld [vmem:[%s270 + $0x3e8] sm:$0xff]
        %v466 = vld [vmem:[%s270 + $0x3f0] sm:$0xff]
        %v467 = vld [vmem:[%s270 + $0x3f8] sm:$0xff]
        %v468 = vld [vmem:[%s270 + $0x400] sm:$0xff]
        %v469 = vld [vmem:[%s270 + $0x408] sm:$0xff]
        %v470 = vld [vmem:[%s270 + $0x410] sm:$0xff]
        %v471 = vld [vmem:[%s270 + $0x418] sm:$0xff]
        %v472 = vld [vmem:[%s270 + $0x420] sm:$0xff]
        %v473 = vld [vmem:[%s270 + $0x428] sm:$0xff]
        %v474 = vld [vmem:[%s270 + $0x430] sm:$0xff]
        %v475 = vld [vmem:[%s270 + $0x438] sm:$0xff]
        %v476 = vld [vmem:[%s270 + $0x440] sm:$0xff]
        %v477 = vld [vmem:[%s270 + $0x448] sm:$0xff]
        %v478 = vld [vmem:[%s270 + $0x450] sm:$0xff]
        %v479 = vld [vmem:[%s270 + $0x458] sm:$0xff]
        %v480 = vld [vmem:[%s270 + $0x460] sm:$0xff]
        %v481 = vld [vmem:[%s270 + $0x468] sm:$0xff]
        %v482 = vld [vmem:[%s270 + $0x470] sm:$0xff]
        %v483 = vld [vmem:[%s270 + $0x478] sm:$0xff]
        %v484 = vld [vmem:[%s270 + $0x480] sm:$0xff]
        %v485 = vld [vmem:[%s270 + $0x488] sm:$0xff]
        %v486 = vld [vmem:[%s270 + $0x490] sm:$0xff]
        %v487 = vld [vmem:[%s270 + $0x498] sm:$0xff]
        %v488 = vld [vmem:[%s270 + $0x4a0] sm:$0xff]
        %v489 = vld [vmem:[%s270 + $0x4a8] sm:$0xff]
        %v490 = vld [vmem:[%s270 + $0x4b0] sm:$0xff]
        %v491 = vld [vmem:[%s270 + $0x4b8] sm:$0xff]
        %v492 = vld [vmem:[%s270 + $0x4c0] sm:$0xff]
        %v493 = vld [vmem:[%s270 + $0x4c8] sm:$0xff]
        %v494 = vld [vmem:[%s270 + $0x4d0] sm:$0xff]
        %v495 = vld [vmem:[%s270 + $0x4d8] sm:$0xff]
        %v496 = vld [vmem:[%s270 + $0x4e0] sm:$0xff]
        %v497 = vld [vmem:[%s270 + $0x4e8] sm:$0xff]
        %v498 = vld [vmem:[%s270 + $0x4f0] sm:$0xff]
        %v499 = vld [vmem:[%s270 + $0x4f8] sm:$0xff]
        %v500 = vld [vmem:[%s270 + $0x500] sm:$0xff]
        %v501 = vld [vmem:[%s270 + $0x508] sm:$0xff]
        %v502 = vld [vmem:[%s270 + $0x510] sm:$0xff]
        %v503 = vld [vmem:[%s270 + $0x518] sm:$0xff]
        %v504 = vld [vmem:[%s270 + $0x520] sm:$0xff]
        %v505 = vld [vmem:[%s270 + $0x528] sm:$0xff]
        %v506 = vld [vmem:[%s270 + $0x530] sm:$0xff]
        %v507 = vld [vmem:[%s270 + $0x538] sm:$0xff]
        %v508 = vld [vmem:[%s270 + $0x540] sm:$0xff]
        %v509 = vld [vmem:[%s270 + $0x548] sm:$0xff]
        %v510 = vld [vmem:[%s270 + $0x550] sm:$0xff]
        %v511 = vld [vmem:[%s270 + $0x558] sm:$0xff]
        %v512 = vld [vmem:[%s270 + $0x560] sm:$0xff]
        %v513 = vld [vmem:[%s270 + $0x568] sm:$0xff]
        %v514 = vld [vmem:[%s270 + $0x570] sm:$0xff]
        %v515 = vld [vmem:[%s270 + $0x578] sm:$0xff]
        %v516 = vld [vmem:[%s270 + $0x580] sm:$0xff]
        %v517 = vld [vmem:[%s270 + $0x588] sm:$0xff]
        %v518 = vld [vmem:[%s270 + $0x590] sm:$0xff]
        %v519 = vld [vmem:[%s270 + $0x598] sm:$0xff]
        %v520 = vld [vmem:[%s270 + $0x5a0] sm:$0xff]
        %v521 = vld [vmem:[%s270 + $0x5a8] sm:$0xff]
        %v522 = vld [vmem:[%s270 + $0x5b0] sm:$0xff]
        %v523 = vld [vmem:[%s270 + $0x5b8] sm:$0xff]
        %v524 = vld [vmem:[%s270 + $0x5c0] sm:$0xff]
        %v525 = vld [vmem:[%s270 + $0x5c8] sm:$0xff]
        %v526 = vld [vmem:[%s270 + $0x5d0] sm:$0xff]
        %v527 = vld [vmem:[%s270 + $0x5d8] sm:$0xff]
        %v528 = vld [vmem:[%s270 + $0x5e0] sm:$0xff]
        %v529 = vld [vmem:[%s270 + $0x5e8] sm:$0xff]
        %v530 = vld [vmem:[%s270 + $0x5f0] sm:$0xff]
        %v531 = vld [vmem:[%s270 + $0x5f8] sm:$0xff]
        %v532 = vld [vmem:[%s270 + $0x600] sm:$0xff]
        %v533 = vld [vmem:[%s270 + $0x608] sm:$0xff]
        %v534 = vld [vmem:[%s270 + $0x610] sm:$0xff]
        %v535 = vld [vmem:[%s270 + $0x618] sm:$0xff]
        %v536 = vld [vmem:[%s270 + $0x620] sm:$0xff]
        %v537 = vld [vmem:[%s270 + $0x628] sm:$0xff]
        %v538 = vld [vmem:[%s270 + $0x630] sm:$0xff]
        %v539 = vld [vmem:[%s270 + $0x638] sm:$0xff]
        %v540 = vld [vmem:[%s270 + $0x640] sm:$0xff]
        %v541 = vld [vmem:[%s270 + $0x648] sm:$0xff]
        %v542 = vld [vmem:[%s270 + $0x650] sm:$0xff]
        %v543 = vld [vmem:[%s270 + $0x658] sm:$0xff]
        %v544 = vld [vmem:[%s270 + $0x660] sm:$0xff]
        %v545 = vld [vmem:[%s270 + $0x668] sm:$0xff]
        %v546 = vld [vmem:[%s270 + $0x670] sm:$0xff]
        %v547 = vld [vmem:[%s270 + $0x678] sm:$0xff]
        %v548 = vld [vmem:[%s270 + $0x680] sm:$0xff]
        %v549 = vld [vmem:[%s270 + $0x688] sm:$0xff]
        %v550 = vld [vmem:[%s270 + $0x690] sm:$0xff]
        %v551 = vld [vmem:[%s270 + $0x698] sm:$0xff]
        %v552 = vld [vmem:[%s270 + $0x6a0] sm:$0xff]
        %v553 = vld [vmem:[%s270 + $0x6a8] sm:$0xff]
        %v554 = vld [vmem:[%s270 + $0x6b0] sm:$0xff]
        %v555 = vld [vmem:[%s270 + $0x6b8] sm:$0xff]
        %v556 = vld [vmem:[%s270 + $0x6c0] sm:$0xff]
        %v557 = vld [vmem:[%s270 + $0x6c8] sm:$0xff]
        %v558 = vld [vmem:[%s270 + $0x6d0] sm:$0xff]
        %v559 = vld [vmem:[%s270 + $0x6d8] sm:$0xff]
        %v560 = vld [vmem:[%s270 + $0x6e0] sm:$0xff]
        %v561 = vld [vmem:[%s270 + $0x6e8] sm:$0xff]
        %v562 = vld [vmem:[%s270 + $0x6f0] sm:$0xff]
        %v563 = vld [vmem:[%s270 + $0x6f8] sm:$0xff]
        %v564 = vld [vmem:[%s270 + $0x700] sm:$0xff]
        %v565 = vld [vmem:[%s270 + $0x708] sm:$0xff]
        %v566 = vld [vmem:[%s270 + $0x710] sm:$0xff]
        %v567 = vld [vmem:[%s270 + $0x718] sm:$0xff]
        %v568 = vld [vmem:[%s270 + $0x720] sm:$0xff]
        %v569 = vld [vmem:[%s270 + $0x728] sm:$0xff]
        %v570 = vld [vmem:[%s270 + $0x730] sm:$0xff]
        %v571 = vld [vmem:[%s270 + $0x738] sm:$0xff]
        %v572 = vld [vmem:[%s270 + $0x740] sm:$0xff]
        %v573 = vld [vmem:[%s270 + $0x748] sm:$0xff]
        %v574 = vld [vmem:[%s270 + $0x750] sm:$0xff]
        %v575 = vld [vmem:[%s270 + $0x758] sm:$0xff]
        %v576 = vld [vmem:[%s270 + $0x760] sm:$0xff]
        %v577 = vld [vmem:[%s270 + $0x768] sm:$0xff]
        %v578 = vld [vmem:[%s270 + $0x770] sm:$0xff]
        %v579 = vld [vmem:[%s270 + $0x778] sm:$0xff]
        %v580 = vld [vmem:[%s270 + $0x780] sm:$0xff]
        %v581 = vld [vmem:[%s270 + $0x788] sm:$0xff]
        %v582 = vld [vmem:[%s270 + $0x790] sm:$0xff]
        %v583 = vld [vmem:[%s270 + $0x798] sm:$0xff]
        %v584 = vld [vmem:[%s270 + $0x7a0] sm:$0xff]
        %v585 = vld [vmem:[%s270 + $0x7a8] sm:$0xff]
        %v586 = vld [vmem:[%s270 + $0x7b0] sm:$0xff]
        %v587 = vld [vmem:[%s270 + $0x7b8] sm:$0xff]
        %v588 = vld [vmem:[%s270 + $0x7c0] sm:$0xff]
        %v589 = vld [vmem:[%s270 + $0x7c8] sm:$0xff]
        %v590 = vld [vmem:[%s270 + $0x7d0] sm:$0xff]
        %v591 = vld [vmem:[%s270 + $0x7d8] sm:$0xff]
        %v592 = vld [vmem:[%s270 + $0x7e0] sm:$0xff]
        %v593 = vld [vmem:[%s270 + $0x7e8] sm:$0xff]
        %v594 = vld [vmem:[%s270 + $0x7f0] sm:$0xff]
        %v595 = vld [vmem:[%s270 + $0x7f8] sm:$0xff]
        %v596 = vld [vmem:[%s270 + $0x800] sm:$0xff]
        %v597 = vld [vmem:[%s270 + $0x808] sm:$0xff]
        %v598 = vld [vmem:[%s270 + $0x810] sm:$0xff]
        %v599 = vld [vmem:[%s270 + $0x818] sm:$0xff]
        %v600 = vld [vmem:[%s270 + $0x820] sm:$0xff]
        %v601 = vld [vmem:[%s270 + $0x828] sm:$0xff]
        %v602 = vld [vmem:[%s270 + $0x830] sm:$0xff]
        %v603 = vld [vmem:[%s270 + $0x838] sm:$0xff]
        %v604 = vld [vmem:[%s270 + $0x840] sm:$0xff]
        %v605 = vld [vmem:[%s270 + $0x848] sm:$0xff]
        %v606 = vld [vmem:[%s270 + $0x850] sm:$0xff]
        %v607 = vld [vmem:[%s270 + $0x858] sm:$0xff]
        %v608 = vld [vmem:[%s270 + $0x860] sm:$0xff]
        %v609 = vld [vmem:[%s270 + $0x868] sm:$0xff]
        %v610 = vld [vmem:[%s270 + $0x870] sm:$0xff]
        %v611 = vld [vmem:[%s270 + $0x878] sm:$0xff]
        %v612 = vld [vmem:[%s270 + $0x880] sm:$0xff]
        %v613 = vld [vmem:[%s270 + $0x888] sm:$0xff]
        %v614 = vld [vmem:[%s270 + $0x890] sm:$0xff]
        %v615 = vld [vmem:[%s270 + $0x898] sm:$0xff]
        %v616 = vld [vmem:[%s270 + $0x8a0] sm:$0xff]
        %v617 = vld [vmem:[%s270 + $0x8a8] sm:$0xff]
        %v618 = vld [vmem:[%s270 + $0x8b0] sm:$0xff]
        %v619 = vld [vmem:[%s270 + $0x8b8] sm:$0xff]
        %v620 = vld [vmem:[%s270 + $0x8c0] sm:$0xff]
        %v621 = vld [vmem:[%s270 + $0x8c8] sm:$0xff]
        %v622 = vld [vmem:[%s270 + $0x8d0] sm:$0xff]
        %v623 = vld [vmem:[%s270 + $0x8d8] sm:$0xff]
        %v624 = vld [vmem:[%s270 + $0x8e0] sm:$0xff]
        %v625 = vld [vmem:[%s270 + $0x8e8] sm:$0xff]
        %v626 = vld [vmem:[%s270 + $0x8f0] sm:$0xff]
        %v627 = vld [vmem:[%s270 + $0x8f8] sm:$0xff]
        %v628 = vld [vmem:[%s270 + $0x900] sm:$0xff]
        %v629 = vld [vmem:[%s270 + $0x908] sm:$0xff]
        %v630 = vld [vmem:[%s270 + $0x910] sm:$0xff]
        %v631 = vld [vmem:[%s270 + $0x918] sm:$0xff]
        %v632 = vld [vmem:[%s270 + $0x920] sm:$0xff]
        %v633 = vld [vmem:[%s270 + $0x928] sm:$0xff]
        %v634 = vld [vmem:[%s270 + $0x930] sm:$0xff]
        %v635 = vld [vmem:[%s270 + $0x938] sm:$0xff]
        %v636 = vld [vmem:[%s270 + $0x940] sm:$0xff]
        %v637 = vld [vmem:[%s270 + $0x948] sm:$0xff]
        %v638 = vld [vmem:[%s270 + $0x950] sm:$0xff]
        %v639 = vld [vmem:[%s270 + $0x958] sm:$0xff]
        %v640 = vld [vmem:[%s270 + $0x960] sm:$0xff]
        %v641 = vld [vmem:[%s270 + $0x968] sm:$0xff]
        %v642 = vld [vmem:[%s270 + $0x970] sm:$0xff]
        %v643 = vld [vmem:[%s270 + $0x978] sm:$0xff]
        %v644 = vld [vmem:[%s270 + $0x980] sm:$0xff]
        %v645 = vld [vmem:[%s270 + $0x988] sm:$0xff]
        %v646 = vld [vmem:[%s270 + $0x990] sm:$0xff]
        %v647 = vld [vmem:[%s270 + $0x998] sm:$0xff]
        %v648 = vld [vmem:[%s270 + $0x9a0] sm:$0xff]
        %v649 = vld [vmem:[%s270 + $0x9a8] sm:$0xff]
        %v650 = vld [vmem:[%s270 + $0x9b0] sm:$0xff]
        %v651 = vld [vmem:[%s270 + $0x9b8] sm:$0xff]
        %v652 = vld [vmem:[%s270 + $0x9c0] sm:$0xff]
        %v653 = vld [vmem:[%s270 + $0x9c8] sm:$0xff]
        %v654 = vld [vmem:[%s270 + $0x9d0] sm:$0xff]
        %v655 = vld [vmem:[%s270 + $0x9d8] sm:$0xff]
        %v656 = vld [vmem:[%s270 + $0x9e0] sm:$0xff]
        %v657 = vld [vmem:[%s270 + $0x9e8] sm:$0xff]
        %v658 = vld [vmem:[%s270 + $0x9f0] sm:$0xff]
        %v659 = vld [vmem:[%s270 + $0x9f8] sm:$0xff]
        %v660 = vld [vmem:[%s270 + $0xa00] sm:$0xff]
        %v661 = vld [vmem:[%s270 + $0xa08] sm:$0xff]
        %v662 = vld [vmem:[%s270 + $0xa10] sm:$0xff]
        %v663 = vld [vmem:[%s270 + $0xa18] sm:$0xff]
        %v664 = vld [vmem:[%s270 + $0xa20] sm:$0xff]
        %v665 = vld [vmem:[%s270 + $0xa28] sm:$0xff]
        %v666 = vld [vmem:[%s270 + $0xa30] sm:$0xff]
        %v667 = vld [vmem:[%s270 + $0xa38] sm:$0xff]
        %v668 = vld [vmem:[%s270 + $0xa40] sm:$0xff]
        %v669 = vld [vmem:[%s270 + $0xa48] sm:$0xff]
        %v670 = vld [vmem:[%s270 + $0xa50] sm:$0xff]
        %v671 = vld [vmem:[%s270 + $0xa58] sm:$0xff]
        %v672 = vld [vmem:[%s270 + $0xa60] sm:$0xff]
        %v673 = vld [vmem:[%s270 + $0xa68] sm:$0xff]
        %v674 = vld [vmem:[%s270 + $0xa70] sm:$0xff]
        %v675 = vld [vmem:[%s270 + $0xa78] sm:$0xff]
        %v676 = vld [vmem:[%s270 + $0xa80] sm:$0xff]
        %v677 = vld [vmem:[%s270 + $0xa88] sm:$0xff]
        %v678 = vld [vmem:[%s270 + $0xa90] sm:$0xff]
        %v679 = vld [vmem:[%s270 + $0xa98] sm:$0xff]
        %v680 = vld [vmem:[%s270 + $0xaa0] sm:$0xff]
        %v681 = vld [vmem:[%s270 + $0xaa8] sm:$0xff]
        %v682 = vld [vmem:[%s270 + $0xab0] sm:$0xff]
        %v683 = vld [vmem:[%s270 + $0xab8] sm:$0xff]
        %v684 = vld [vmem:[%s270 + $0xac0] sm:$0xff]
        %v685 = vld [vmem:[%s270 + $0xac8] sm:$0xff]
        %v686 = vld [vmem:[%s270 + $0xad0] sm:$0xff]
        %v687 = vld [vmem:[%s270 + $0xad8] sm:$0xff]
        %v688 = vld [vmem:[%s270 + $0xae0] sm:$0xff]
        %v689 = vld [vmem:[%s270 + $0xae8] sm:$0xff]
        %v690 = vld [vmem:[%s270 + $0xaf0] sm:$0xff]
        %v691 = vld [vmem:[%s270 + $0xaf8] sm:$0xff]
        %v692 = vld [vmem:[%s270 + $0xb00] sm:$0xff]
        %v693 = vld [vmem:[%s270 + $0xb08] sm:$0xff]
        %v694 = vld [vmem:[%s270 + $0xb10] sm:$0xff]
        %v695 = vld [vmem:[%s270 + $0xb18] sm:$0xff]
        %v696 = vld [vmem:[%s270 + $0xb20] sm:$0xff]
        %v697 = vld [vmem:[%s270 + $0xb28] sm:$0xff]
        %v698 = vld [vmem:[%s270 + $0xb30] sm:$0xff]
        %v699 = vld [vmem:[%s270 + $0xb38] sm:$0xff]
        %v700 = vld [vmem:[%s270 + $0xb40] sm:$0xff]
        %v701 = vld [vmem:[%s270 + $0xb48] sm:$0xff]
        %v702 = vld [vmem:[%s270 + $0xb50] sm:$0xff]
        %v703 = vld [vmem:[%s270 + $0xb58] sm:$0xff]
        %v704 = vld [vmem:[%s270 + $0xb60] sm:$0xff]
        %v705 = vld [vmem:[%s270 + $0xb68] sm:$0xff]
        %v706 = vld [vmem:[%s270 + $0xb70] sm:$0xff]
        %v707 = vld [vmem:[%s270 + $0xb78] sm:$0xff]
        %v708 = vld [vmem:[%s270 + $0xb80] sm:$0xff]
        %v709 = vld [vmem:[%s270 + $0xb88] sm:$0xff]
        %v710 = vld [vmem:[%s270 + $0xb90] sm:$0xff]
        %v711 = vld [vmem:[%s270 + $0xb98] sm:$0xff]
        %v712 = vld [vmem:[%s270 + $0xba0] sm:$0xff]
        %v713 = vld [vmem:[%s270 + $0xba8] sm:$0xff]
        %v714 = vld [vmem:[%s270 + $0xbb0] sm:$0xff]
        %v715 = vld [vmem:[%s270 + $0xbb8] sm:$0xff]
        %v716 = vld [vmem:[%s270 + $0xbc0] sm:$0xff]
        %v717 = vld [vmem:[%s270 + $0xbc8] sm:$0xff]
        %v718 = vld [vmem:[%s270 + $0xbd0] sm:$0xff]
        %v719 = vld [vmem:[%s270 + $0xbd8] sm:$0xff]
        %v720 = vld [vmem:[%s270 + $0xbe0] sm:$0xff]
        %v721 = vld [vmem:[%s270 + $0xbe8] sm:$0xff]
        %v722 = vld [vmem:[%s270 + $0xbf0] sm:$0xff]
        %v723 = vld [vmem:[%s270 + $0xbf8] sm:$0xff]
        %v724 = vld [vmem:[%s270 + $0xc00] sm:$0xff]
        %v725 = vld [vmem:[%s270 + $0xc08] sm:$0xff]
        %v726 = vld [vmem:[%s270 + $0xc10] sm:$0xff]
        %v727 = vld [vmem:[%s270 + $0xc18] sm:$0xff]
        %v728 = vld [vmem:[%s270 + $0xc20] sm:$0xff]
        %v729 = vld [vmem:[%s270 + $0xc28] sm:$0xff]
        %v730 = vld [vmem:[%s270 + $0xc30] sm:$0xff]
        %v731 = vld [vmem:[%s270 + $0xc38] sm:$0xff]
        %v732 = vld [vmem:[%s270 + $0xc40] sm:$0xff]
        %v733 = vld [vmem:[%s270 + $0xc48] sm:$0xff]
        %v734 = vld [vmem:[%s270 + $0xc50] sm:$0xff]
        %v735 = vld [vmem:[%s270 + $0xc58] sm:$0xff]
        %v736 = vld [vmem:[%s270 + $0xc60] sm:$0xff]
        %v737 = vld [vmem:[%s270 + $0xc68] sm:$0xff]
        %v738 = vld [vmem:[%s270 + $0xc70] sm:$0xff]
        %v739 = vld [vmem:[%s270 + $0xc78] sm:$0xff]
        %v740 = vld [vmem:[%s270 + $0xc80] sm:$0xff]
        %v741 = vld [vmem:[%s270 + $0xc88] sm:$0xff]
        %v742 = vld [vmem:[%s270 + $0xc90] sm:$0xff]
        %v743 = vld [vmem:[%s270 + $0xc98] sm:$0xff]
        %v744 = vld [vmem:[%s270 + $0xca0] sm:$0xff]
        %v745 = vld [vmem:[%s270 + $0xca8] sm:$0xff]
        %v746 = vld [vmem:[%s270 + $0xcb0] sm:$0xff]
        %v747 = vld [vmem:[%s270 + $0xcb8] sm:$0xff]
        %v748 = vld [vmem:[%s270 + $0xcc0] sm:$0xff]
        %v749 = vld [vmem:[%s270 + $0xcc8] sm:$0xff]
        %v750 = vld [vmem:[%s270 + $0xcd0] sm:$0xff]
        %v751 = vld [vmem:[%s270 + $0xcd8] sm:$0xff]
        %v752 = vld [vmem:[%s270 + $0xce0] sm:$0xff]
        %v753 = vld [vmem:[%s270 + $0xce8] sm:$0xff]
        %v754 = vld [vmem:[%s270 + $0xcf0] sm:$0xff]
        %v755 = vld [vmem:[%s270 + $0xcf8] sm:$0xff]
        %v756 = vld [vmem:[%s270 + $0xd00] sm:$0xff]
        %v757 = vld [vmem:[%s270 + $0xd08] sm:$0xff]
        %v758 = vld [vmem:[%s270 + $0xd10] sm:$0xff]
        %v759 = vld [vmem:[%s270 + $0xd18] sm:$0xff]
        %v760 = vld [vmem:[%s270 + $0xd20] sm:$0xff]
        %v761 = vld [vmem:[%s270 + $0xd28] sm:$0xff]
        %v762 = vld [vmem:[%s270 + $0xd30] sm:$0xff]
        %v763 = vld [vmem:[%s270 + $0xd38] sm:$0xff]
        %v764 = vld [vmem:[%s270 + $0xd40] sm:$0xff]
        %v765 = vld [vmem:[%s270 + $0xd48] sm:$0xff]
        %v766 = vld [vmem:[%s270 + $0xd50] sm:$0xff]
        %v767 = vld [vmem:[%s270 + $0xd58] sm:$0xff]
        %v768 = vld [vmem:[%s270 + $0xd60] sm:$0xff]
        %v769 = vld [vmem:[%s270 + $0xd68] sm:$0xff]
        %v770 = vld [vmem:[%s270 + $0xd70] sm:$0xff]
        %v771 = vld [vmem:[%s270 + $0xd78] sm:$0xff]
        %v772 = vld [vmem:[%s270 + $0xd80] sm:$0xff]
        %v773 = vld [vmem:[%s270 + $0xd88] sm:$0xff]
        %v774 = vld [vmem:[%s270 + $0xd90] sm:$0xff]
        %v775 = vld [vmem:[%s270 + $0xd98] sm:$0xff]
        %v776 = vld [vmem:[%s270 + $0xda0] sm:$0xff]
        %v777 = vld [vmem:[%s270 + $0xda8] sm:$0xff]
        %v778 = vld [vmem:[%s270 + $0xdb0] sm:$0xff]
        %v779 = vld [vmem:[%s270 + $0xdb8] sm:$0xff]
        %v780 = vld [vmem:[%s270 + $0xdc0] sm:$0xff]
        %v781 = vld [vmem:[%s270 + $0xdc8] sm:$0xff]
        %v782 = vld [vmem:[%s270 + $0xdd0] sm:$0xff]
        %v783 = vld [vmem:[%s270 + $0xdd8] sm:$0xff]
        %v784 = vld [vmem:[%s270 + $0xde0] sm:$0xff]
        %v785 = vld [vmem:[%s270 + $0xde8] sm:$0xff]
        %v786 = vld [vmem:[%s270 + $0xdf0] sm:$0xff]
        %v787 = vld [vmem:[%s270 + $0xdf8] sm:$0xff]
        %v789 = vcombine.high %v339, %v339
        %v791 = vunpack.c.l.s4 1966171168
        %v792 = vunpack.c.0.s8 %v791
        %v793 = vlaneseq
        %v794 = vshrl.u32 %v793, 7
        %v795 = vsub.s32 %v792, %v794
        %v796 = vrot.slane %v339, %v795
        %v798 = vunpack.c.l.s4 1966171168
        %v799 = vunpack.c.0.s8 %v798
        %v800 = vlaneseq
        %v801 = vshrl.u32 %v800, 7
        %v802 = vsub.s32 %v799, %v801
        %v803 = vrot.slane %v789, %v802
        %v804 = vcombine.high %v796, %v796
        %v805 = vcombine.high %v803, %v803
        %v807 = vunpack.c.l.s4 1966171168
        %v808 = vunpack.c.0.s8 %v807
        %v809 = vlaneseq
        %v810 = vshrl.u32 %v809, 7
        %v811 = vsub.s32 %v808, %v810
        %v812 = vrot.slane %v796, %v811
        %v814 = vunpack.c.l.s4 1966171168
        %v815 = vunpack.c.0.s8 %v814
        %v816 = vlaneseq
        %v817 = vshrl.u32 %v816, 7
        %v818 = vsub.s32 %v815, %v817
        %v819 = vrot.slane %v803, %v818
        %v821 = vunpack.c.l.s4 1966171168
        %v822 = vunpack.c.0.s8 %v821
        %v823 = vlaneseq
        %v824 = vshrl.u32 %v823, 7
        %v825 = vsub.s32 %v822, %v824
        %v826 = vrot.slane %v804, %v825
        %v828 = vunpack.c.l.s4 1966171168
        %v829 = vunpack.c.0.s8 %v828
        %v830 = vlaneseq
        %v831 = vshrl.u32 %v830, 7
        %v832 = vsub.s32 %v829, %v831
        %v833 = vrot.slane %v805, %v832
        %v834 = vcombine.high %v812, %v812
        %v835 = vcombine.high %v819, %v819
        %v836 = vcombine.high %v826, %v826
        %v1292 = vunpack.c.l.b16 %v340
        %v1293 = vunpack.c.h.b16 %v340
        %v1294 = vunpack.c.l.b16 %v341
        %v1295 = vunpack.c.h.b16 %v341
        %v1296 = vunpack.c.l.b16 %v342
        %v1297 = vunpack.c.h.b16 %v342
        %v1298 = vunpack.c.l.b16 %v343
        %v1299 = vunpack.c.h.b16 %v343
        %v1300 = vunpack.c.l.b16 %v344
        %v1301 = vunpack.c.h.b16 %v344
        %v1302 = vunpack.c.l.b16 %v345
        %v1303 = vunpack.c.h.b16 %v345
        %v1304 = vunpack.c.l.b16 %v346
        %v1305 = vunpack.c.h.b16 %v346
        %v1306 = vunpack.c.l.b16 %v347
        %v1307 = vunpack.c.h.b16 %v347
        %v1308 = vunpack.c.l.b16 %v348
        %v1309 = vunpack.c.h.b16 %v348
        %v1310 = vunpack.c.l.b16 %v349
        %v1311 = vunpack.c.h.b16 %v349
        %v1312 = vunpack.c.l.b16 %v350
        %v1313 = vunpack.c.h.b16 %v350
        %v1314 = vunpack.c.l.b16 %v351
        %v1315 = vunpack.c.h.b16 %v351
        %v1316 = vunpack.c.l.b16 %v352
        %v1317 = vunpack.c.h.b16 %v352
        %v1318 = vunpack.c.l.b16 %v353
        %v1319 = vunpack.c.h.b16 %v353
        %v1320 = vunpack.c.l.b16 %v354
        %v1321 = vunpack.c.h.b16 %v354
        %v1322 = vunpack.c.l.b16 %v355
        %v1323 = vunpack.c.h.b16 %v355
        %v1324 = vunpack.c.l.b16 %v356
        %v1325 = vunpack.c.h.b16 %v356
        %v1326 = vunpack.c.l.b16 %v357
        %v1327 = vunpack.c.h.b16 %v357
        %v1328 = vunpack.c.l.b16 %v358
        %v1329 = vunpack.c.h.b16 %v358
        %v1330 = vunpack.c.l.b16 %v359
        %v1331 = vunpack.c.h.b16 %v359
        %v1332 = vunpack.c.l.b16 %v360
        %v1333 = vunpack.c.h.b16 %v360
        %v1334 = vunpack.c.l.b16 %v361
        %v1335 = vunpack.c.h.b16 %v361
        %v1336 = vunpack.c.l.b16 %v362
        %v1337 = vunpack.c.h.b16 %v362
        %v1338 = vunpack.c.l.b16 %v363
        %v1339 = vunpack.c.h.b16 %v363
        %v1340 = vunpack.c.l.b16 %v364
        %v1341 = vunpack.c.h.b16 %v364
        %v1342 = vunpack.c.l.b16 %v365
        %v1343 = vunpack.c.h.b16 %v365
        %v1344 = vunpack.c.l.b16 %v366
        %v1345 = vunpack.c.h.b16 %v366
        %v1346 = vunpack.c.l.b16 %v367
        %v1347 = vunpack.c.h.b16 %v367
        %v1348 = vunpack.c.l.b16 %v368
        %v1349 = vunpack.c.h.b16 %v368
        %v1350 = vunpack.c.l.b16 %v369
        %v1351 = vunpack.c.h.b16 %v369
        %v1352 = vunpack.c.l.b16 %v370
        %v1353 = vunpack.c.h.b16 %v370
        %v1354 = vunpack.c.l.b16 %v371
        %v1355 = vunpack.c.h.b16 %v371
        %v1356 = vunpack.c.l.b16 %v372
        %v1357 = vunpack.c.h.b16 %v372
        %v1358 = vunpack.c.l.b16 %v373
        %v1359 = vunpack.c.h.b16 %v373
        %v1360 = vunpack.c.l.b16 %v374
        %v1361 = vunpack.c.h.b16 %v374
        %v1362 = vunpack.c.l.b16 %v375
        %v1363 = vunpack.c.h.b16 %v375
        %v1364 = vunpack.c.l.b16 %v376
        %v1365 = vunpack.c.h.b16 %v376
        %v1366 = vunpack.c.l.b16 %v377
        %v1367 = vunpack.c.h.b16 %v377
        %v1368 = vunpack.c.l.b16 %v378
        %v1369 = vunpack.c.h.b16 %v378
        %v1370 = vunpack.c.l.b16 %v379
        %v1371 = vunpack.c.h.b16 %v379
        %v1372 = vunpack.c.l.b16 %v380
        %v1373 = vunpack.c.h.b16 %v380
        %v1374 = vunpack.c.l.b16 %v381
        %v1375 = vunpack.c.h.b16 %v381
        %v1376 = vunpack.c.l.b16 %v382
        %v1377 = vunpack.c.h.b16 %v382
        %v1378 = vunpack.c.l.b16 %v383
        %v1379 = vunpack.c.h.b16 %v383
        %v1380 = vunpack.c.l.b16 %v384
        %v1381 = vunpack.c.h.b16 %v384
        %v1382 = vunpack.c.l.b16 %v385
        %v1383 = vunpack.c.h.b16 %v385
        %v1384 = vunpack.c.l.b16 %v386
        %v1385 = vunpack.c.h.b16 %v386
        %v1386 = vunpack.c.l.b16 %v387
        %v1387 = vunpack.c.h.b16 %v387
        %v1388 = vunpack.c.l.b16 %v388
        %v1389 = vunpack.c.h.b16 %v388
        %v1390 = vunpack.c.l.b16 %v389
        %v1391 = vunpack.c.h.b16 %v389
        %v1392 = vunpack.c.l.b16 %v390
        %v1393 = vunpack.c.h.b16 %v390
        %v1394 = vunpack.c.l.b16 %v391
        %v1395 = vunpack.c.h.b16 %v391
        %v1396 = vunpack.c.l.b16 %v392
        %v1397 = vunpack.c.h.b16 %v392
        %v1398 = vunpack.c.l.b16 %v393
        %v1399 = vunpack.c.h.b16 %v393
        %v1400 = vunpack.c.l.b16 %v394
        %v1401 = vunpack.c.h.b16 %v394
        %v1402 = vunpack.c.l.b16 %v395
        %v1403 = vunpack.c.h.b16 %v395
        %v1404 = vunpack.c.l.b16 %v396
        %v1405 = vunpack.c.h.b16 %v396
        %v1406 = vunpack.c.l.b16 %v397
        %v1407 = vunpack.c.h.b16 %v397
        %v1408 = vunpack.c.l.b16 %v398
        %v1409 = vunpack.c.h.b16 %v398
        %v1410 = vunpack.c.l.b16 %v399
        %v1411 = vunpack.c.h.b16 %v399
        %v1412 = vunpack.c.l.b16 %v400
        %v1413 = vunpack.c.h.b16 %v400
        %v1414 = vunpack.c.l.b16 %v401
        %v1415 = vunpack.c.h.b16 %v401
        %v1416 = vunpack.c.l.b16 %v402
        %v1417 = vunpack.c.h.b16 %v402
        %v1418 = vunpack.c.l.b16 %v403
        %v1419 = vunpack.c.h.b16 %v403
        %v1420 = vunpack.c.l.b16 %v404
        %v1421 = vunpack.c.h.b16 %v404
        %v1422 = vunpack.c.l.b16 %v405
        %v1423 = vunpack.c.h.b16 %v405
        %v1424 = vunpack.c.l.b16 %v406
        %v1425 = vunpack.c.h.b16 %v406
        %v1426 = vunpack.c.l.b16 %v407
        %v1427 = vunpack.c.h.b16 %v407
        %v1428 = vunpack.c.l.b16 %v408
        %v1429 = vunpack.c.h.b16 %v408
        %v1430 = vunpack.c.l.b16 %v409
        %v1431 = vunpack.c.h.b16 %v409
        %v1432 = vunpack.c.l.b16 %v410
        %v1433 = vunpack.c.h.b16 %v410
        %v1434 = vunpack.c.l.b16 %v411
        %v1435 = vunpack.c.h.b16 %v411
        %v1436 = vunpack.c.l.b16 %v412
        %v1437 = vunpack.c.h.b16 %v412
        %v1438 = vunpack.c.l.b16 %v413
        %v1439 = vunpack.c.h.b16 %v413
        %v1440 = vunpack.c.l.b16 %v414
        %v1441 = vunpack.c.h.b16 %v414
        %v1442 = vunpack.c.l.b16 %v415
        %v1443 = vunpack.c.h.b16 %v415
        %v1444 = vunpack.c.l.b16 %v416
        %v1445 = vunpack.c.h.b16 %v416
        %v1446 = vunpack.c.l.b16 %v417
        %v1447 = vunpack.c.h.b16 %v417
        %v1448 = vunpack.c.l.b16 %v418
        %v1449 = vunpack.c.h.b16 %v418
        %v1450 = vunpack.c.l.b16 %v419
        %v1451 = vunpack.c.h.b16 %v419
        %v1452 = vunpack.c.l.b16 %v420
        %v1453 = vunpack.c.h.b16 %v420
        %v1454 = vunpack.c.l.b16 %v421
        %v1455 = vunpack.c.h.b16 %v421
        %v1456 = vunpack.c.l.b16 %v422
        %v1457 = vunpack.c.h.b16 %v422
        %v1458 = vunpack.c.l.b16 %v423
        %v1459 = vunpack.c.h.b16 %v423
        %v1460 = vunpack.c.l.b16 %v424
        %v1461 = vunpack.c.h.b16 %v424
        %v1462 = vunpack.c.l.b16 %v425
        %v1463 = vunpack.c.h.b16 %v425
        %v1464 = vunpack.c.l.b16 %v426
        %v1465 = vunpack.c.h.b16 %v426
        %v1466 = vunpack.c.l.b16 %v427
        %v1467 = vunpack.c.h.b16 %v427
        %v1468 = vunpack.c.l.b16 %v428
        %v1469 = vunpack.c.h.b16 %v428
        %v1470 = vunpack.c.l.b16 %v429
        %v1471 = vunpack.c.h.b16 %v429
        %v1472 = vunpack.c.l.b16 %v430
        %v1473 = vunpack.c.h.b16 %v430
        %v1474 = vunpack.c.l.b16 %v431
        %v1475 = vunpack.c.h.b16 %v431
        %v1476 = vunpack.c.l.b16 %v432
        %v1477 = vunpack.c.h.b16 %v432
        %v1478 = vunpack.c.l.b16 %v433
        %v1479 = vunpack.c.h.b16 %v433
        %v1480 = vunpack.c.l.b16 %v434
        %v1481 = vunpack.c.h.b16 %v434
        %v1482 = vunpack.c.l.b16 %v435
        %v1483 = vunpack.c.h.b16 %v435
        %v1484 = vunpack.c.l.b16 %v436
        %v1485 = vunpack.c.h.b16 %v436
        %v1486 = vunpack.c.l.b16 %v437
        %v1487 = vunpack.c.h.b16 %v437
        %v1488 = vunpack.c.l.b16 %v438
        %v1489 = vunpack.c.h.b16 %v438
        %v1490 = vunpack.c.l.b16 %v439
        %v1491 = vunpack.c.h.b16 %v439
        %v1492 = vunpack.c.l.b16 %v440
        %v1493 = vunpack.c.h.b16 %v440
        %v1494 = vunpack.c.l.b16 %v441
        %v1495 = vunpack.c.h.b16 %v441
        %v1496 = vunpack.c.l.b16 %v442
        %v1497 = vunpack.c.h.b16 %v442
        %v1498 = vunpack.c.l.b16 %v443
        %v1499 = vunpack.c.h.b16 %v443
        %v1500 = vunpack.c.l.b16 %v444
        %v1501 = vunpack.c.h.b16 %v444
        %v1502 = vunpack.c.l.b16 %v445
        %v1503 = vunpack.c.h.b16 %v445
        %v1504 = vunpack.c.l.b16 %v446
        %v1505 = vunpack.c.h.b16 %v446
        %v1506 = vunpack.c.l.b16 %v447
        %v1507 = vunpack.c.h.b16 %v447
        %v1508 = vunpack.c.l.b16 %v448
        %v1509 = vunpack.c.h.b16 %v448
        %v1510 = vunpack.c.l.b16 %v449
        %v1511 = vunpack.c.h.b16 %v449
        %v1512 = vunpack.c.l.b16 %v450
        %v1513 = vunpack.c.h.b16 %v450
        %v1514 = vunpack.c.l.b16 %v451
        %v1515 = vunpack.c.h.b16 %v451
        %v1516 = vunpack.c.l.b16 %v452
        %v1517 = vunpack.c.h.b16 %v452
        %v1518 = vunpack.c.l.b16 %v453
        %v1519 = vunpack.c.h.b16 %v453
        %v1520 = vunpack.c.l.b16 %v454
        %v1521 = vunpack.c.h.b16 %v454
        %v1522 = vunpack.c.l.b16 %v455
        %v1523 = vunpack.c.h.b16 %v455
        %v1524 = vunpack.c.l.b16 %v456
        %v1525 = vunpack.c.h.b16 %v456
        %v1526 = vunpack.c.l.b16 %v457
        %v1527 = vunpack.c.h.b16 %v457
        %v1528 = vunpack.c.l.b16 %v458
        %v1529 = vunpack.c.h.b16 %v458
        %v1530 = vunpack.c.l.b16 %v459
        %v1531 = vunpack.c.h.b16 %v459
        %v1532 = vunpack.c.l.b16 %v460
        %v1533 = vunpack.c.h.b16 %v460
        %v1534 = vunpack.c.l.b16 %v461
        %v1535 = vunpack.c.h.b16 %v461
        %v1536 = vunpack.c.l.b16 %v462
        %v1537 = vunpack.c.h.b16 %v462
        %v1538 = vunpack.c.l.b16 %v463
        %v1539 = vunpack.c.h.b16 %v463
        %v1540 = vunpack.c.l.b16 %v464
        %v1541 = vunpack.c.h.b16 %v464
        %v1542 = vunpack.c.l.b16 %v465
        %v1543 = vunpack.c.h.b16 %v465
        %v1544 = vunpack.c.l.b16 %v466
        %v1545 = vunpack.c.h.b16 %v466
        %v1546 = vunpack.c.l.b16 %v467
        %v1547 = vunpack.c.h.b16 %v467
        %v1548 = vunpack.c.l.b16 %v468
        %v1549 = vunpack.c.h.b16 %v468
        %v1550 = vunpack.c.l.b16 %v469
        %v1551 = vunpack.c.h.b16 %v469
        %v1552 = vunpack.c.l.b16 %v470
        %v1553 = vunpack.c.h.b16 %v470
        %v1554 = vunpack.c.l.b16 %v471
        %v1555 = vunpack.c.h.b16 %v471
        %v1556 = vunpack.c.l.b16 %v472
        %v1557 = vunpack.c.h.b16 %v472
        %v1558 = vunpack.c.l.b16 %v473
        %v1559 = vunpack.c.h.b16 %v473
        %v1560 = vunpack.c.l.b16 %v474
        %v1561 = vunpack.c.h.b16 %v474
        %v1562 = vunpack.c.l.b16 %v475
        %v1563 = vunpack.c.h.b16 %v475
        %v1564 = vunpack.c.l.b16 %v476
        %v1565 = vunpack.c.h.b16 %v476
        %v1566 = vunpack.c.l.b16 %v477
        %v1567 = vunpack.c.h.b16 %v477
        %v1568 = vunpack.c.l.b16 %v478
        %v1569 = vunpack.c.h.b16 %v478
        %v1570 = vunpack.c.l.b16 %v479
        %v1571 = vunpack.c.h.b16 %v479
        %v1572 = vunpack.c.l.b16 %v480
        %v1573 = vunpack.c.h.b16 %v480
        %v1574 = vunpack.c.l.b16 %v481
        %v1575 = vunpack.c.h.b16 %v481
        %v1576 = vunpack.c.l.b16 %v482
        %v1577 = vunpack.c.h.b16 %v482
        %v1578 = vunpack.c.l.b16 %v483
        %v1579 = vunpack.c.h.b16 %v483
        %v1580 = vunpack.c.l.b16 %v484
        %v1581 = vunpack.c.h.b16 %v484
        %v1582 = vunpack.c.l.b16 %v485
        %v1583 = vunpack.c.h.b16 %v485
        %v1584 = vunpack.c.l.b16 %v486
        %v1585 = vunpack.c.h.b16 %v486
        %v1586 = vunpack.c.l.b16 %v487
        %v1587 = vunpack.c.h.b16 %v487
        %v1588 = vunpack.c.l.b16 %v488
        %v1589 = vunpack.c.h.b16 %v488
        %v1590 = vunpack.c.l.b16 %v489
        %v1591 = vunpack.c.h.b16 %v489
        %v1592 = vunpack.c.l.b16 %v490
        %v1593 = vunpack.c.h.b16 %v490
        %v1594 = vunpack.c.l.b16 %v491
        %v1595 = vunpack.c.h.b16 %v491
        %v1596 = vunpack.c.l.b16 %v492
        %v1597 = vunpack.c.h.b16 %v492
        %v1598 = vunpack.c.l.b16 %v493
        %v1599 = vunpack.c.h.b16 %v493
        %v1600 = vunpack.c.l.b16 %v494
        %v1601 = vunpack.c.h.b16 %v494
        %v1602 = vunpack.c.l.b16 %v495
        %v1603 = vunpack.c.h.b16 %v495
        %v1604 = vunpack.c.l.b16 %v496
        %v1605 = vunpack.c.h.b16 %v496
        %v1606 = vunpack.c.l.b16 %v497
        %v1607 = vunpack.c.h.b16 %v497
        %v1608 = vunpack.c.l.b16 %v498
        %v1609 = vunpack.c.h.b16 %v498
        %v1610 = vunpack.c.l.b16 %v499
        %v1611 = vunpack.c.h.b16 %v499
        %v1612 = vunpack.c.l.b16 %v500
        %v1613 = vunpack.c.h.b16 %v500
        %v1614 = vunpack.c.l.b16 %v501
        %v1615 = vunpack.c.h.b16 %v501
        %v1616 = vunpack.c.l.b16 %v502
        %v1617 = vunpack.c.h.b16 %v502
        %v1618 = vunpack.c.l.b16 %v503
        %v1619 = vunpack.c.h.b16 %v503
        %v1620 = vunpack.c.l.b16 %v504
        %v1621 = vunpack.c.h.b16 %v504
        %v1622 = vunpack.c.l.b16 %v505
        %v1623 = vunpack.c.h.b16 %v505
        %v1624 = vunpack.c.l.b16 %v506
        %v1625 = vunpack.c.h.b16 %v506
        %v1626 = vunpack.c.l.b16 %v507
        %v1627 = vunpack.c.h.b16 %v507
        %v1628 = vunpack.c.l.b16 %v508
        %v1629 = vunpack.c.h.b16 %v508
        %v1630 = vunpack.c.l.b16 %v509
        %v1631 = vunpack.c.h.b16 %v509
        %v1632 = vunpack.c.l.b16 %v510
        %v1633 = vunpack.c.h.b16 %v510
        %v1634 = vunpack.c.l.b16 %v511
        %v1635 = vunpack.c.h.b16 %v511
        %v1636 = vunpack.c.l.b16 %v512
        %v1637 = vunpack.c.h.b16 %v512
        %v1638 = vunpack.c.l.b16 %v513
        %v1639 = vunpack.c.h.b16 %v513
        %v1640 = vunpack.c.l.b16 %v514
        %v1641 = vunpack.c.h.b16 %v514
        %v1642 = vunpack.c.l.b16 %v515
        %v1643 = vunpack.c.h.b16 %v515
        %v1644 = vunpack.c.l.b16 %v516
        %v1645 = vunpack.c.h.b16 %v516
        %v1646 = vunpack.c.l.b16 %v517
        %v1647 = vunpack.c.h.b16 %v517
        %v1648 = vunpack.c.l.b16 %v518
        %v1649 = vunpack.c.h.b16 %v518
        %v1650 = vunpack.c.l.b16 %v519
        %v1651 = vunpack.c.h.b16 %v519
        %v1652 = vunpack.c.l.b16 %v520
        %v1653 = vunpack.c.h.b16 %v520
        %v1654 = vunpack.c.l.b16 %v521
        %v1655 = vunpack.c.h.b16 %v521
        %v1656 = vunpack.c.l.b16 %v522
        %v1657 = vunpack.c.h.b16 %v522
        %v1658 = vunpack.c.l.b16 %v523
        %v1659 = vunpack.c.h.b16 %v523
        %v1660 = vunpack.c.l.b16 %v524
        %v1661 = vunpack.c.h.b16 %v524
        %v1662 = vunpack.c.l.b16 %v525
        %v1663 = vunpack.c.h.b16 %v525
        %v1664 = vunpack.c.l.b16 %v526
        %v1665 = vunpack.c.h.b16 %v526
        %v1666 = vunpack.c.l.b16 %v527
        %v1667 = vunpack.c.h.b16 %v527
        %v1668 = vunpack.c.l.b16 %v528
        %v1669 = vunpack.c.h.b16 %v528
        %v1670 = vunpack.c.l.b16 %v529
        %v1671 = vunpack.c.h.b16 %v529
        %v1672 = vunpack.c.l.b16 %v530
        %v1673 = vunpack.c.h.b16 %v530
        %v1674 = vunpack.c.l.b16 %v531
        %v1675 = vunpack.c.h.b16 %v531
        %v1676 = vunpack.c.l.b16 %v532
        %v1677 = vunpack.c.h.b16 %v532
        %v1678 = vunpack.c.l.b16 %v533
        %v1679 = vunpack.c.h.b16 %v533
        %v1680 = vunpack.c.l.b16 %v534
        %v1681 = vunpack.c.h.b16 %v534
        %v1682 = vunpack.c.l.b16 %v535
        %v1683 = vunpack.c.h.b16 %v535
        %v1684 = vunpack.c.l.b16 %v536
        %v1685 = vunpack.c.h.b16 %v536
        %v1686 = vunpack.c.l.b16 %v537
        %v1687 = vunpack.c.h.b16 %v537
        %v1688 = vunpack.c.l.b16 %v538
        %v1689 = vunpack.c.h.b16 %v538
        %v1690 = vunpack.c.l.b16 %v539
        %v1691 = vunpack.c.h.b16 %v539
        %v1692 = vunpack.c.l.b16 %v540
        %v1693 = vunpack.c.h.b16 %v540
        %v1694 = vunpack.c.l.b16 %v541
        %v1695 = vunpack.c.h.b16 %v541
        %v1696 = vunpack.c.l.b16 %v542
        %v1697 = vunpack.c.h.b16 %v542
        %v1698 = vunpack.c.l.b16 %v543
        %v1699 = vunpack.c.h.b16 %v543
        %v1700 = vunpack.c.l.b16 %v544
        %v1701 = vunpack.c.h.b16 %v544
        %v1702 = vunpack.c.l.b16 %v545
        %v1703 = vunpack.c.h.b16 %v545
        %v1704 = vunpack.c.l.b16 %v546
        %v1705 = vunpack.c.h.b16 %v546
        %v1706 = vunpack.c.l.b16 %v547
        %v1707 = vunpack.c.h.b16 %v547
        %v1708 = vunpack.c.l.b16 %v548
        %v1709 = vunpack.c.h.b16 %v548
        %v1710 = vunpack.c.l.b16 %v549
        %v1711 = vunpack.c.h.b16 %v549
        %v1712 = vunpack.c.l.b16 %v550
        %v1713 = vunpack.c.h.b16 %v550
        %v1714 = vunpack.c.l.b16 %v551
        %v1715 = vunpack.c.h.b16 %v551
        %v1716 = vunpack.c.l.b16 %v552
        %v1717 = vunpack.c.h.b16 %v552
        %v1718 = vunpack.c.l.b16 %v553
        %v1719 = vunpack.c.h.b16 %v553
        %v1720 = vunpack.c.l.b16 %v554
        %v1721 = vunpack.c.h.b16 %v554
        %v1722 = vunpack.c.l.b16 %v555
        %v1723 = vunpack.c.h.b16 %v555
        %v1724 = vunpack.c.l.b16 %v556
        %v1725 = vunpack.c.h.b16 %v556
        %v1726 = vunpack.c.l.b16 %v557
        %v1727 = vunpack.c.h.b16 %v557
        %v1728 = vunpack.c.l.b16 %v558
        %v1729 = vunpack.c.h.b16 %v558
        %v1730 = vunpack.c.l.b16 %v559
        %v1731 = vunpack.c.h.b16 %v559
        %v1732 = vunpack.c.l.b16 %v560
        %v1733 = vunpack.c.h.b16 %v560
        %v1734 = vunpack.c.l.b16 %v561
        %v1735 = vunpack.c.h.b16 %v561
        %v1736 = vunpack.c.l.b16 %v562
        %v1737 = vunpack.c.h.b16 %v562
        %v1738 = vunpack.c.l.b16 %v563
        %v1739 = vunpack.c.h.b16 %v563
        %v1740 = vunpack.c.l.b16 %v564
        %v1741 = vunpack.c.h.b16 %v564
        %v1742 = vunpack.c.l.b16 %v565
        %v1743 = vunpack.c.h.b16 %v565
        %v1744 = vunpack.c.l.b16 %v566
        %v1745 = vunpack.c.h.b16 %v566
        %v1746 = vunpack.c.l.b16 %v567
        %v1747 = vunpack.c.h.b16 %v567
        %v1748 = vunpack.c.l.b16 %v568
        %v1749 = vunpack.c.h.b16 %v568
        %v1750 = vunpack.c.l.b16 %v569
        %v1751 = vunpack.c.h.b16 %v569
        %v1752 = vunpack.c.l.b16 %v570
        %v1753 = vunpack.c.h.b16 %v570
        %v1754 = vunpack.c.l.b16 %v571
        %v1755 = vunpack.c.h.b16 %v571
        %v1756 = vunpack.c.l.b16 %v572
        %v1757 = vunpack.c.h.b16 %v572
        %v1758 = vunpack.c.l.b16 %v573
        %v1759 = vunpack.c.h.b16 %v573
        %v1760 = vunpack.c.l.b16 %v574
        %v1761 = vunpack.c.h.b16 %v574
        %v1762 = vunpack.c.l.b16 %v575
        %v1763 = vunpack.c.h.b16 %v575
        %v1764 = vunpack.c.l.b16 %v576
        %v1765 = vunpack.c.h.b16 %v576
        %v1766 = vunpack.c.l.b16 %v577
        %v1767 = vunpack.c.h.b16 %v577
        %v1768 = vunpack.c.l.b16 %v578
        %v1769 = vunpack.c.h.b16 %v578
        %v1770 = vunpack.c.l.b16 %v579
        %v1771 = vunpack.c.h.b16 %v579
        %v1772 = vunpack.c.l.b16 %v580
        %v1773 = vunpack.c.h.b16 %v580
        %v1774 = vunpack.c.l.b16 %v581
        %v1775 = vunpack.c.h.b16 %v581
        %v1776 = vunpack.c.l.b16 %v582
        %v1777 = vunpack.c.h.b16 %v582
        %v1778 = vunpack.c.l.b16 %v583
        %v1779 = vunpack.c.h.b16 %v583
        %v1780 = vunpack.c.l.b16 %v584
        %v1781 = vunpack.c.h.b16 %v584
        %v1782 = vunpack.c.l.b16 %v585
        %v1783 = vunpack.c.h.b16 %v585
        %v1784 = vunpack.c.l.b16 %v586
        %v1785 = vunpack.c.h.b16 %v586
        %v1786 = vunpack.c.l.b16 %v587
        %v1787 = vunpack.c.h.b16 %v587
        %v1788 = vunpack.c.l.b16 %v588
        %v1789 = vunpack.c.h.b16 %v588
        %v1790 = vunpack.c.l.b16 %v589
        %v1791 = vunpack.c.h.b16 %v589
        %v1792 = vunpack.c.l.b16 %v590
        %v1793 = vunpack.c.h.b16 %v590
        %v1794 = vunpack.c.l.b16 %v591
        %v1795 = vunpack.c.h.b16 %v591
        %v1796 = vunpack.c.l.b16 %v592
        %v1797 = vunpack.c.h.b16 %v592
        %v1798 = vunpack.c.l.b16 %v593
        %v1799 = vunpack.c.h.b16 %v593
        %v1800 = vunpack.c.l.b16 %v594
        %v1801 = vunpack.c.h.b16 %v594
        %v1802 = vunpack.c.l.b16 %v595
        %v1803 = vunpack.c.h.b16 %v595
        %v1804 = vunpack.c.l.b16 %v596
        %v1805 = vunpack.c.h.b16 %v596
        %v1806 = vunpack.c.l.b16 %v597
        %v1807 = vunpack.c.h.b16 %v597
        %v1808 = vunpack.c.l.b16 %v598
        %v1809 = vunpack.c.h.b16 %v598
        %v1810 = vunpack.c.l.b16 %v599
        %v1811 = vunpack.c.h.b16 %v599
        %v1812 = vunpack.c.l.b16 %v600
        %v1813 = vunpack.c.h.b16 %v600
        %v1814 = vunpack.c.l.b16 %v601
        %v1815 = vunpack.c.h.b16 %v601
        %v1816 = vunpack.c.l.b16 %v602
        %v1817 = vunpack.c.h.b16 %v602
        %v1818 = vunpack.c.l.b16 %v603
        %v1819 = vunpack.c.h.b16 %v603
        %v1820 = vunpack.c.l.b16 %v604
        %v1821 = vunpack.c.h.b16 %v604
        %v1822 = vunpack.c.l.b16 %v605
        %v1823 = vunpack.c.h.b16 %v605
        %v1824 = vunpack.c.l.b16 %v606
        %v1825 = vunpack.c.h.b16 %v606
        %v1826 = vunpack.c.l.b16 %v607
        %v1827 = vunpack.c.h.b16 %v607
        %v1828 = vunpack.c.l.b16 %v608
        %v1829 = vunpack.c.h.b16 %v608
        %v1830 = vunpack.c.l.b16 %v609
        %v1831 = vunpack.c.h.b16 %v609
        %v1832 = vunpack.c.l.b16 %v610
        %v1833 = vunpack.c.h.b16 %v610
        %v1834 = vunpack.c.l.b16 %v611
        %v1835 = vunpack.c.h.b16 %v611
        %v1836 = vunpack.c.l.b16 %v612
        %v1837 = vunpack.c.h.b16 %v612
        %v1838 = vunpack.c.l.b16 %v613
        %v1839 = vunpack.c.h.b16 %v613
        %v1840 = vunpack.c.l.b16 %v614
        %v1841 = vunpack.c.h.b16 %v614
        %v1842 = vunpack.c.l.b16 %v615
        %v1843 = vunpack.c.h.b16 %v615
        %v1844 = vunpack.c.l.b16 %v616
        %v1845 = vunpack.c.h.b16 %v616
        %v1846 = vunpack.c.l.b16 %v617
        %v1847 = vunpack.c.h.b16 %v617
        %v1848 = vunpack.c.l.b16 %v618
        %v1849 = vunpack.c.h.b16 %v618
        %v1850 = vunpack.c.l.b16 %v619
        %v1851 = vunpack.c.h.b16 %v619
        %v1852 = vunpack.c.l.b16 %v620
        %v1853 = vunpack.c.h.b16 %v620
        %v1854 = vunpack.c.l.b16 %v621
        %v1855 = vunpack.c.h.b16 %v621
        %v1856 = vunpack.c.l.b16 %v622
        %v1857 = vunpack.c.h.b16 %v622
        %v1858 = vunpack.c.l.b16 %v623
        %v1859 = vunpack.c.h.b16 %v623
        %v1860 = vunpack.c.l.b16 %v624
        %v1861 = vunpack.c.h.b16 %v624
        %v1862 = vunpack.c.l.b16 %v625
        %v1863 = vunpack.c.h.b16 %v625
        %v1864 = vunpack.c.l.b16 %v626
        %v1865 = vunpack.c.h.b16 %v626
        %v1866 = vunpack.c.l.b16 %v627
        %v1867 = vunpack.c.h.b16 %v627
        %v1868 = vunpack.c.l.b16 %v628
        %v1869 = vunpack.c.h.b16 %v628
        %v1870 = vunpack.c.l.b16 %v629
        %v1871 = vunpack.c.h.b16 %v629
        %v1872 = vunpack.c.l.b16 %v630
        %v1873 = vunpack.c.h.b16 %v630
        %v1874 = vunpack.c.l.b16 %v631
        %v1875 = vunpack.c.h.b16 %v631
        %v1876 = vunpack.c.l.b16 %v632
        %v1877 = vunpack.c.h.b16 %v632
        %v1878 = vunpack.c.l.b16 %v633
        %v1879 = vunpack.c.h.b16 %v633
        %v1880 = vunpack.c.l.b16 %v634
        %v1881 = vunpack.c.h.b16 %v634
        %v1882 = vunpack.c.l.b16 %v635
        %v1883 = vunpack.c.h.b16 %v635
        %v1884 = vunpack.c.l.b16 %v636
        %v1885 = vunpack.c.h.b16 %v636
        %v1886 = vunpack.c.l.b16 %v637
        %v1887 = vunpack.c.h.b16 %v637
        %v1888 = vunpack.c.l.b16 %v638
        %v1889 = vunpack.c.h.b16 %v638
        %v1890 = vunpack.c.l.b16 %v639
        %v1891 = vunpack.c.h.b16 %v639
        %v1892 = vunpack.c.l.b16 %v640
        %v1893 = vunpack.c.h.b16 %v640
        %v1894 = vunpack.c.l.b16 %v641
        %v1895 = vunpack.c.h.b16 %v641
        %v1896 = vunpack.c.l.b16 %v642
        %v1897 = vunpack.c.h.b16 %v642
        %v1898 = vunpack.c.l.b16 %v643
        %v1899 = vunpack.c.h.b16 %v643
        %v1900 = vunpack.c.l.b16 %v644
        %v1901 = vunpack.c.h.b16 %v644
        %v1902 = vunpack.c.l.b16 %v645
        %v1903 = vunpack.c.h.b16 %v645
        %v1904 = vunpack.c.l.b16 %v646
        %v1905 = vunpack.c.h.b16 %v646
        %v1906 = vunpack.c.l.b16 %v647
        %v1907 = vunpack.c.h.b16 %v647
        %v1908 = vunpack.c.l.b16 %v648
        %v1909 = vunpack.c.h.b16 %v648
        %v1910 = vunpack.c.l.b16 %v649
        %v1911 = vunpack.c.h.b16 %v649
        %v1912 = vunpack.c.l.b16 %v650
        %v1913 = vunpack.c.h.b16 %v650
        %v1914 = vunpack.c.l.b16 %v651
        %v1915 = vunpack.c.h.b16 %v651
        %v1916 = vunpack.c.l.b16 %v652
        %v1917 = vunpack.c.h.b16 %v652
        %v1918 = vunpack.c.l.b16 %v653
        %v1919 = vunpack.c.h.b16 %v653
        %v1920 = vunpack.c.l.b16 %v654
        %v1921 = vunpack.c.h.b16 %v654
        %v1922 = vunpack.c.l.b16 %v655
        %v1923 = vunpack.c.h.b16 %v655
        %v1924 = vunpack.c.l.b16 %v656
        %v1925 = vunpack.c.h.b16 %v656
        %v1926 = vunpack.c.l.b16 %v657
        %v1927 = vunpack.c.h.b16 %v657
        %v1928 = vunpack.c.l.b16 %v658
        %v1929 = vunpack.c.h.b16 %v658
        %v1930 = vunpack.c.l.b16 %v659
        %v1931 = vunpack.c.h.b16 %v659
        %v1932 = vunpack.c.l.b16 %v660
        %v1933 = vunpack.c.h.b16 %v660
        %v1934 = vunpack.c.l.b16 %v661
        %v1935 = vunpack.c.h.b16 %v661
        %v1936 = vunpack.c.l.b16 %v662
        %v1937 = vunpack.c.h.b16 %v662
        %v1938 = vunpack.c.l.b16 %v663
        %v1939 = vunpack.c.h.b16 %v663
        %v1940 = vunpack.c.l.b16 %v664
        %v1941 = vunpack.c.h.b16 %v664
        %v1942 = vunpack.c.l.b16 %v665
        %v1943 = vunpack.c.h.b16 %v665
        %v1944 = vunpack.c.l.b16 %v666
        %v1945 = vunpack.c.h.b16 %v666
        %v1946 = vunpack.c.l.b16 %v667
        %v1947 = vunpack.c.h.b16 %v667
        %v1948 = vunpack.c.l.b16 %v668
        %v1949 = vunpack.c.h.b16 %v668
        %v1950 = vunpack.c.l.b16 %v669
        %v1951 = vunpack.c.h.b16 %v669
        %v1952 = vunpack.c.l.b16 %v670
        %v1953 = vunpack.c.h.b16 %v670
        %v1954 = vunpack.c.l.b16 %v671
        %v1955 = vunpack.c.h.b16 %v671
        %v1956 = vunpack.c.l.b16 %v672
        %v1957 = vunpack.c.h.b16 %v672
        %v1958 = vunpack.c.l.b16 %v673
        %v1959 = vunpack.c.h.b16 %v673
        %v1960 = vunpack.c.l.b16 %v674
        %v1961 = vunpack.c.h.b16 %v674
        %v1962 = vunpack.c.l.b16 %v675
        %v1963 = vunpack.c.h.b16 %v675
        %v1964 = vunpack.c.l.b16 %v676
        %v1965 = vunpack.c.h.b16 %v676
        %v1966 = vunpack.c.l.b16 %v677
        %v1967 = vunpack.c.h.b16 %v677
        %v1968 = vunpack.c.l.b16 %v678
        %v1969 = vunpack.c.h.b16 %v678
        %v1970 = vunpack.c.l.b16 %v679
        %v1971 = vunpack.c.h.b16 %v679
        %v1972 = vunpack.c.l.b16 %v680
        %v1973 = vunpack.c.h.b16 %v680
        %v1974 = vunpack.c.l.b16 %v681
        %v1975 = vunpack.c.h.b16 %v681
        %v1976 = vunpack.c.l.b16 %v682
        %v1977 = vunpack.c.h.b16 %v682
        %v1978 = vunpack.c.l.b16 %v683
        %v1979 = vunpack.c.h.b16 %v683
        %v1980 = vunpack.c.l.b16 %v684
        %v1981 = vunpack.c.h.b16 %v684
        %v1982 = vunpack.c.l.b16 %v685
        %v1983 = vunpack.c.h.b16 %v685
        %v1984 = vunpack.c.l.b16 %v686
        %v1985 = vunpack.c.h.b16 %v686
        %v1986 = vunpack.c.l.b16 %v687
        %v1987 = vunpack.c.h.b16 %v687
        %v1988 = vunpack.c.l.b16 %v688
        %v1989 = vunpack.c.h.b16 %v688
        %v1990 = vunpack.c.l.b16 %v689
        %v1991 = vunpack.c.h.b16 %v689
        %v1992 = vunpack.c.l.b16 %v690
        %v1993 = vunpack.c.h.b16 %v690
        %v1994 = vunpack.c.l.b16 %v691
        %v1995 = vunpack.c.h.b16 %v691
        %v1996 = vunpack.c.l.b16 %v692
        %v1997 = vunpack.c.h.b16 %v692
        %v1998 = vunpack.c.l.b16 %v693
        %v1999 = vunpack.c.h.b16 %v693
        %v2000 = vunpack.c.l.b16 %v694
        %v2001 = vunpack.c.h.b16 %v694
        %v2002 = vunpack.c.l.b16 %v695
        %v2003 = vunpack.c.h.b16 %v695
        %v2004 = vunpack.c.l.b16 %v696
        %v2005 = vunpack.c.h.b16 %v696
        %v2006 = vunpack.c.l.b16 %v697
        %v2007 = vunpack.c.h.b16 %v697
        %v2008 = vunpack.c.l.b16 %v698
        %v2009 = vunpack.c.h.b16 %v698
        %v2010 = vunpack.c.l.b16 %v699
        %v2011 = vunpack.c.h.b16 %v699
        %v2012 = vunpack.c.l.b16 %v700
        %v2013 = vunpack.c.h.b16 %v700
        %v2014 = vunpack.c.l.b16 %v701
        %v2015 = vunpack.c.h.b16 %v701
        %v2016 = vunpack.c.l.b16 %v702
        %v2017 = vunpack.c.h.b16 %v702
        %v2018 = vunpack.c.l.b16 %v703
        %v2019 = vunpack.c.h.b16 %v703
        %v2020 = vunpack.c.l.b16 %v704
        %v2021 = vunpack.c.h.b16 %v704
        %v2022 = vunpack.c.l.b16 %v705
        %v2023 = vunpack.c.h.b16 %v705
        %v2024 = vunpack.c.l.b16 %v706
        %v2025 = vunpack.c.h.b16 %v706
        %v2026 = vunpack.c.l.b16 %v707
        %v2027 = vunpack.c.h.b16 %v707
        %v2028 = vunpack.c.l.b16 %v708
        %v2029 = vunpack.c.h.b16 %v708
        %v2030 = vunpack.c.l.b16 %v709
        %v2031 = vunpack.c.h.b16 %v709
        %v2032 = vunpack.c.l.b16 %v710
        %v2033 = vunpack.c.h.b16 %v710
        %v2034 = vunpack.c.l.b16 %v711
        %v2035 = vunpack.c.h.b16 %v711
        %v2036 = vunpack.c.l.b16 %v712
        %v2037 = vunpack.c.h.b16 %v712
        %v2038 = vunpack.c.l.b16 %v713
        %v2039 = vunpack.c.h.b16 %v713
        %v2040 = vunpack.c.l.b16 %v714
        %v2041 = vunpack.c.h.b16 %v714
        %v2042 = vunpack.c.l.b16 %v715
        %v2043 = vunpack.c.h.b16 %v715
        %v2044 = vunpack.c.l.b16 %v716
        %v2045 = vunpack.c.h.b16 %v716
        %v2046 = vunpack.c.l.b16 %v717
        %v2047 = vunpack.c.h.b16 %v717
        %v2048 = vunpack.c.l.b16 %v718
        %v2049 = vunpack.c.h.b16 %v718
        %v2050 = vunpack.c.l.b16 %v719
        %v2051 = vunpack.c.h.b16 %v719
        %v2052 = vunpack.c.l.b16 %v720
        %v2053 = vunpack.c.h.b16 %v720
        %v2054 = vunpack.c.l.b16 %v721
        %v2055 = vunpack.c.h.b16 %v721
        %v2056 = vunpack.c.l.b16 %v722
        %v2057 = vunpack.c.h.b16 %v722
        %v2058 = vunpack.c.l.b16 %v723
        %v2059 = vunpack.c.h.b16 %v723
        %v2060 = vunpack.c.l.b16 %v724
        %v2061 = vunpack.c.h.b16 %v724
        %v2062 = vunpack.c.l.b16 %v725
        %v2063 = vunpack.c.h.b16 %v725
        %v2064 = vunpack.c.l.b16 %v726
        %v2065 = vunpack.c.h.b16 %v726
        %v2066 = vunpack.c.l.b16 %v727
        %v2067 = vunpack.c.h.b16 %v727
        %v2068 = vunpack.c.l.b16 %v728
        %v2069 = vunpack.c.h.b16 %v728
        %v2070 = vunpack.c.l.b16 %v729
        %v2071 = vunpack.c.h.b16 %v729
        %v2072 = vunpack.c.l.b16 %v730
        %v2073 = vunpack.c.h.b16 %v730
        %v2074 = vunpack.c.l.b16 %v731
        %v2075 = vunpack.c.h.b16 %v731
        %v2076 = vunpack.c.l.b16 %v732
        %v2077 = vunpack.c.h.b16 %v732
        %v2078 = vunpack.c.l.b16 %v733
        %v2079 = vunpack.c.h.b16 %v733
        %v2080 = vunpack.c.l.b16 %v734
        %v2081 = vunpack.c.h.b16 %v734
        %v2082 = vunpack.c.l.b16 %v735
        %v2083 = vunpack.c.h.b16 %v735
        %v2084 = vunpack.c.l.b16 %v736
        %v2085 = vunpack.c.h.b16 %v736
        %v2086 = vunpack.c.l.b16 %v737
        %v2087 = vunpack.c.h.b16 %v737
        %v2088 = vunpack.c.l.b16 %v738
        %v2089 = vunpack.c.h.b16 %v738
        %v2090 = vunpack.c.l.b16 %v739
        %v2091 = vunpack.c.h.b16 %v739
        %v2092 = vunpack.c.l.b16 %v740
        %v2093 = vunpack.c.h.b16 %v740
        %v2094 = vunpack.c.l.b16 %v741
        %v2095 = vunpack.c.h.b16 %v741
        %v2096 = vunpack.c.l.b16 %v742
        %v2097 = vunpack.c.h.b16 %v742
        %v2098 = vunpack.c.l.b16 %v743
        %v2099 = vunpack.c.h.b16 %v743
        %v2100 = vunpack.c.l.b16 %v744
        %v2101 = vunpack.c.h.b16 %v744
        %v2102 = vunpack.c.l.b16 %v745
        %v2103 = vunpack.c.h.b16 %v745
        %v2104 = vunpack.c.l.b16 %v746
        %v2105 = vunpack.c.h.b16 %v746
        %v2106 = vunpack.c.l.b16 %v747
        %v2107 = vunpack.c.h.b16 %v747
        %v2108 = vunpack.c.l.b16 %v748
        %v2109 = vunpack.c.h.b16 %v748
        %v2110 = vunpack.c.l.b16 %v749
        %v2111 = vunpack.c.h.b16 %v749
        %v2112 = vunpack.c.l.b16 %v750
        %v2113 = vunpack.c.h.b16 %v750
        %v2114 = vunpack.c.l.b16 %v751
        %v2115 = vunpack.c.h.b16 %v751
        %v2116 = vunpack.c.l.b16 %v752
        %v2117 = vunpack.c.h.b16 %v752
        %v2118 = vunpack.c.l.b16 %v753
        %v2119 = vunpack.c.h.b16 %v753
        %v2120 = vunpack.c.l.b16 %v754
        %v2121 = vunpack.c.h.b16 %v754
        %v2122 = vunpack.c.l.b16 %v755
        %v2123 = vunpack.c.h.b16 %v755
        %v2124 = vunpack.c.l.b16 %v756
        %v2125 = vunpack.c.h.b16 %v756
        %v2126 = vunpack.c.l.b16 %v757
        %v2127 = vunpack.c.h.b16 %v757
        %v2128 = vunpack.c.l.b16 %v758
        %v2129 = vunpack.c.h.b16 %v758
        %v2130 = vunpack.c.l.b16 %v759
        %v2131 = vunpack.c.h.b16 %v759
        %v2132 = vunpack.c.l.b16 %v760
        %v2133 = vunpack.c.h.b16 %v760
        %v2134 = vunpack.c.l.b16 %v761
        %v2135 = vunpack.c.h.b16 %v761
        %v2136 = vunpack.c.l.b16 %v762
        %v2137 = vunpack.c.h.b16 %v762
        %v2138 = vunpack.c.l.b16 %v763
        %v2139 = vunpack.c.h.b16 %v763
        %v2140 = vunpack.c.l.b16 %v764
        %v2141 = vunpack.c.h.b16 %v764
        %v2142 = vunpack.c.l.b16 %v765
        %v2143 = vunpack.c.h.b16 %v765
        %v2144 = vunpack.c.l.b16 %v766
        %v2145 = vunpack.c.h.b16 %v766
        %v2146 = vunpack.c.l.b16 %v767
        %v2147 = vunpack.c.h.b16 %v767
        %v2148 = vunpack.c.l.b16 %v768
        %v2149 = vunpack.c.h.b16 %v768
        %v2150 = vunpack.c.l.b16 %v769
        %v2151 = vunpack.c.h.b16 %v769
        %v2152 = vunpack.c.l.b16 %v770
        %v2153 = vunpack.c.h.b16 %v770
        %v2154 = vunpack.c.l.b16 %v771
        %v2155 = vunpack.c.h.b16 %v771
        %v2156 = vunpack.c.l.b16 %v772
        %v2157 = vunpack.c.h.b16 %v772
        %v2158 = vunpack.c.l.b16 %v773
        %v2159 = vunpack.c.h.b16 %v773
        %v2160 = vunpack.c.l.b16 %v774
        %v2161 = vunpack.c.h.b16 %v774
        %v2162 = vunpack.c.l.b16 %v775
        %v2163 = vunpack.c.h.b16 %v775
        %v2164 = vunpack.c.l.b16 %v776
        %v2165 = vunpack.c.h.b16 %v776
        %v2166 = vunpack.c.l.b16 %v777
        %v2167 = vunpack.c.h.b16 %v777
        %v2168 = vunpack.c.l.b16 %v778
        %v2169 = vunpack.c.h.b16 %v778
        %v2170 = vunpack.c.l.b16 %v779
        %v2171 = vunpack.c.h.b16 %v779
        %v2172 = vunpack.c.l.b16 %v780
        %v2173 = vunpack.c.h.b16 %v780
        %v2174 = vunpack.c.l.b16 %v781
        %v2175 = vunpack.c.h.b16 %v781
        %v2176 = vunpack.c.l.b16 %v782
        %v2177 = vunpack.c.h.b16 %v782
        %v2178 = vunpack.c.l.b16 %v783
        %v2179 = vunpack.c.h.b16 %v783
        %v2180 = vunpack.c.l.b16 %v784
        %v2181 = vunpack.c.h.b16 %v784
        %v2182 = vunpack.c.l.b16 %v785
        %v2183 = vunpack.c.h.b16 %v785
        %v2184 = vunpack.c.l.b16 %v786
        %v2185 = vunpack.c.h.b16 %v786
        %v2186 = vunpack.c.l.b16 %v787
        %v2187 = vunpack.c.h.b16 %v787
        %v2188 = vpack.c.b16 %v1300, %v1292
        %v2189 = vpack.c.b16 %v1301, %v1293
        %v2190 = vpack.c.b16 %v1302, %v1294
        %v2191 = vpack.c.b16 %v1303, %v1295
        %v2192 = vpack.c.b16 %v1304, %v1296
        %v2193 = vpack.c.b16 %v1305, %v1297
        %v2194 = vpack.c.b16 %v1306, %v1298
        %v2195 = vpack.c.b16 %v1307, %v1299
        %v2196 = vpack.c.b16 %v1316, %v1308
        %v2197 = vpack.c.b16 %v1317, %v1309
        %v2198 = vpack.c.b16 %v1318, %v1310
        %v2199 = vpack.c.b16 %v1319, %v1311
        %v2200 = vpack.c.b16 %v1320, %v1312
        %v2201 = vpack.c.b16 %v1321, %v1313
        %v2202 = vpack.c.b16 %v1322, %v1314
        %v2203 = vpack.c.b16 %v1323, %v1315
        %v2204 = vpack.c.b16 %v1332, %v1324
        %v2205 = vpack.c.b16 %v1333, %v1325
        %v2206 = vpack.c.b16 %v1334, %v1326
        %v2207 = vpack.c.b16 %v1335, %v1327
        %v2208 = vpack.c.b16 %v1336, %v1328
        %v2209 = vpack.c.b16 %v1337, %v1329
        %v2210 = vpack.c.b16 %v1338, %v1330
        %v2211 = vpack.c.b16 %v1339, %v1331
        %v2212 = vpack.c.b16 %v1348, %v1340
        %v2213 = vpack.c.b16 %v1349, %v1341
        %v2214 = vpack.c.b16 %v1350, %v1342
        %v2215 = vpack.c.b16 %v1351, %v1343
        %v2216 = vpack.c.b16 %v1352, %v1344
        %v2217 = vpack.c.b16 %v1353, %v1345
        %v2218 = vpack.c.b16 %v1354, %v1346
        %v2219 = vpack.c.b16 %v1355, %v1347
        %v2220 = vpack.c.b16 %v1364, %v1356
        %v2221 = vpack.c.b16 %v1365, %v1357
        %v2222 = vpack.c.b16 %v1366, %v1358
        %v2223 = vpack.c.b16 %v1367, %v1359
        %v2224 = vpack.c.b16 %v1368, %v1360
        %v2225 = vpack.c.b16 %v1369, %v1361
        %v2226 = vpack.c.b16 %v1370, %v1362
        %v2227 = vpack.c.b16 %v1371, %v1363
        %v2228 = vpack.c.b16 %v1380, %v1372
        %v2229 = vpack.c.b16 %v1381, %v1373
        %v2230 = vpack.c.b16 %v1382, %v1374
        %v2231 = vpack.c.b16 %v1383, %v1375
        %v2232 = vpack.c.b16 %v1384, %v1376
        %v2233 = vpack.c.b16 %v1385, %v1377
        %v2234 = vpack.c.b16 %v1386, %v1378
        %v2235 = vpack.c.b16 %v1387, %v1379
        %v2236 = vpack.c.b16 %v1396, %v1388
        %v2237 = vpack.c.b16 %v1397, %v1389
        %v2238 = vpack.c.b16 %v1398, %v1390
        %v2239 = vpack.c.b16 %v1399, %v1391
        %v2240 = vpack.c.b16 %v1400, %v1392
        %v2241 = vpack.c.b16 %v1401, %v1393
        %v2242 = vpack.c.b16 %v1402, %v1394
        %v2243 = vpack.c.b16 %v1403, %v1395
        %v2244 = vpack.c.b16 %v1412, %v1404
        %v2245 = vpack.c.b16 %v1413, %v1405
        %v2246 = vpack.c.b16 %v1414, %v1406
        %v2247 = vpack.c.b16 %v1415, %v1407
        %v2248 = vpack.c.b16 %v1416, %v1408
        %v2249 = vpack.c.b16 %v1417, %v1409
        %v2250 = vpack.c.b16 %v1418, %v1410
        %v2251 = vpack.c.b16 %v1419, %v1411
        %v2252 = vpack.c.b16 %v1428, %v1420
        %v2253 = vpack.c.b16 %v1429, %v1421
        %v2254 = vpack.c.b16 %v1430, %v1422
        %v2255 = vpack.c.b16 %v1431, %v1423
        %v2256 = vpack.c.b16 %v1432, %v1424
        %v2257 = vpack.c.b16 %v1433, %v1425
        %v2258 = vpack.c.b16 %v1434, %v1426
        %v2259 = vpack.c.b16 %v1435, %v1427
        %v2260 = vpack.c.b16 %v1444, %v1436
        %v2261 = vpack.c.b16 %v1445, %v1437
        %v2262 = vpack.c.b16 %v1446, %v1438
        %v2263 = vpack.c.b16 %v1447, %v1439
        %v2264 = vpack.c.b16 %v1448, %v1440
        %v2265 = vpack.c.b16 %v1449, %v1441
        %v2266 = vpack.c.b16 %v1450, %v1442
        %v2267 = vpack.c.b16 %v1451, %v1443
        %v2268 = vpack.c.b16 %v1460, %v1452
        %v2269 = vpack.c.b16 %v1461, %v1453
        %v2270 = vpack.c.b16 %v1462, %v1454
        %v2271 = vpack.c.b16 %v1463, %v1455
        %v2272 = vpack.c.b16 %v1464, %v1456
        %v2273 = vpack.c.b16 %v1465, %v1457
        %v2274 = vpack.c.b16 %v1466, %v1458
        %v2275 = vpack.c.b16 %v1467, %v1459
        %v2276 = vpack.c.b16 %v1476, %v1468
        %v2277 = vpack.c.b16 %v1477, %v1469
        %v2278 = vpack.c.b16 %v1478, %v1470
        %v2279 = vpack.c.b16 %v1479, %v1471
        %v2280 = vpack.c.b16 %v1480, %v1472
        %v2281 = vpack.c.b16 %v1481, %v1473
        %v2282 = vpack.c.b16 %v1482, %v1474
        %v2283 = vpack.c.b16 %v1483, %v1475
        %v2284 = vpack.c.b16 %v1492, %v1484
        %v2285 = vpack.c.b16 %v1493, %v1485
        %v2286 = vpack.c.b16 %v1494, %v1486
        %v2287 = vpack.c.b16 %v1495, %v1487
        %v2288 = vpack.c.b16 %v1496, %v1488
        %v2289 = vpack.c.b16 %v1497, %v1489
        %v2290 = vpack.c.b16 %v1498, %v1490
        %v2291 = vpack.c.b16 %v1499, %v1491
        %v2292 = vpack.c.b16 %v1508, %v1500
        %v2293 = vpack.c.b16 %v1509, %v1501
        %v2294 = vpack.c.b16 %v1510, %v1502
        %v2295 = vpack.c.b16 %v1511, %v1503
        %v2296 = vpack.c.b16 %v1512, %v1504
        %v2297 = vpack.c.b16 %v1513, %v1505
        %v2298 = vpack.c.b16 %v1514, %v1506
        %v2299 = vpack.c.b16 %v1515, %v1507
        %v2300 = vpack.c.b16 %v1524, %v1516
        %v2301 = vpack.c.b16 %v1525, %v1517
        %v2302 = vpack.c.b16 %v1526, %v1518
        %v2303 = vpack.c.b16 %v1527, %v1519
        %v2304 = vpack.c.b16 %v1528, %v1520
        %v2305 = vpack.c.b16 %v1529, %v1521
        %v2306 = vpack.c.b16 %v1530, %v1522
        %v2307 = vpack.c.b16 %v1531, %v1523
        %v2308 = vpack.c.b16 %v1540, %v1532
        %v2309 = vpack.c.b16 %v1541, %v1533
        %v2310 = vpack.c.b16 %v1542, %v1534
        %v2311 = vpack.c.b16 %v1543, %v1535
        %v2312 = vpack.c.b16 %v1544, %v1536
        %v2313 = vpack.c.b16 %v1545, %v1537
        %v2314 = vpack.c.b16 %v1546, %v1538
        %v2315 = vpack.c.b16 %v1547, %v1539
        %v2316 = vpack.c.b16 %v1556, %v1548
        %v2317 = vpack.c.b16 %v1557, %v1549
        %v2318 = vpack.c.b16 %v1558, %v1550
        %v2319 = vpack.c.b16 %v1559, %v1551
        %v2320 = vpack.c.b16 %v1560, %v1552
        %v2321 = vpack.c.b16 %v1561, %v1553
        %v2322 = vpack.c.b16 %v1562, %v1554
        %v2323 = vpack.c.b16 %v1563, %v1555
        %v2324 = vpack.c.b16 %v1572, %v1564
        %v2325 = vpack.c.b16 %v1573, %v1565
        %v2326 = vpack.c.b16 %v1574, %v1566
        %v2327 = vpack.c.b16 %v1575, %v1567
        %v2328 = vpack.c.b16 %v1576, %v1568
        %v2329 = vpack.c.b16 %v1577, %v1569
        %v2330 = vpack.c.b16 %v1578, %v1570
        %v2331 = vpack.c.b16 %v1579, %v1571
        %v2332 = vpack.c.b16 %v1588, %v1580
        %v2333 = vpack.c.b16 %v1589, %v1581
        %v2334 = vpack.c.b16 %v1590, %v1582
        %v2335 = vpack.c.b16 %v1591, %v1583
        %v2336 = vpack.c.b16 %v1592, %v1584
        %v2337 = vpack.c.b16 %v1593, %v1585
        %v2338 = vpack.c.b16 %v1594, %v1586
        %v2339 = vpack.c.b16 %v1595, %v1587
        %v2340 = vpack.c.b16 %v1604, %v1596
        %v2341 = vpack.c.b16 %v1605, %v1597
        %v2342 = vpack.c.b16 %v1606, %v1598
        %v2343 = vpack.c.b16 %v1607, %v1599
        %v2344 = vpack.c.b16 %v1608, %v1600
        %v2345 = vpack.c.b16 %v1609, %v1601
        %v2346 = vpack.c.b16 %v1610, %v1602
        %v2347 = vpack.c.b16 %v1611, %v1603
        %v2348 = vpack.c.b16 %v1620, %v1612
        %v2349 = vpack.c.b16 %v1621, %v1613
        %v2350 = vpack.c.b16 %v1622, %v1614
        %v2351 = vpack.c.b16 %v1623, %v1615
        %v2352 = vpack.c.b16 %v1624, %v1616
        %v2353 = vpack.c.b16 %v1625, %v1617
        %v2354 = vpack.c.b16 %v1626, %v1618
        %v2355 = vpack.c.b16 %v1627, %v1619
        %v2356 = vpack.c.b16 %v1636, %v1628
        %v2357 = vpack.c.b16 %v1637, %v1629
        %v2358 = vpack.c.b16 %v1638, %v1630
        %v2359 = vpack.c.b16 %v1639, %v1631
        %v2360 = vpack.c.b16 %v1640, %v1632
        %v2361 = vpack.c.b16 %v1641, %v1633
        %v2362 = vpack.c.b16 %v1642, %v1634
        %v2363 = vpack.c.b16 %v1643, %v1635
        %v2364 = vpack.c.b16 %v1652, %v1644
        %v2365 = vpack.c.b16 %v1653, %v1645
        %v2366 = vpack.c.b16 %v1654, %v1646
        %v2367 = vpack.c.b16 %v1655, %v1647
        %v2368 = vpack.c.b16 %v1656, %v1648
        %v2369 = vpack.c.b16 %v1657, %v1649
        %v2370 = vpack.c.b16 %v1658, %v1650
        %v2371 = vpack.c.b16 %v1659, %v1651
        %v2372 = vpack.c.b16 %v1668, %v1660
        %v2373 = vpack.c.b16 %v1669, %v1661
        %v2374 = vpack.c.b16 %v1670, %v1662
        %v2375 = vpack.c.b16 %v1671, %v1663
        %v2376 = vpack.c.b16 %v1672, %v1664
        %v2377 = vpack.c.b16 %v1673, %v1665
        %v2378 = vpack.c.b16 %v1674, %v1666
        %v2379 = vpack.c.b16 %v1675, %v1667
        %v2380 = vpack.c.b16 %v1684, %v1676
        %v2381 = vpack.c.b16 %v1685, %v1677
        %v2382 = vpack.c.b16 %v1686, %v1678
        %v2383 = vpack.c.b16 %v1687, %v1679
        %v2384 = vpack.c.b16 %v1688, %v1680
        %v2385 = vpack.c.b16 %v1689, %v1681
        %v2386 = vpack.c.b16 %v1690, %v1682
        %v2387 = vpack.c.b16 %v1691, %v1683
        %v2388 = vpack.c.b16 %v1700, %v1692
        %v2389 = vpack.c.b16 %v1701, %v1693
        %v2390 = vpack.c.b16 %v1702, %v1694
        %v2391 = vpack.c.b16 %v1703, %v1695
        %v2392 = vpack.c.b16 %v1704, %v1696
        %v2393 = vpack.c.b16 %v1705, %v1697
        %v2394 = vpack.c.b16 %v1706, %v1698
        %v2395 = vpack.c.b16 %v1707, %v1699
        %v2396 = vpack.c.b16 %v1716, %v1708
        %v2397 = vpack.c.b16 %v1717, %v1709
        %v2398 = vpack.c.b16 %v1718, %v1710
        %v2399 = vpack.c.b16 %v1719, %v1711
        %v2400 = vpack.c.b16 %v1720, %v1712
        %v2401 = vpack.c.b16 %v1721, %v1713
        %v2402 = vpack.c.b16 %v1722, %v1714
        %v2403 = vpack.c.b16 %v1723, %v1715
        %v2404 = vpack.c.b16 %v1732, %v1724
        %v2405 = vpack.c.b16 %v1733, %v1725
        %v2406 = vpack.c.b16 %v1734, %v1726
        %v2407 = vpack.c.b16 %v1735, %v1727
        %v2408 = vpack.c.b16 %v1736, %v1728
        %v2409 = vpack.c.b16 %v1737, %v1729
        %v2410 = vpack.c.b16 %v1738, %v1730
        %v2411 = vpack.c.b16 %v1739, %v1731
        %v2412 = vpack.c.b16 %v1748, %v1740
        %v2413 = vpack.c.b16 %v1749, %v1741
        %v2414 = vpack.c.b16 %v1750, %v1742
        %v2415 = vpack.c.b16 %v1751, %v1743
        %v2416 = vpack.c.b16 %v1752, %v1744
        %v2417 = vpack.c.b16 %v1753, %v1745
        %v2418 = vpack.c.b16 %v1754, %v1746
        %v2419 = vpack.c.b16 %v1755, %v1747
        %v2420 = vpack.c.b16 %v1764, %v1756
        %v2421 = vpack.c.b16 %v1765, %v1757
        %v2422 = vpack.c.b16 %v1766, %v1758
        %v2423 = vpack.c.b16 %v1767, %v1759
        %v2424 = vpack.c.b16 %v1768, %v1760
        %v2425 = vpack.c.b16 %v1769, %v1761
        %v2426 = vpack.c.b16 %v1770, %v1762
        %v2427 = vpack.c.b16 %v1771, %v1763
        %v2428 = vpack.c.b16 %v1780, %v1772
        %v2429 = vpack.c.b16 %v1781, %v1773
        %v2430 = vpack.c.b16 %v1782, %v1774
        %v2431 = vpack.c.b16 %v1783, %v1775
        %v2432 = vpack.c.b16 %v1784, %v1776
        %v2433 = vpack.c.b16 %v1785, %v1777
        %v2434 = vpack.c.b16 %v1786, %v1778
        %v2435 = vpack.c.b16 %v1787, %v1779
        %v2436 = vpack.c.b16 %v1796, %v1788
        %v2437 = vpack.c.b16 %v1797, %v1789
        %v2438 = vpack.c.b16 %v1798, %v1790
        %v2439 = vpack.c.b16 %v1799, %v1791
        %v2440 = vpack.c.b16 %v1800, %v1792
        %v2441 = vpack.c.b16 %v1801, %v1793
        %v2442 = vpack.c.b16 %v1802, %v1794
        %v2443 = vpack.c.b16 %v1803, %v1795
        %v2444 = vpack.c.b16 %v1812, %v1804
        %v2445 = vpack.c.b16 %v1813, %v1805
        %v2446 = vpack.c.b16 %v1814, %v1806
        %v2447 = vpack.c.b16 %v1815, %v1807
        %v2448 = vpack.c.b16 %v1816, %v1808
        %v2449 = vpack.c.b16 %v1817, %v1809
        %v2450 = vpack.c.b16 %v1818, %v1810
        %v2451 = vpack.c.b16 %v1819, %v1811
        %v2452 = vpack.c.b16 %v1828, %v1820
        %v2453 = vpack.c.b16 %v1829, %v1821
        %v2454 = vpack.c.b16 %v1830, %v1822
        %v2455 = vpack.c.b16 %v1831, %v1823
        %v2456 = vpack.c.b16 %v1832, %v1824
        %v2457 = vpack.c.b16 %v1833, %v1825
        %v2458 = vpack.c.b16 %v1834, %v1826
        %v2459 = vpack.c.b16 %v1835, %v1827
        %v2460 = vpack.c.b16 %v1844, %v1836
        %v2461 = vpack.c.b16 %v1845, %v1837
        %v2462 = vpack.c.b16 %v1846, %v1838
        %v2463 = vpack.c.b16 %v1847, %v1839
        %v2464 = vpack.c.b16 %v1848, %v1840
        %v2465 = vpack.c.b16 %v1849, %v1841
        %v2466 = vpack.c.b16 %v1850, %v1842
        %v2467 = vpack.c.b16 %v1851, %v1843
        %v2468 = vpack.c.b16 %v1860, %v1852
        %v2469 = vpack.c.b16 %v1861, %v1853
        %v2470 = vpack.c.b16 %v1862, %v1854
        %v2471 = vpack.c.b16 %v1863, %v1855
        %v2472 = vpack.c.b16 %v1864, %v1856
        %v2473 = vpack.c.b16 %v1865, %v1857
        %v2474 = vpack.c.b16 %v1866, %v1858
        %v2475 = vpack.c.b16 %v1867, %v1859
        %v2476 = vpack.c.b16 %v1876, %v1868
        %v2477 = vpack.c.b16 %v1877, %v1869
        %v2478 = vpack.c.b16 %v1878, %v1870
        %v2479 = vpack.c.b16 %v1879, %v1871
        %v2480 = vpack.c.b16 %v1880, %v1872
        %v2481 = vpack.c.b16 %v1881, %v1873
        %v2482 = vpack.c.b16 %v1882, %v1874
        %v2483 = vpack.c.b16 %v1883, %v1875
        %v2484 = vpack.c.b16 %v1892, %v1884
        %v2485 = vpack.c.b16 %v1893, %v1885
        %v2486 = vpack.c.b16 %v1894, %v1886
        %v2487 = vpack.c.b16 %v1895, %v1887
        %v2488 = vpack.c.b16 %v1896, %v1888
        %v2489 = vpack.c.b16 %v1897, %v1889
        %v2490 = vpack.c.b16 %v1898, %v1890
        %v2491 = vpack.c.b16 %v1899, %v1891
        %v2492 = vpack.c.b16 %v1908, %v1900
        %v2493 = vpack.c.b16 %v1909, %v1901
        %v2494 = vpack.c.b16 %v1910, %v1902
        %v2495 = vpack.c.b16 %v1911, %v1903
        %v2496 = vpack.c.b16 %v1912, %v1904
        %v2497 = vpack.c.b16 %v1913, %v1905
        %v2498 = vpack.c.b16 %v1914, %v1906
        %v2499 = vpack.c.b16 %v1915, %v1907
        %v2500 = vpack.c.b16 %v1924, %v1916
        %v2501 = vpack.c.b16 %v1925, %v1917
        %v2502 = vpack.c.b16 %v1926, %v1918
        %v2503 = vpack.c.b16 %v1927, %v1919
        %v2504 = vpack.c.b16 %v1928, %v1920
        %v2505 = vpack.c.b16 %v1929, %v1921
        %v2506 = vpack.c.b16 %v1930, %v1922
        %v2507 = vpack.c.b16 %v1931, %v1923
        %v2508 = vpack.c.b16 %v1940, %v1932
        %v2509 = vpack.c.b16 %v1941, %v1933
        %v2510 = vpack.c.b16 %v1942, %v1934
        %v2511 = vpack.c.b16 %v1943, %v1935
        %v2512 = vpack.c.b16 %v1944, %v1936
        %v2513 = vpack.c.b16 %v1945, %v1937
        %v2514 = vpack.c.b16 %v1946, %v1938
        %v2515 = vpack.c.b16 %v1947, %v1939
        %v2516 = vpack.c.b16 %v1956, %v1948
        %v2517 = vpack.c.b16 %v1957, %v1949
        %v2518 = vpack.c.b16 %v1958, %v1950
        %v2519 = vpack.c.b16 %v1959, %v1951
        %v2520 = vpack.c.b16 %v1960, %v1952
        %v2521 = vpack.c.b16 %v1961, %v1953
        %v2522 = vpack.c.b16 %v1962, %v1954
        %v2523 = vpack.c.b16 %v1963, %v1955
        %v2524 = vpack.c.b16 %v1972, %v1964
        %v2525 = vpack.c.b16 %v1973, %v1965
        %v2526 = vpack.c.b16 %v1974, %v1966
        %v2527 = vpack.c.b16 %v1975, %v1967
        %v2528 = vpack.c.b16 %v1976, %v1968
        %v2529 = vpack.c.b16 %v1977, %v1969
        %v2530 = vpack.c.b16 %v1978, %v1970
        %v2531 = vpack.c.b16 %v1979, %v1971
        %v2532 = vpack.c.b16 %v1988, %v1980
        %v2533 = vpack.c.b16 %v1989, %v1981
        %v2534 = vpack.c.b16 %v1990, %v1982
        %v2535 = vpack.c.b16 %v1991, %v1983
        %v2536 = vpack.c.b16 %v1992, %v1984
        %v2537 = vpack.c.b16 %v1993, %v1985
        %v2538 = vpack.c.b16 %v1994, %v1986
        %v2539 = vpack.c.b16 %v1995, %v1987
        %v2540 = vpack.c.b16 %v2004, %v1996
        %v2541 = vpack.c.b16 %v2005, %v1997
        %v2542 = vpack.c.b16 %v2006, %v1998
        %v2543 = vpack.c.b16 %v2007, %v1999
        %v2544 = vpack.c.b16 %v2008, %v2000
        %v2545 = vpack.c.b16 %v2009, %v2001
        %v2546 = vpack.c.b16 %v2010, %v2002
        %v2547 = vpack.c.b16 %v2011, %v2003
        %v2548 = vpack.c.b16 %v2020, %v2012
        %v2549 = vpack.c.b16 %v2021, %v2013
        %v2550 = vpack.c.b16 %v2022, %v2014
        %v2551 = vpack.c.b16 %v2023, %v2015
        %v2552 = vpack.c.b16 %v2024, %v2016
        %v2553 = vpack.c.b16 %v2025, %v2017
        %v2554 = vpack.c.b16 %v2026, %v2018
        %v2555 = vpack.c.b16 %v2027, %v2019
        %v2556 = vpack.c.b16 %v2036, %v2028
        %v2557 = vpack.c.b16 %v2037, %v2029
        %v2558 = vpack.c.b16 %v2038, %v2030
        %v2559 = vpack.c.b16 %v2039, %v2031
        %v2560 = vpack.c.b16 %v2040, %v2032
        %v2561 = vpack.c.b16 %v2041, %v2033
        %v2562 = vpack.c.b16 %v2042, %v2034
        %v2563 = vpack.c.b16 %v2043, %v2035
        %v2564 = vpack.c.b16 %v2052, %v2044
        %v2565 = vpack.c.b16 %v2053, %v2045
        %v2566 = vpack.c.b16 %v2054, %v2046
        %v2567 = vpack.c.b16 %v2055, %v2047
        %v2568 = vpack.c.b16 %v2056, %v2048
        %v2569 = vpack.c.b16 %v2057, %v2049
        %v2570 = vpack.c.b16 %v2058, %v2050
        %v2571 = vpack.c.b16 %v2059, %v2051
        %v2572 = vpack.c.b16 %v2068, %v2060
        %v2573 = vpack.c.b16 %v2069, %v2061
        %v2574 = vpack.c.b16 %v2070, %v2062
        %v2575 = vpack.c.b16 %v2071, %v2063
        %v2576 = vpack.c.b16 %v2072, %v2064
        %v2577 = vpack.c.b16 %v2073, %v2065
        %v2578 = vpack.c.b16 %v2074, %v2066
        %v2579 = vpack.c.b16 %v2075, %v2067
        %v2580 = vpack.c.b16 %v2084, %v2076
        %v2581 = vpack.c.b16 %v2085, %v2077
        %v2582 = vpack.c.b16 %v2086, %v2078
        %v2583 = vpack.c.b16 %v2087, %v2079
        %v2584 = vpack.c.b16 %v2088, %v2080
        %v2585 = vpack.c.b16 %v2089, %v2081
        %v2586 = vpack.c.b16 %v2090, %v2082
        %v2587 = vpack.c.b16 %v2091, %v2083
        %v2588 = vpack.c.b16 %v2100, %v2092
        %v2589 = vpack.c.b16 %v2101, %v2093
        %v2590 = vpack.c.b16 %v2102, %v2094
        %v2591 = vpack.c.b16 %v2103, %v2095
        %v2592 = vpack.c.b16 %v2104, %v2096
        %v2593 = vpack.c.b16 %v2105, %v2097
        %v2594 = vpack.c.b16 %v2106, %v2098
        %v2595 = vpack.c.b16 %v2107, %v2099
        %v2596 = vpack.c.b16 %v2116, %v2108
        %v2597 = vpack.c.b16 %v2117, %v2109
        %v2598 = vpack.c.b16 %v2118, %v2110
        %v2599 = vpack.c.b16 %v2119, %v2111
        %v2600 = vpack.c.b16 %v2120, %v2112
        %v2601 = vpack.c.b16 %v2121, %v2113
        %v2602 = vpack.c.b16 %v2122, %v2114
        %v2603 = vpack.c.b16 %v2123, %v2115
        %v2604 = vpack.c.b16 %v2132, %v2124
        %v2605 = vpack.c.b16 %v2133, %v2125
        %v2606 = vpack.c.b16 %v2134, %v2126
        %v2607 = vpack.c.b16 %v2135, %v2127
        %v2608 = vpack.c.b16 %v2136, %v2128
        %v2609 = vpack.c.b16 %v2137, %v2129
        %v2610 = vpack.c.b16 %v2138, %v2130
        %v2611 = vpack.c.b16 %v2139, %v2131
        %v2612 = vpack.c.b16 %v2148, %v2140
        %v2613 = vpack.c.b16 %v2149, %v2141
        %v2614 = vpack.c.b16 %v2150, %v2142
        %v2615 = vpack.c.b16 %v2151, %v2143
        %v2616 = vpack.c.b16 %v2152, %v2144
        %v2617 = vpack.c.b16 %v2153, %v2145
        %v2618 = vpack.c.b16 %v2154, %v2146
        %v2619 = vpack.c.b16 %v2155, %v2147
        %v2620 = vpack.c.b16 %v2164, %v2156
        %v2621 = vpack.c.b16 %v2165, %v2157
        %v2622 = vpack.c.b16 %v2166, %v2158
        %v2623 = vpack.c.b16 %v2167, %v2159
        %v2624 = vpack.c.b16 %v2168, %v2160
        %v2625 = vpack.c.b16 %v2169, %v2161
        %v2626 = vpack.c.b16 %v2170, %v2162
        %v2627 = vpack.c.b16 %v2171, %v2163
        %v2628 = vpack.c.b16 %v2180, %v2172
        %v2629 = vpack.c.b16 %v2181, %v2173
        %v2630 = vpack.c.b16 %v2182, %v2174
        %v2631 = vpack.c.b16 %v2183, %v2175
        %v2632 = vpack.c.b16 %v2184, %v2176
        %v2633 = vpack.c.b16 %v2185, %v2177
        %v2634 = vpack.c.b16 %v2186, %v2178
        %v2635 = vpack.c.b16 %v2187, %v2179
        %3084 = vmatprep.subr.bf16.mxu0 %v2245
        %3085 = vmatpush1.bf16.msra.mxu0 %v2244
        %3086 = vmatprep.subr.bf16.mxu0 %v2237
        %3087 = vmatpush1.bf16.msra.mxu0 %v2236
        %3088 = vmatprep.subr.bf16.mxu0 %v2229
        %3089 = vmatpush1.bf16.msra.mxu0 %v2228
        %3090 = vmatprep.subr.bf16.mxu0 %v2221
        %3091 = vmatpush1.bf16.msra.mxu0 %v2220
        %3092 = vmatprep.subr.bf16.mxu0 %v2213
        %3093 = vmatpush1.bf16.msra.mxu0 %v2212
        %3094 = vmatprep.subr.bf16.mxu0 %v2205
        %3095 = vmatpush1.bf16.msra.mxu0 %v2204
        %3096 = vmatprep.subr.bf16.mxu0 %v2197
        %3097 = vmatpush1.bf16.msra.mxu0 %v2196
        %3098 = vmatprep.subr.bf16.mxu0 %v2189
        %3099 = vmatpush1.bf16.msra.mxu0 %v2188
        %3100 = vmatprep.subr.bf16.mxu0 %v2309
        %3101 = vmatpush2.bf16.msra.mxu0 %v2308
        %3102 = vmatprep.subr.bf16.mxu0 %v2301
        %3103 = vmatpush2.bf16.msra.mxu0 %v2300
        %3104 = vmatprep.subr.bf16.mxu0 %v2293
        %3105 = vmatpush2.bf16.msra.mxu0 %v2292
        %3106 = vmatprep.subr.bf16.mxu0 %v2285
        %3107 = vmatpush2.bf16.msra.mxu0 %v2284
        %3108 = vmatprep.subr.bf16.mxu0 %v2277
        %3109 = vmatpush2.bf16.msra.mxu0 %v2276
        %3110 = vmatprep.subr.bf16.mxu0 %v2269
        %3111 = vmatpush2.bf16.msra.mxu0 %v2268
        %3112 = vmatprep.subr.bf16.mxu0 %v2261
        %3113 = vmatpush2.bf16.msra.mxu0 %v2260
        %3114 = vmatprep.subr.bf16.mxu0 %v2253
        %3115 = vmatpush2.bf16.msra.mxu0 %v2252
        %3116 = vmatprep.mubr.bf16.mxu0 %v826
        %3117 = vmatmul.mubr.bf16.gmra.mxu0 %v812
        %v3118 = vpop.f32.mrf.mxu0
        %v3119 = vadd.f32 0.0, %v3118
        %v3120 = vpop.f32.mrf.mxu0
        %v3121 = vadd.f32 0.0, %v3120
        %v3122 = vpop.f32.mrf.mxu0
        %v3123 = vpop.f32.mrf.mxu0
        %3124 = vdwg.mxu0
        %3125 = vmatprep.subr.bf16.mxu0 %v2373
        %3126 = vmatpush1.bf16.msra.mxu0 %v2372
        %3127 = vmatprep.subr.bf16.mxu0 %v2365
        %3128 = vmatpush1.bf16.msra.mxu0 %v2364
        %3129 = vmatprep.subr.bf16.mxu0 %v2357
        %3130 = vmatpush1.bf16.msra.mxu0 %v2356
        %3131 = vmatprep.subr.bf16.mxu0 %v2349
        %3132 = vmatpush1.bf16.msra.mxu0 %v2348
        %3133 = vmatprep.subr.bf16.mxu0 %v2341
        %3134 = vmatpush1.bf16.msra.mxu0 %v2340
        %3135 = vmatprep.subr.bf16.mxu0 %v2333
        %3136 = vmatpush1.bf16.msra.mxu0 %v2332
        %3137 = vmatprep.subr.bf16.mxu0 %v2325
        %3138 = vmatpush1.bf16.msra.mxu0 %v2324
        %3139 = vmatprep.subr.bf16.mxu0 %v2317
        %3140 = vmatpush1.bf16.msra.mxu0 %v2316
        %3141 = vmatprep.subr.bf16.mxu0 %v2437
        %3142 = vmatpush2.bf16.msra.mxu0 %v2436
        %3143 = vmatprep.subr.bf16.mxu0 %v2429
        %3144 = vmatpush2.bf16.msra.mxu0 %v2428
        %3145 = vmatprep.subr.bf16.mxu0 %v2421
        %3146 = vmatpush2.bf16.msra.mxu0 %v2420
        %3147 = vmatprep.subr.bf16.mxu0 %v2413
        %3148 = vmatpush2.bf16.msra.mxu0 %v2412
        %3149 = vmatprep.subr.bf16.mxu0 %v2405
        %3150 = vmatpush2.bf16.msra.mxu0 %v2404
        %3151 = vmatprep.subr.bf16.mxu0 %v2397
        %3152 = vmatpush2.bf16.msra.mxu0 %v2396
        %3153 = vmatprep.subr.bf16.mxu0 %v2389
        %3154 = vmatpush2.bf16.msra.mxu0 %v2388
        %3155 = vmatprep.subr.bf16.mxu0 %v2381
        %3156 = vmatpush2.bf16.msra.mxu0 %v2380
        %3157 = vmatprep.mubr.bf16.mxu0 %v836
        %3158 = vmatmul.mubr.bf16.gmra.mxu0 %v834
        %v3159 = vpop.f32.mrf.mxu0
        %v3160 = vadd.f32 %v3119, %v3159
        %v3161 = vpop.f32.mrf.mxu0
        %v3162 = vadd.f32 %v3121, %v3161
        %v3163 = vpop.f32.mrf.mxu0
        %v3164 = vpop.f32.mrf.mxu0
        %3165 = vdwg.mxu0
        %3166 = vmatprep.subr.bf16.mxu0 %v2501
        %3167 = vmatpush1.bf16.msra.mxu0 %v2500
        %3168 = vmatprep.subr.bf16.mxu0 %v2493
        %3169 = vmatpush1.bf16.msra.mxu0 %v2492
        %3170 = vmatprep.subr.bf16.mxu0 %v2485
        %3171 = vmatpush1.bf16.msra.mxu0 %v2484
        %3172 = vmatprep.subr.bf16.mxu0 %v2477
        %3173 = vmatpush1.bf16.msra.mxu0 %v2476
        %3174 = vmatprep.subr.bf16.mxu0 %v2469
        %3175 = vmatpush1.bf16.msra.mxu0 %v2468
        %3176 = vmatprep.subr.bf16.mxu0 %v2461
        %3177 = vmatpush1.bf16.msra.mxu0 %v2460
        %3178 = vmatprep.subr.bf16.mxu0 %v2453
        %3179 = vmatpush1.bf16.msra.mxu0 %v2452
        %3180 = vmatprep.subr.bf16.mxu0 %v2445
        %3181 = vmatpush1.bf16.msra.mxu0 %v2444
        %3182 = vmatprep.subr.bf16.mxu0 %v2565
        %3183 = vmatpush2.bf16.msra.mxu0 %v2564
        %3184 = vmatprep.subr.bf16.mxu0 %v2557
        %3185 = vmatpush2.bf16.msra.mxu0 %v2556
        %3186 = vmatprep.subr.bf16.mxu0 %v2549
        %3187 = vmatpush2.bf16.msra.mxu0 %v2548
        %3188 = vmatprep.subr.bf16.mxu0 %v2541
        %3189 = vmatpush2.bf16.msra.mxu0 %v2540
        %3190 = vmatprep.subr.bf16.mxu0 %v2533
        %3191 = vmatpush2.bf16.msra.mxu0 %v2532
        %3192 = vmatprep.subr.bf16.mxu0 %v2525
        %3193 = vmatpush2.bf16.msra.mxu0 %v2524
        %3194 = vmatprep.subr.bf16.mxu0 %v2517
        %3195 = vmatpush2.bf16.msra.mxu0 %v2516
        %3196 = vmatprep.subr.bf16.mxu0 %v2509
        %3197 = vmatpush2.bf16.msra.mxu0 %v2508
        %3198 = vmatprep.mubr.bf16.mxu0 %v833
        %3199 = vmatmul.mubr.bf16.gmra.mxu0 %v819
        %v3200 = vpop.f32.mrf.mxu0
        %v3201 = vadd.f32 %v3160, %v3200
        %v3202 = vpop.f32.mrf.mxu0
        %v3203 = vadd.f32 %v3162, %v3202
        %v3204 = vpop.f32.mrf.mxu0
        %v3205 = vpop.f32.mrf.mxu0
        %3206 = vdwg.mxu0
        %3207 = vmatprep.subr.bf16.mxu0 %v2629
        %3208 = vmatpush1.bf16.msra.mxu0 %v2628
        %3209 = vmatprep.subr.bf16.mxu0 %v2621
        %3210 = vmatpush1.bf16.msra.mxu0 %v2620
        %3211 = vmatprep.subr.bf16.mxu0 %v2613
        %3212 = vmatpush1.bf16.msra.mxu0 %v2612
        %3213 = vmatprep.subr.bf16.mxu0 %v2605
        %3214 = vmatpush1.bf16.msra.mxu0 %v2604
        %3215 = vmatprep.subr.bf16.mxu0 %v2597
        %3216 = vmatpush1.bf16.msra.mxu0 %v2596
        %3217 = vmatprep.subr.bf16.mxu0 %v2589
        %3218 = vmatpush1.bf16.msra.mxu0 %v2588
        %3219 = vmatprep.subr.bf16.mxu0 %v2581
        %3220 = vmatpush1.bf16.msra.mxu0 %v2580
        %3221 = vmatprep.subr.bf16.mxu0 %v2573
        %3222 = vmatpush1.bf16.msra.mxu0 %v2572
        %3223 = vmatprep.subr.bf16.mxu0 0
        %3224 = vmatpush2.bf16.msra.mxu0 0
        %3225 = vmatprep.subr.bf16.mxu0 0
        %3226 = vmatpush2.bf16.msra.mxu0 0
        %3227 = vmatprep.subr.bf16.mxu0 0
        %3228 = vmatpush2.bf16.msra.mxu0 0
        %3229 = vmatprep.subr.bf16.mxu0 0
        %3230 = vmatpush2.bf16.msra.mxu0 0
        %3231 = vmatprep.subr.bf16.mxu0 0
        %3232 = vmatpush2.bf16.msra.mxu0 0
        %3233 = vmatprep.subr.bf16.mxu0 0
        %3234 = vmatpush2.bf16.msra.mxu0 0
        %3235 = vmatprep.subr.bf16.mxu0 0
        %3236 = vmatpush2.bf16.msra.mxu0 0
        %3237 = vmatprep.subr.bf16.mxu0 0
        %3238 = vmatpush2.bf16.msra.mxu0 0
        %3239 = vmatprep.mubr.bf16.mxu0 0
        %3240 = vmatmul.mubr.bf16.gmra.mxu0 %v835
        %v3241 = vpop.f32.mrf.mxu0
        %v3242 = vadd.f32 %v3201, %v3241
        %v3243 = vpop.f32.mrf.mxu0
        %v3244 = vadd.f32 %v3203, %v3243
        %v3245 = vpop.f32.mrf.mxu0
        %v3246 = vpop.f32.mrf.mxu0
        %3247 = vdwg.mxu0
        %3248 = vmatprep.subr.bf16.mxu0 %v2247
        %3249 = vmatpush1.bf16.msra.mxu0 %v2246
        %3250 = vmatprep.subr.bf16.mxu0 %v2239
        %3251 = vmatpush1.bf16.msra.mxu0 %v2238
        %3252 = vmatprep.subr.bf16.mxu0 %v2231
        %3253 = vmatpush1.bf16.msra.mxu0 %v2230
        %3254 = vmatprep.subr.bf16.mxu0 %v2223
        %3255 = vmatpush1.bf16.msra.mxu0 %v2222
        %3256 = vmatprep.subr.bf16.mxu0 %v2215
        %3257 = vmatpush1.bf16.msra.mxu0 %v2214
        %3258 = vmatprep.subr.bf16.mxu0 %v2207
        %3259 = vmatpush1.bf16.msra.mxu0 %v2206
        %3260 = vmatprep.subr.bf16.mxu0 %v2199
        %3261 = vmatpush1.bf16.msra.mxu0 %v2198
        %3262 = vmatprep.subr.bf16.mxu0 %v2191
        %3263 = vmatpush1.bf16.msra.mxu0 %v2190
        %3264 = vmatprep.subr.bf16.mxu0 %v2311
        %3265 = vmatpush2.bf16.msra.mxu0 %v2310
        %3266 = vmatprep.subr.bf16.mxu0 %v2303
        %3267 = vmatpush2.bf16.msra.mxu0 %v2302
        %3268 = vmatprep.subr.bf16.mxu0 %v2295
        %3269 = vmatpush2.bf16.msra.mxu0 %v2294
        %3270 = vmatprep.subr.bf16.mxu0 %v2287
        %3271 = vmatpush2.bf16.msra.mxu0 %v2286
        %3272 = vmatprep.subr.bf16.mxu0 %v2279
        %3273 = vmatpush2.bf16.msra.mxu0 %v2278
        %3274 = vmatprep.subr.bf16.mxu0 %v2271
        %3275 = vmatpush2.bf16.msra.mxu0 %v2270
        %3276 = vmatprep.subr.bf16.mxu0 %v2263
        %3277 = vmatpush2.bf16.msra.mxu0 %v2262
        %3278 = vmatprep.subr.bf16.mxu0 %v2255
        %3279 = vmatpush2.bf16.msra.mxu0 %v2254
        %3280 = vmatprep.mubr.bf16.mxu0 %v826
        %3281 = vmatmul.mubr.bf16.gmra.mxu0 %v812
        %v3282 = vpop.f32.mrf.mxu0
        %v3283 = vadd.f32 0.0, %v3282
        %v3284 = vpop.f32.mrf.mxu0
        %v3285 = vadd.f32 0.0, %v3284
        %v3286 = vpop.f32.mrf.mxu0
        %v3287 = vpop.f32.mrf.mxu0
        %3288 = vdwg.mxu0
        %3289 = vmatprep.subr.bf16.mxu0 %v2375
        %3290 = vmatpush1.bf16.msra.mxu0 %v2374
        %3291 = vmatprep.subr.bf16.mxu0 %v2367
        %3292 = vmatpush1.bf16.msra.mxu0 %v2366
        %3293 = vmatprep.subr.bf16.mxu0 %v2359
        %3294 = vmatpush1.bf16.msra.mxu0 %v2358
        %3295 = vmatprep.subr.bf16.mxu0 %v2351
        %3296 = vmatpush1.bf16.msra.mxu0 %v2350
        %3297 = vmatprep.subr.bf16.mxu0 %v2343
        %3298 = vmatpush1.bf16.msra.mxu0 %v2342
        %3299 = vmatprep.subr.bf16.mxu0 %v2335
        %3300 = vmatpush1.bf16.msra.mxu0 %v2334
        %3301 = vmatprep.subr.bf16.mxu0 %v2327
        %3302 = vmatpush1.bf16.msra.mxu0 %v2326
        %3303 = vmatprep.subr.bf16.mxu0 %v2319
        %3304 = vmatpush1.bf16.msra.mxu0 %v2318
        %3305 = vmatprep.subr.bf16.mxu0 %v2439
        %3306 = vmatpush2.bf16.msra.mxu0 %v2438
        %3307 = vmatprep.subr.bf16.mxu0 %v2431
        %3308 = vmatpush2.bf16.msra.mxu0 %v2430
        %3309 = vmatprep.subr.bf16.mxu0 %v2423
        %3310 = vmatpush2.bf16.msra.mxu0 %v2422
        %3311 = vmatprep.subr.bf16.mxu0 %v2415
        %3312 = vmatpush2.bf16.msra.mxu0 %v2414
        %3313 = vmatprep.subr.bf16.mxu0 %v2407
        %3314 = vmatpush2.bf16.msra.mxu0 %v2406
        %3315 = vmatprep.subr.bf16.mxu0 %v2399
        %3316 = vmatpush2.bf16.msra.mxu0 %v2398
        %3317 = vmatprep.subr.bf16.mxu0 %v2391
        %3318 = vmatpush2.bf16.msra.mxu0 %v2390
        %3319 = vmatprep.subr.bf16.mxu0 %v2383
        %3320 = vmatpush2.bf16.msra.mxu0 %v2382
        %3321 = vmatprep.mubr.bf16.mxu0 %v836
        %3322 = vmatmul.mubr.bf16.gmra.mxu0 %v834
        %v3323 = vpop.f32.mrf.mxu0
        %v3324 = vadd.f32 %v3283, %v3323
        %v3325 = vpop.f32.mrf.mxu0
        %v3326 = vadd.f32 %v3285, %v3325
        %v3327 = vpop.f32.mrf.mxu0
        %v3328 = vpop.f32.mrf.mxu0
        %3329 = vdwg.mxu0
        %3330 = vmatprep.subr.bf16.mxu0 %v2503
        %3331 = vmatpush1.bf16.msra.mxu0 %v2502
        %3332 = vmatprep.subr.bf16.mxu0 %v2495
        %3333 = vmatpush1.bf16.msra.mxu0 %v2494
        %3334 = vmatprep.subr.bf16.mxu0 %v2487
        %3335 = vmatpush1.bf16.msra.mxu0 %v2486
        %3336 = vmatprep.subr.bf16.mxu0 %v2479
        %3337 = vmatpush1.bf16.msra.mxu0 %v2478
        %3338 = vmatprep.subr.bf16.mxu0 %v2471
        %3339 = vmatpush1.bf16.msra.mxu0 %v2470
        %3340 = vmatprep.subr.bf16.mxu0 %v2463
        %3341 = vmatpush1.bf16.msra.mxu0 %v2462
        %3342 = vmatprep.subr.bf16.mxu0 %v2455
        %3343 = vmatpush1.bf16.msra.mxu0 %v2454
        %3344 = vmatprep.subr.bf16.mxu0 %v2447
        %3345 = vmatpush1.bf16.msra.mxu0 %v2446
        %3346 = vmatprep.subr.bf16.mxu0 %v2567
        %3347 = vmatpush2.bf16.msra.mxu0 %v2566
        %3348 = vmatprep.subr.bf16.mxu0 %v2559
        %3349 = vmatpush2.bf16.msra.mxu0 %v2558
        %3350 = vmatprep.subr.bf16.mxu0 %v2551
        %3351 = vmatpush2.bf16.msra.mxu0 %v2550
        %3352 = vmatprep.subr.bf16.mxu0 %v2543
        %3353 = vmatpush2.bf16.msra.mxu0 %v2542
        %3354 = vmatprep.subr.bf16.mxu0 %v2535
        %3355 = vmatpush2.bf16.msra.mxu0 %v2534
        %3356 = vmatprep.subr.bf16.mxu0 %v2527
        %3357 = vmatpush2.bf16.msra.mxu0 %v2526
        %3358 = vmatprep.subr.bf16.mxu0 %v2519
        %3359 = vmatpush2.bf16.msra.mxu0 %v2518
        %3360 = vmatprep.subr.bf16.mxu0 %v2511
        %3361 = vmatpush2.bf16.msra.mxu0 %v2510
        %3362 = vmatprep.mubr.bf16.mxu0 %v833
        %3363 = vmatmul.mubr.bf16.gmra.mxu0 %v819
        %v3364 = vpop.f32.mrf.mxu0
        %v3365 = vadd.f32 %v3324, %v3364
        %v3366 = vpop.f32.mrf.mxu0
        %v3367 = vadd.f32 %v3326, %v3366
        %v3368 = vpop.f32.mrf.mxu0
        %v3369 = vpop.f32.mrf.mxu0
        %3370 = vdwg.mxu0
        %3371 = vmatprep.subr.bf16.mxu0 %v2631
        %3372 = vmatpush1.bf16.msra.mxu0 %v2630
        %3373 = vmatprep.subr.bf16.mxu0 %v2623
        %3374 = vmatpush1.bf16.msra.mxu0 %v2622
        %3375 = vmatprep.subr.bf16.mxu0 %v2615
        %3376 = vmatpush1.bf16.msra.mxu0 %v2614
        %3377 = vmatprep.subr.bf16.mxu0 %v2607
        %3378 = vmatpush1.bf16.msra.mxu0 %v2606
        %3379 = vmatprep.subr.bf16.mxu0 %v2599
        %3380 = vmatpush1.bf16.msra.mxu0 %v2598
        %3381 = vmatprep.subr.bf16.mxu0 %v2591
        %3382 = vmatpush1.bf16.msra.mxu0 %v2590
        %3383 = vmatprep.subr.bf16.mxu0 %v2583
        %3384 = vmatpush1.bf16.msra.mxu0 %v2582
        %3385 = vmatprep.subr.bf16.mxu0 %v2575
        %3386 = vmatpush1.bf16.msra.mxu0 %v2574
        %3387 = vmatprep.subr.bf16.mxu0 0
        %3388 = vmatpush2.bf16.msra.mxu0 0
        %3389 = vmatprep.subr.bf16.mxu0 0
        %3390 = vmatpush2.bf16.msra.mxu0 0
        %3391 = vmatprep.subr.bf16.mxu0 0
        %3392 = vmatpush2.bf16.msra.mxu0 0
        %3393 = vmatprep.subr.bf16.mxu0 0
        %3394 = vmatpush2.bf16.msra.mxu0 0
        %3395 = vmatprep.subr.bf16.mxu0 0
        %3396 = vmatpush2.bf16.msra.mxu0 0
        %3397 = vmatprep.subr.bf16.mxu0 0
        %3398 = vmatpush2.bf16.msra.mxu0 0
        %3399 = vmatprep.subr.bf16.mxu0 0
        %3400 = vmatpush2.bf16.msra.mxu0 0
        %3401 = vmatprep.subr.bf16.mxu0 0
        %3402 = vmatpush2.bf16.msra.mxu0 0
        %3403 = vmatprep.mubr.bf16.mxu0 0
        %3404 = vmatmul.mubr.bf16.gmra.mxu0 %v835
        %v3405 = vpop.f32.mrf.mxu0
        %v3406 = vadd.f32 %v3365, %v3405
        %v3407 = vpop.f32.mrf.mxu0
        %v3408 = vadd.f32 %v3367, %v3407
        %v3409 = vpop.f32.mrf.mxu0
        %v3410 = vpop.f32.mrf.mxu0
        %3411 = vdwg.mxu0
        %3412 = vmatprep.subr.bf16.mxu0 %v2249
        %3413 = vmatpush1.bf16.msra.mxu0 %v2248
        %3414 = vmatprep.subr.bf16.mxu0 %v2241
        %3415 = vmatpush1.bf16.msra.mxu0 %v2240
        %3416 = vmatprep.subr.bf16.mxu0 %v2233
        %3417 = vmatpush1.bf16.msra.mxu0 %v2232
        %3418 = vmatprep.subr.bf16.mxu0 %v2225
        %3419 = vmatpush1.bf16.msra.mxu0 %v2224
        %3420 = vmatprep.subr.bf16.mxu0 %v2217
        %3421 = vmatpush1.bf16.msra.mxu0 %v2216
        %3422 = vmatprep.subr.bf16.mxu0 %v2209
        %3423 = vmatpush1.bf16.msra.mxu0 %v2208
        %3424 = vmatprep.subr.bf16.mxu0 %v2201
        %3425 = vmatpush1.bf16.msra.mxu0 %v2200
        %3426 = vmatprep.subr.bf16.mxu0 %v2193
        %3427 = vmatpush1.bf16.msra.mxu0 %v2192
        %3428 = vmatprep.subr.bf16.mxu0 %v2313
        %3429 = vmatpush2.bf16.msra.mxu0 %v2312
        %3430 = vmatprep.subr.bf16.mxu0 %v2305
        %3431 = vmatpush2.bf16.msra.mxu0 %v2304
        %3432 = vmatprep.subr.bf16.mxu0 %v2297
        %3433 = vmatpush2.bf16.msra.mxu0 %v2296
        %3434 = vmatprep.subr.bf16.mxu0 %v2289
        %3435 = vmatpush2.bf16.msra.mxu0 %v2288
        %3436 = vmatprep.subr.bf16.mxu0 %v2281
        %3437 = vmatpush2.bf16.msra.mxu0 %v2280
        %3438 = vmatprep.subr.bf16.mxu0 %v2273
        %3439 = vmatpush2.bf16.msra.mxu0 %v2272
        %3440 = vmatprep.subr.bf16.mxu0 %v2265
        %3441 = vmatpush2.bf16.msra.mxu0 %v2264
        %3442 = vmatprep.subr.bf16.mxu0 %v2257
        %3443 = vmatpush2.bf16.msra.mxu0 %v2256
        %3444 = vmatprep.mubr.bf16.mxu0 %v826
        %3445 = vmatmul.mubr.bf16.gmra.mxu0 %v812
        %v3446 = vpop.f32.mrf.mxu0
        %v3447 = vadd.f32 0.0, %v3446
        %v3448 = vpop.f32.mrf.mxu0
        %v3449 = vadd.f32 0.0, %v3448
        %v3450 = vpop.f32.mrf.mxu0
        %v3451 = vpop.f32.mrf.mxu0
        %3452 = vdwg.mxu0
        %3453 = vmatprep.subr.bf16.mxu0 %v2377
        %3454 = vmatpush1.bf16.msra.mxu0 %v2376
        %3455 = vmatprep.subr.bf16.mxu0 %v2369
        %3456 = vmatpush1.bf16.msra.mxu0 %v2368
        %3457 = vmatprep.subr.bf16.mxu0 %v2361
        %3458 = vmatpush1.bf16.msra.mxu0 %v2360
        %3459 = vmatprep.subr.bf16.mxu0 %v2353
        %3460 = vmatpush1.bf16.msra.mxu0 %v2352
        %3461 = vmatprep.subr.bf16.mxu0 %v2345
        %3462 = vmatpush1.bf16.msra.mxu0 %v2344
        %3463 = vmatprep.subr.bf16.mxu0 %v2337
        %3464 = vmatpush1.bf16.msra.mxu0 %v2336
        %3465 = vmatprep.subr.bf16.mxu0 %v2329
        %3466 = vmatpush1.bf16.msra.mxu0 %v2328
        %3467 = vmatprep.subr.bf16.mxu0 %v2321
        %3468 = vmatpush1.bf16.msra.mxu0 %v2320
        %3469 = vmatprep.subr.bf16.mxu0 %v2441
        %3470 = vmatpush2.bf16.msra.mxu0 %v2440
        %3471 = vmatprep.subr.bf16.mxu0 %v2433
        %3472 = vmatpush2.bf16.msra.mxu0 %v2432
        %3473 = vmatprep.subr.bf16.mxu0 %v2425
        %3474 = vmatpush2.bf16.msra.mxu0 %v2424
        %3475 = vmatprep.subr.bf16.mxu0 %v2417
        %3476 = vmatpush2.bf16.msra.mxu0 %v2416
        %3477 = vmatprep.subr.bf16.mxu0 %v2409
        %3478 = vmatpush2.bf16.msra.mxu0 %v2408
        %3479 = vmatprep.subr.bf16.mxu0 %v2401
        %3480 = vmatpush2.bf16.msra.mxu0 %v2400
        %3481 = vmatprep.subr.bf16.mxu0 %v2393
        %3482 = vmatpush2.bf16.msra.mxu0 %v2392
        %3483 = vmatprep.subr.bf16.mxu0 %v2385
        %3484 = vmatpush2.bf16.msra.mxu0 %v2384
        %3485 = vmatprep.mubr.bf16.mxu0 %v836
        %3486 = vmatmul.mubr.bf16.gmra.mxu0 %v834
        %v3487 = vpop.f32.mrf.mxu0
        %v3488 = vadd.f32 %v3447, %v3487
        %v3489 = vpop.f32.mrf.mxu0
        %v3490 = vadd.f32 %v3449, %v3489
        %v3491 = vpop.f32.mrf.mxu0
        %v3492 = vpop.f32.mrf.mxu0
        %3493 = vdwg.mxu0
        %3494 = vmatprep.subr.bf16.mxu0 %v2505
        %3495 = vmatpush1.bf16.msra.mxu0 %v2504
        %3496 = vmatprep.subr.bf16.mxu0 %v2497
        %3497 = vmatpush1.bf16.msra.mxu0 %v2496
        %3498 = vmatprep.subr.bf16.mxu0 %v2489
        %3499 = vmatpush1.bf16.msra.mxu0 %v2488
        %3500 = vmatprep.subr.bf16.mxu0 %v2481
        %3501 = vmatpush1.bf16.msra.mxu0 %v2480
        %3502 = vmatprep.subr.bf16.mxu0 %v2473
        %3503 = vmatpush1.bf16.msra.mxu0 %v2472
        %3504 = vmatprep.subr.bf16.mxu0 %v2465
        %3505 = vmatpush1.bf16.msra.mxu0 %v2464
        %3506 = vmatprep.subr.bf16.mxu0 %v2457
        %3507 = vmatpush1.bf16.msra.mxu0 %v2456
        %3508 = vmatprep.subr.bf16.mxu0 %v2449
        %3509 = vmatpush1.bf16.msra.mxu0 %v2448
        %3510 = vmatprep.subr.bf16.mxu0 %v2569
        %3511 = vmatpush2.bf16.msra.mxu0 %v2568
        %3512 = vmatprep.subr.bf16.mxu0 %v2561
        %3513 = vmatpush2.bf16.msra.mxu0 %v2560
        %3514 = vmatprep.subr.bf16.mxu0 %v2553
        %3515 = vmatpush2.bf16.msra.mxu0 %v2552
        %3516 = vmatprep.subr.bf16.mxu0 %v2545
        %3517 = vmatpush2.bf16.msra.mxu0 %v2544
        %3518 = vmatprep.subr.bf16.mxu0 %v2537
        %3519 = vmatpush2.bf16.msra.mxu0 %v2536
        %3520 = vmatprep.subr.bf16.mxu0 %v2529
        %3521 = vmatpush2.bf16.msra.mxu0 %v2528
        %3522 = vmatprep.subr.bf16.mxu0 %v2521
        %3523 = vmatpush2.bf16.msra.mxu0 %v2520
        %3524 = vmatprep.subr.bf16.mxu0 %v2513
        %3525 = vmatpush2.bf16.msra.mxu0 %v2512
        %3526 = vmatprep.mubr.bf16.mxu0 %v833
        %3527 = vmatmul.mubr.bf16.gmra.mxu0 %v819
        %v3528 = vpop.f32.mrf.mxu0
        %v3529 = vadd.f32 %v3488, %v3528
        %v3530 = vpop.f32.mrf.mxu0
        %v3531 = vadd.f32 %v3490, %v3530
        %v3532 = vpop.f32.mrf.mxu0
        %v3533 = vpop.f32.mrf.mxu0
        %3534 = vdwg.mxu0
        %3535 = vmatprep.subr.bf16.mxu0 %v2633
        %3536 = vmatpush1.bf16.msra.mxu0 %v2632
        %3537 = vmatprep.subr.bf16.mxu0 %v2625
        %3538 = vmatpush1.bf16.msra.mxu0 %v2624
        %3539 = vmatprep.subr.bf16.mxu0 %v2617
        %3540 = vmatpush1.bf16.msra.mxu0 %v2616
        %3541 = vmatprep.subr.bf16.mxu0 %v2609
        %3542 = vmatpush1.bf16.msra.mxu0 %v2608
        %3543 = vmatprep.subr.bf16.mxu0 %v2601
        %3544 = vmatpush1.bf16.msra.mxu0 %v2600
        %3545 = vmatprep.subr.bf16.mxu0 %v2593
        %3546 = vmatpush1.bf16.msra.mxu0 %v2592
        %3547 = vmatprep.subr.bf16.mxu0 %v2585
        %3548 = vmatpush1.bf16.msra.mxu0 %v2584
        %3549 = vmatprep.subr.bf16.mxu0 %v2577
        %3550 = vmatpush1.bf16.msra.mxu0 %v2576
        %3551 = vmatprep.subr.bf16.mxu0 0
        %3552 = vmatpush2.bf16.msra.mxu0 0
        %3553 = vmatprep.subr.bf16.mxu0 0
        %3554 = vmatpush2.bf16.msra.mxu0 0
        %3555 = vmatprep.subr.bf16.mxu0 0
        %3556 = vmatpush2.bf16.msra.mxu0 0
        %3557 = vmatprep.subr.bf16.mxu0 0
        %3558 = vmatpush2.bf16.msra.mxu0 0
        %3559 = vmatprep.subr.bf16.mxu0 0
        %3560 = vmatpush2.bf16.msra.mxu0 0
        %3561 = vmatprep.subr.bf16.mxu0 0
        %3562 = vmatpush2.bf16.msra.mxu0 0
        %3563 = vmatprep.subr.bf16.mxu0 0
        %3564 = vmatpush2.bf16.msra.mxu0 0
        %3565 = vmatprep.subr.bf16.mxu0 0
        %3566 = vmatpush2.bf16.msra.mxu0 0
        %3567 = vmatprep.mubr.bf16.mxu0 0
        %3568 = vmatmul.mubr.bf16.gmra.mxu0 %v835
        %v3569 = vpop.f32.mrf.mxu0
        %v3570 = vadd.f32 %v3529, %v3569
        %v3571 = vpop.f32.mrf.mxu0
        %v3572 = vadd.f32 %v3531, %v3571
        %v3573 = vpop.f32.mrf.mxu0
        %v3574 = vpop.f32.mrf.mxu0
        %3575 = vdwg.mxu0
        %3576 = vmatprep.subr.bf16.mxu0 %v2251
        %3577 = vmatpush1.bf16.msra.mxu0 %v2250
        %3578 = vmatprep.subr.bf16.mxu0 %v2243
        %3579 = vmatpush1.bf16.msra.mxu0 %v2242
        %3580 = vmatprep.subr.bf16.mxu0 %v2235
        %3581 = vmatpush1.bf16.msra.mxu0 %v2234
        %3582 = vmatprep.subr.bf16.mxu0 %v2227
        %3583 = vmatpush1.bf16.msra.mxu0 %v2226
        %3584 = vmatprep.subr.bf16.mxu0 %v2219
        %3585 = vmatpush1.bf16.msra.mxu0 %v2218
        %3586 = vmatprep.subr.bf16.mxu0 %v2211
        %3587 = vmatpush1.bf16.msra.mxu0 %v2210
        %3588 = vmatprep.subr.bf16.mxu0 %v2203
        %3589 = vmatpush1.bf16.msra.mxu0 %v2202
        %3590 = vmatprep.subr.bf16.mxu0 %v2195
        %3591 = vmatpush1.bf16.msra.mxu0 %v2194
        %3592 = vmatprep.subr.bf16.mxu0 %v2315
        %3593 = vmatpush2.bf16.msra.mxu0 %v2314
        %3594 = vmatprep.subr.bf16.mxu0 %v2307
        %3595 = vmatpush2.bf16.msra.mxu0 %v2306
        %3596 = vmatprep.subr.bf16.mxu0 %v2299
        %3597 = vmatpush2.bf16.msra.mxu0 %v2298
        %3598 = vmatprep.subr.bf16.mxu0 %v2291
        %3599 = vmatpush2.bf16.msra.mxu0 %v2290
        %3600 = vmatprep.subr.bf16.mxu0 %v2283
        %3601 = vmatpush2.bf16.msra.mxu0 %v2282
        %3602 = vmatprep.subr.bf16.mxu0 %v2275
        %3603 = vmatpush2.bf16.msra.mxu0 %v2274
        %3604 = vmatprep.subr.bf16.mxu0 %v2267
        %3605 = vmatpush2.bf16.msra.mxu0 %v2266
        %3606 = vmatprep.subr.bf16.mxu0 %v2259
        %3607 = vmatpush2.bf16.msra.mxu0 %v2258
        %3608 = vmatprep.mubr.bf16.mxu0 %v826
        %3609 = vmatmul.mubr.bf16.gmra.mxu0 %v812
        %v3610 = vpop.f32.mrf.mxu0
        %v3611 = vadd.f32 0.0, %v3610
        %v3612 = vpop.f32.mrf.mxu0
        %v3613 = vadd.f32 0.0, %v3612
        %v3614 = vpop.f32.mrf.mxu0
        %v3615 = vpop.f32.mrf.mxu0
        %3616 = vdwg.mxu0
        %3617 = vmatprep.subr.bf16.mxu0 %v2379
        %3618 = vmatpush1.bf16.msra.mxu0 %v2378
        %3619 = vmatprep.subr.bf16.mxu0 %v2371
        %3620 = vmatpush1.bf16.msra.mxu0 %v2370
        %3621 = vmatprep.subr.bf16.mxu0 %v2363
        %3622 = vmatpush1.bf16.msra.mxu0 %v2362
        %3623 = vmatprep.subr.bf16.mxu0 %v2355
        %3624 = vmatpush1.bf16.msra.mxu0 %v2354
        %3625 = vmatprep.subr.bf16.mxu0 %v2347
        %3626 = vmatpush1.bf16.msra.mxu0 %v2346
        %3627 = vmatprep.subr.bf16.mxu0 %v2339
        %3628 = vmatpush1.bf16.msra.mxu0 %v2338
        %3629 = vmatprep.subr.bf16.mxu0 %v2331
        %3630 = vmatpush1.bf16.msra.mxu0 %v2330
        %3631 = vmatprep.subr.bf16.mxu0 %v2323
        %3632 = vmatpush1.bf16.msra.mxu0 %v2322
        %3633 = vmatprep.subr.bf16.mxu0 %v2443
        %3634 = vmatpush2.bf16.msra.mxu0 %v2442
        %3635 = vmatprep.subr.bf16.mxu0 %v2435
        %3636 = vmatpush2.bf16.msra.mxu0 %v2434
        %3637 = vmatprep.subr.bf16.mxu0 %v2427
        %3638 = vmatpush2.bf16.msra.mxu0 %v2426
        %3639 = vmatprep.subr.bf16.mxu0 %v2419
        %3640 = vmatpush2.bf16.msra.mxu0 %v2418
        %3641 = vmatprep.subr.bf16.mxu0 %v2411
        %3642 = vmatpush2.bf16.msra.mxu0 %v2410
        %3643 = vmatprep.subr.bf16.mxu0 %v2403
        %3644 = vmatpush2.bf16.msra.mxu0 %v2402
        %3645 = vmatprep.subr.bf16.mxu0 %v2395
        %3646 = vmatpush2.bf16.msra.mxu0 %v2394
        %3647 = vmatprep.subr.bf16.mxu0 %v2387
        %3648 = vmatpush2.bf16.msra.mxu0 %v2386
        %3649 = vmatprep.mubr.bf16.mxu0 %v836
        %3650 = vmatmul.mubr.bf16.gmra.mxu0 %v834
        %v3651 = vpop.f32.mrf.mxu0
        %v3652 = vadd.f32 %v3611, %v3651
        %v3653 = vpop.f32.mrf.mxu0
        %v3654 = vadd.f32 %v3613, %v3653
        %v3655 = vpop.f32.mrf.mxu0
        %v3656 = vpop.f32.mrf.mxu0
        %3657 = vdwg.mxu0
        %3658 = vmatprep.subr.bf16.mxu0 %v2507
        %3659 = vmatpush1.bf16.msra.mxu0 %v2506
        %3660 = vmatprep.subr.bf16.mxu0 %v2499
        %3661 = vmatpush1.bf16.msra.mxu0 %v2498
        %3662 = vmatprep.subr.bf16.mxu0 %v2491
        %3663 = vmatpush1.bf16.msra.mxu0 %v2490
        %3664 = vmatprep.subr.bf16.mxu0 %v2483
        %3665 = vmatpush1.bf16.msra.mxu0 %v2482
        %3666 = vmatprep.subr.bf16.mxu0 %v2475
        %3667 = vmatpush1.bf16.msra.mxu0 %v2474
        %3668 = vmatprep.subr.bf16.mxu0 %v2467
        %3669 = vmatpush1.bf16.msra.mxu0 %v2466
        %3670 = vmatprep.subr.bf16.mxu0 %v2459
        %3671 = vmatpush1.bf16.msra.mxu0 %v2458
        %3672 = vmatprep.subr.bf16.mxu0 %v2451
        %3673 = vmatpush1.bf16.msra.mxu0 %v2450
        %3674 = vmatprep.subr.bf16.mxu0 %v2571
        %3675 = vmatpush2.bf16.msra.mxu0 %v2570
        %3676 = vmatprep.subr.bf16.mxu0 %v2563
        %3677 = vmatpush2.bf16.msra.mxu0 %v2562
        %3678 = vmatprep.subr.bf16.mxu0 %v2555
        %3679 = vmatpush2.bf16.msra.mxu0 %v2554
        %3680 = vmatprep.subr.bf16.mxu0 %v2547
        %3681 = vmatpush2.bf16.msra.mxu0 %v2546
        %3682 = vmatprep.subr.bf16.mxu0 %v2539
        %3683 = vmatpush2.bf16.msra.mxu0 %v2538
        %3684 = vmatprep.subr.bf16.mxu0 %v2531
        %3685 = vmatpush2.bf16.msra.mxu0 %v2530
        %3686 = vmatprep.subr.bf16.mxu0 %v2523
        %3687 = vmatpush2.bf16.msra.mxu0 %v2522
        %3688 = vmatprep.subr.bf16.mxu0 %v2515
        %3689 = vmatpush2.bf16.msra.mxu0 %v2514
        %3690 = vmatprep.mubr.bf16.mxu0 %v833
        %3691 = vmatmul.mubr.bf16.gmra.mxu0 %v819
        %v3692 = vpop.f32.mrf.mxu0
        %v3693 = vadd.f32 %v3652, %v3692
        %v3694 = vpop.f32.mrf.mxu0
        %v3695 = vadd.f32 %v3654, %v3694
        %v3696 = vpop.f32.mrf.mxu0
        %v3697 = vpop.f32.mrf.mxu0
        %3698 = vdwg.mxu0
        %3699 = vmatprep.subr.bf16.mxu0 %v2635
        %3700 = vmatpush1.bf16.msra.mxu0 %v2634
        %3701 = vmatprep.subr.bf16.mxu0 %v2627
        %3702 = vmatpush1.bf16.msra.mxu0 %v2626
        %3703 = vmatprep.subr.bf16.mxu0 %v2619
        %3704 = vmatpush1.bf16.msra.mxu0 %v2618
        %3705 = vmatprep.subr.bf16.mxu0 %v2611
        %3706 = vmatpush1.bf16.msra.mxu0 %v2610
        %3707 = vmatprep.subr.bf16.mxu0 %v2603
        %3708 = vmatpush1.bf16.msra.mxu0 %v2602
        %3709 = vmatprep.subr.bf16.mxu0 %v2595
        %3710 = vmatpush1.bf16.msra.mxu0 %v2594
        %3711 = vmatprep.subr.bf16.mxu0 %v2587
        %3712 = vmatpush1.bf16.msra.mxu0 %v2586
        %3713 = vmatprep.subr.bf16.mxu0 %v2579
        %3714 = vmatpush1.bf16.msra.mxu0 %v2578
        %3715 = vmatprep.subr.bf16.mxu0 0
        %3716 = vmatpush2.bf16.msra.mxu0 0
        %3717 = vmatprep.subr.bf16.mxu0 0
        %3718 = vmatpush2.bf16.msra.mxu0 0
        %3719 = vmatprep.subr.bf16.mxu0 0
        %3720 = vmatpush2.bf16.msra.mxu0 0
        %3721 = vmatprep.subr.bf16.mxu0 0
        %3722 = vmatpush2.bf16.msra.mxu0 0
        %3723 = vmatprep.subr.bf16.mxu0 0
        %3724 = vmatpush2.bf16.msra.mxu0 0
        %3725 = vmatprep.subr.bf16.mxu0 0
        %3726 = vmatpush2.bf16.msra.mxu0 0
        %3727 = vmatprep.subr.bf16.mxu0 0
        %3728 = vmatpush2.bf16.msra.mxu0 0
        %3729 = vmatprep.subr.bf16.mxu0 0
        %3730 = vmatpush2.bf16.msra.mxu0 0
        %3731 = vmatprep.mubr.bf16.mxu0 0
        %3732 = vmatmul.mubr.bf16.gmra.mxu0 %v835
        %v3733 = vpop.f32.mrf.mxu0
        %v3734 = vadd.f32 %v3693, %v3733
        %v3735 = vpop.f32.mrf.mxu0
        %v3736 = vadd.f32 %v3695, %v3735
        %v3737 = vpop.f32.mrf.mxu0
        %v3738 = vpop.f32.mrf.mxu0
        %3739 = vdwg.mxu0
        %v3748 = vcombine.low %v3242, %v3244
        %v3749 = vcombine.low %v3406, %v3408
        %v3751 = vunpack.c.l.s4 1983009808
        %v3752 = vunpack.c.0.s8 %v3751
        %v3753 = vlaneseq
        %v3754 = vshrl.u32 %v3753, 7
        %v3755 = vsub.s32 %v3752, %v3754
        %v3756 = vrot.slane %v3748, %v3755
        %v3758 = vunpack.c.l.s4 1983009808
        %v3759 = vunpack.c.0.s8 %v3758
        %v3760 = vlaneseq
        %v3761 = vshrl.u32 %v3760, 7
        %v3762 = vsub.s32 %v3759, %v3761
        %v3763 = vrot.slane %v3749, %v3762
        %v3764 = vcombine.low %v3756, %v3763
        %v3765 = vcombine.low %v3570, %v3572
        %v3766 = vcombine.low %v3734, %v3736
        %v3768 = vunpack.c.l.s4 1983009808
        %v3769 = vunpack.c.0.s8 %v3768
        %v3770 = vlaneseq
        %v3771 = vshrl.u32 %v3770, 7
        %v3772 = vsub.s32 %v3769, %v3771
        %v3773 = vrot.slane %v3765, %v3772
        %v3775 = vunpack.c.l.s4 1983009808
        %v3776 = vunpack.c.0.s8 %v3775
        %v3777 = vlaneseq
        %v3778 = vshrl.u32 %v3777, 7
        %v3779 = vsub.s32 %v3776, %v3778
        %v3780 = vrot.slane %v3766, %v3779
        %v3781 = vcombine.low %v3773, %v3780
        %v3784 = vadd.f32 %v337, %v3764
        %v3785 = vadd.f32 %v338, %v3781
        %3786 = vst [vmem:[#allocation2] sm:$0xff] %v3784
        %3787 = vst [vmem:[#allocation2 + $0x8] sm:$0xff] %v3785
        %p3788 = scmp.eq.s32.totalorder %s26, 6
        // Predicated region
        $region61: #{encoder_forward.12} parent=39 // pred_check
          %p3789 = pneg %p3788
        $region62: #{encoder_forward.12} parent=39 // pred_check_branch
          %3791 = sbr.rel (%p3789) target = $region64
        $region63: #{encoder_forward.12} parent=39 // pred_region
          %v3792 = vld [vmem:[#allocation2] sm:$0xff]
          %v3793 = vld [vmem:[#allocation2 + $0x8] sm:$0xff]
          %v3794 = vld [vmem:[#allocation5] sm:$0xff]
          %v3796 = vlaneseq
          %v3797 = vshrl.u32 %v3796, 7
          %v3798 = vsub.s32 0, %v3797
          %v3799 = vrot.slane %v3794, %v3798
          %v3800 = vlaneseq
          %v3801 = vshrl.u32 %v3800, 7
          %v3802 = vsub.s32 1, %v3801
          %v3803 = vrot.slane %v3794, %v3802
          %v3804 = vlaneseq
          %v3805 = vshrl.u32 %v3804, 7
          %v3806 = vsub.s32 2, %v3805
          %v3807 = vrot.slane %v3794, %v3806
          %v3808 = vlaneseq
          %v3809 = vshrl.u32 %v3808, 7
          %v3810 = vsub.s32 3, %v3809
          %v3811 = vrot.slane %v3794, %v3810
          %v3812 = vlaneseq
          %v3813 = vshrl.u32 %v3812, 7
          %v3814 = vsub.s32 4, %v3813
          %v3815 = vrot.slane %v3794, %v3814
          %v3816 = vlaneseq
          %v3817 = vshrl.u32 %v3816, 7
          %v3818 = vsub.s32 5, %v3817
          %v3819 = vrot.slane %v3794, %v3818
          %v3820 = vlaneseq
          %v3821 = vshrl.u32 %v3820, 7
          %v3822 = vsub.s32 6, %v3821
          %v3823 = vrot.slane %v3794, %v3822
          %v3824 = vlaneseq
          %v3825 = vshrl.u32 %v3824, 7
          %v3826 = vsub.s32 7, %v3825
          %v3827 = vrot.slane %v3794, %v3826
          %v3828 = vcombine.low %v3799, %v3803
          %v3829 = vcombine.low %v3807, %v3811
          %v3831 = vunpack.c.l.s4 1983009808
          %v3832 = vunpack.c.0.s8 %v3831
          %v3833 = vlaneseq
          %v3834 = vshrl.u32 %v3833, 7
          %v3835 = vsub.s32 %v3832, %v3834
          %v3836 = vrot.slane %v3828, %v3835
          %v3838 = vunpack.c.l.s4 1983009808
          %v3839 = vunpack.c.0.s8 %v3838
          %v3840 = vlaneseq
          %v3841 = vshrl.u32 %v3840, 7
          %v3842 = vsub.s32 %v3839, %v3841
          %v3843 = vrot.slane %v3829, %v3842
          %v3844 = vcombine.low %v3836, %v3843
          %v3845 = vcombine.low %v3815, %v3819
          %v3846 = vcombine.low %v3823, %v3827
          %v3848 = vunpack.c.l.s4 1983009808
          %v3849 = vunpack.c.0.s8 %v3848
          %v3850 = vlaneseq
          %v3851 = vshrl.u32 %v3850, 7
          %v3852 = vsub.s32 %v3849, %v3851
          %v3853 = vrot.slane %v3845, %v3852
          %v3855 = vunpack.c.l.s4 1983009808
          %v3856 = vunpack.c.0.s8 %v3855
          %v3857 = vlaneseq
          %v3858 = vshrl.u32 %v3857, 7
          %v3859 = vsub.s32 %v3856, %v3858
          %v3860 = vrot.slane %v3846, %v3859
          %v3861 = vcombine.low %v3853, %v3860
          %v3864 = vadd.f32 %v3792, %v3844
          %v3865 = vadd.f32 %v3793, %v3861
          %v3866 = vmax.f32 %v3864, 0.0
          %v3867 = vmax.f32 %v3865, 0.0
          %3868 = vst [vmem:[#allocation2] sm:$0xff] %v3866
          %3869 = vst [vmem:[#allocation2 + $0x8] sm:$0xff] %v3867
          %v3870 = vld [vmem:[#allocation2] sm:$0xff]
          %v3871 = vld [vmem:[#allocation2 + $0x8] sm:$0xff]
          %v3874 = vcombine.high %v3870, %v3870
          %v3876 = vunpack.c.l.s4 1983009808
          %v3877 = vunpack.c.0.s8 %v3876
          %v3878 = vlaneseq
          %v3879 = vshrl.u32 %v3878, 7
          %v3880 = vsub.s32 %v3877, %v3879
          %v3881 = vrot.slane %v3870, %v3880
          %v3883 = vunpack.c.l.s4 1983009808
          %v3884 = vunpack.c.0.s8 %v3883
          %v3885 = vlaneseq
          %v3886 = vshrl.u32 %v3885, 7
          %v3887 = vsub.s32 %v3884, %v3886
          %v3888 = vrot.slane %v3874, %v3887
          %v3889 = vcombine.high %v3881, %v3881
          %v3890 = vcombine.high %v3888, %v3888
          %v3891 = vcombine.high %v3871, %v3871
          %v3893 = vunpack.c.l.s4 1983009808
          %v3894 = vunpack.c.0.s8 %v3893
          %v3895 = vlaneseq
          %v3896 = vshrl.u32 %v3895, 7
          %v3897 = vsub.s32 %v3894, %v3896
          %v3898 = vrot.slane %v3871, %v3897
          %v3900 = vunpack.c.l.s4 1983009808
          %v3901 = vunpack.c.0.s8 %v3900
          %v3902 = vlaneseq
          %v3903 = vshrl.u32 %v3902, 7
          %v3904 = vsub.s32 %v3901, %v3903
          %v3905 = vrot.slane %v3891, %v3904
          %v3906 = vcombine.high %v3898, %v3898
          %v3907 = vcombine.high %v3905, %v3905
          %v3916 = vpack.c.bf16 %v3881, %v3881
          %v3917 = vpack.c.bf16 %v3889, %v3889
          %v3918 = vpack.c.bf16 %v3888, %v3888
          %v3919 = vpack.c.bf16 %v3890, %v3890
          %v3920 = vpack.c.bf16 %v3898, %v3898
          %v3921 = vpack.c.bf16 %v3906, %v3906
          %v3922 = vpack.c.bf16 %v3905, %v3905
          %v3923 = vpack.c.bf16 %v3907, %v3907
          %v3924 = vld [vmem:[#allocation7] sm:$0xf]
          %v3925 = vld [vmem:[#allocation7 + $0x4] sm:$0xf]
          %v3926 = vld [vmem:[#allocation7 + $0x8] sm:$0xf]
          %v3927 = vld [vmem:[#allocation7 + $0xc] sm:$0xf]
          %v3928 = vld [vmem:[#allocation7 + $0x10] sm:$0xf]
          %v3929 = vld [vmem:[#allocation7 + $0x14] sm:$0xf]
          %v3930 = vld [vmem:[#allocation7 + $0x18] sm:$0xf]
          %v3931 = vld [vmem:[#allocation7 + $0x1c] sm:$0xf]
          %v3932 = vld [vmem:[#allocation7 + $0x20] sm:$0xf]
          %v3933 = vld [vmem:[#allocation7 + $0x24] sm:$0xf]
          %v3934 = vld [vmem:[#allocation7 + $0x28] sm:$0xf]
          %v3935 = vld [vmem:[#allocation7 + $0x2c] sm:$0xf]
          %v3936 = vld [vmem:[#allocation7 + $0x30] sm:$0xf]
          %v3937 = vld [vmem:[#allocation7 + $0x34] sm:$0xf]
          %v3938 = vld [vmem:[#allocation7 + $0x38] sm:$0xf]
          %v3939 = vld [vmem:[#allocation7 + $0x3c] sm:$0xf]
          %v3940 = vld [vmem:[#allocation7 + $0x40] sm:$0xf]
          %v3941 = vld [vmem:[#allocation7 + $0x44] sm:$0xf]
          %v3942 = vld [vmem:[#allocation7 + $0x48] sm:$0xf]
          %v3943 = vld [vmem:[#allocation7 + $0x4c] sm:$0xf]
          %v3944 = vld [vmem:[#allocation7 + $0x50] sm:$0xf]
          %v3945 = vld [vmem:[#allocation7 + $0x54] sm:$0xf]
          %v3946 = vld [vmem:[#allocation7 + $0x58] sm:$0xf]
          %v3947 = vld [vmem:[#allocation7 + $0x5c] sm:$0xf]
          %v3948 = vld [vmem:[#allocation7 + $0x60] sm:$0xf]
          %v3949 = vld [vmem:[#allocation7 + $0x64] sm:$0xf]
          %v3950 = vld [vmem:[#allocation7 + $0x68] sm:$0xf]
          %v3951 = vld [vmem:[#allocation7 + $0x6c] sm:$0xf]
          %v3952 = vld [vmem:[#allocation7 + $0x70] sm:$0xf]
          %v3953 = vld [vmem:[#allocation7 + $0x74] sm:$0xf]
          %v3954 = vld [vmem:[#allocation7 + $0x78] sm:$0xf]
          %v3955 = vld [vmem:[#allocation7 + $0x7c] sm:$0xf]
          %v3956 = vld [vmem:[#allocation7 + $0x80] sm:$0xf]
          %v3957 = vld [vmem:[#allocation7 + $0x84] sm:$0xf]
          %v3958 = vld [vmem:[#allocation7 + $0x88] sm:$0xf]
          %v3959 = vld [vmem:[#allocation7 + $0x8c] sm:$0xf]
          %v3960 = vld [vmem:[#allocation7 + $0x90] sm:$0xf]
          %v3961 = vld [vmem:[#allocation7 + $0x94] sm:$0xf]
          %v3962 = vld [vmem:[#allocation7 + $0x98] sm:$0xf]
          %v3963 = vld [vmem:[#allocation7 + $0x9c] sm:$0xf]
          %v3964 = vld [vmem:[#allocation7 + $0xa0] sm:$0xf]
          %v3965 = vld [vmem:[#allocation7 + $0xa4] sm:$0xf]
          %v3966 = vld [vmem:[#allocation7 + $0xa8] sm:$0xf]
          %v3967 = vld [vmem:[#allocation7 + $0xac] sm:$0xf]
          %v3968 = vld [vmem:[#allocation7 + $0xb0] sm:$0xf]
          %v3969 = vld [vmem:[#allocation7 + $0xb4] sm:$0xf]
          %v3970 = vld [vmem:[#allocation7 + $0xb8] sm:$0xf]
          %v3971 = vld [vmem:[#allocation7 + $0xbc] sm:$0xf]
          %v3972 = vld [vmem:[#allocation7 + $0xc0] sm:$0xf]
          %v3973 = vld [vmem:[#allocation7 + $0xc4] sm:$0xf]
          %v3974 = vld [vmem:[#allocation7 + $0xc8] sm:$0xf]
          %v3975 = vld [vmem:[#allocation7 + $0xcc] sm:$0xf]
          %v3976 = vld [vmem:[#allocation7 + $0xd0] sm:$0xf]
          %v3977 = vld [vmem:[#allocation7 + $0xd4] sm:$0xf]
          %v3978 = vld [vmem:[#allocation7 + $0xd8] sm:$0xf]
          %v3979 = vld [vmem:[#allocation7 + $0xdc] sm:$0xf]
          %v3980 = vld [vmem:[#allocation7 + $0xe0] sm:$0xf]
          %v3981 = vld [vmem:[#allocation7 + $0xe4] sm:$0xf]
          %v3982 = vld [vmem:[#allocation7 + $0xe8] sm:$0xf]
          %v3983 = vld [vmem:[#allocation7 + $0xec] sm:$0xf]
          %v3984 = vld [vmem:[#allocation7 + $0xf0] sm:$0xf]
          %v3985 = vld [vmem:[#allocation7 + $0xf4] sm:$0xf]
          %v3986 = vld [vmem:[#allocation7 + $0xf8] sm:$0xf]
          %v3987 = vld [vmem:[#allocation7 + $0xfc] sm:$0xf]
          %v3988 = vld [vmem:[#allocation7 + $0x100] sm:$0xf]
          %v3989 = vld [vmem:[#allocation7 + $0x104] sm:$0xf]
          %v3990 = vld [vmem:[#allocation7 + $0x108] sm:$0xf]
          %v3991 = vld [vmem:[#allocation7 + $0x10c] sm:$0xf]
          %v3992 = vld [vmem:[#allocation7 + $0x110] sm:$0xf]
          %v3993 = vld [vmem:[#allocation7 + $0x114] sm:$0xf]
          %v3994 = vld [vmem:[#allocation7 + $0x118] sm:$0xf]
          %v3995 = vld [vmem:[#allocation7 + $0x11c] sm:$0xf]
          %v3996 = vld [vmem:[#allocation7 + $0x120] sm:$0xf]
          %v3997 = vld [vmem:[#allocation7 + $0x124] sm:$0xf]
          %v3998 = vld [vmem:[#allocation7 + $0x128] sm:$0xf]
          %v3999 = vld [vmem:[#allocation7 + $0x12c] sm:$0xf]
          %v4000 = vld [vmem:[#allocation7 + $0x130] sm:$0xf]
          %v4001 = vld [vmem:[#allocation7 + $0x134] sm:$0xf]
          %v4002 = vld [vmem:[#allocation7 + $0x138] sm:$0xf]
          %v4003 = vld [vmem:[#allocation7 + $0x13c] sm:$0xf]
          %v4004 = vld [vmem:[#allocation7 + $0x140] sm:$0xf]
          %v4005 = vld [vmem:[#allocation7 + $0x144] sm:$0xf]
          %v4006 = vld [vmem:[#allocation7 + $0x148] sm:$0xf]
          %v4007 = vld [vmem:[#allocation7 + $0x14c] sm:$0xf]
          %v4008 = vld [vmem:[#allocation7 + $0x150] sm:$0xf]
          %v4009 = vld [vmem:[#allocation7 + $0x154] sm:$0xf]
          %v4010 = vld [vmem:[#allocation7 + $0x158] sm:$0xf]
          %v4011 = vld [vmem:[#allocation7 + $0x15c] sm:$0xf]
          %v4012 = vld [vmem:[#allocation7 + $0x160] sm:$0xf]
          %v4013 = vld [vmem:[#allocation7 + $0x164] sm:$0xf]
          %v4014 = vld [vmem:[#allocation7 + $0x168] sm:$0xf]
          %v4015 = vld [vmem:[#allocation7 + $0x16c] sm:$0xf]
          %v4016 = vld [vmem:[#allocation7 + $0x170] sm:$0xf]
          %v4017 = vld [vmem:[#allocation7 + $0x174] sm:$0xf]
          %v4018 = vld [vmem:[#allocation7 + $0x178] sm:$0xf]
          %v4019 = vld [vmem:[#allocation7 + $0x17c] sm:$0xf]
          %v4020 = vld [vmem:[#allocation7 + $0x180] sm:$0xf]
          %v4021 = vld [vmem:[#allocation7 + $0x184] sm:$0xf]
          %v4022 = vld [vmem:[#allocation7 + $0x188] sm:$0xf]
          %v4023 = vld [vmem:[#allocation7 + $0x18c] sm:$0xf]
          %v4024 = vld [vmem:[#allocation7 + $0x190] sm:$0xf]
          %v4025 = vld [vmem:[#allocation7 + $0x194] sm:$0xf]
          %v4026 = vld [vmem:[#allocation7 + $0x198] sm:$0xf]
          %v4027 = vld [vmem:[#allocation7 + $0x19c] sm:$0xf]
          %v4028 = vld [vmem:[#allocation7 + $0x1a0] sm:$0xf]
          %v4029 = vld [vmem:[#allocation7 + $0x1a4] sm:$0xf]
          %v4030 = vld [vmem:[#allocation7 + $0x1a8] sm:$0xf]
          %v4031 = vld [vmem:[#allocation7 + $0x1ac] sm:$0xf]
          %v4032 = vld [vmem:[#allocation7 + $0x1b0] sm:$0xf]
          %v4033 = vld [vmem:[#allocation7 + $0x1b4] sm:$0xf]
          %v4034 = vld [vmem:[#allocation7 + $0x1b8] sm:$0xf]
          %v4035 = vld [vmem:[#allocation7 + $0x1bc] sm:$0xf]
          %v4036 = vld [vmem:[#allocation7 + $0x1c0] sm:$0xf]
          %v4037 = vld [vmem:[#allocation7 + $0x1c4] sm:$0xf]
          %v4038 = vld [vmem:[#allocation7 + $0x1c8] sm:$0xf]
          %v4039 = vld [vmem:[#allocation7 + $0x1cc] sm:$0xf]
          %v4040 = vld [vmem:[#allocation7 + $0x1d0] sm:$0xf]
          %v4041 = vld [vmem:[#allocation7 + $0x1d4] sm:$0xf]
          %v4042 = vld [vmem:[#allocation7 + $0x1d8] sm:$0xf]
          %v4043 = vld [vmem:[#allocation7 + $0x1dc] sm:$0xf]
          %v4044 = vld [vmem:[#allocation7 + $0x1e0] sm:$0xf]
          %v4045 = vld [vmem:[#allocation7 + $0x1e4] sm:$0xf]
          %v4046 = vld [vmem:[#allocation7 + $0x1e8] sm:$0xf]
          %v4047 = vld [vmem:[#allocation7 + $0x1ec] sm:$0xf]
          %v4048 = vld [vmem:[#allocation7 + $0x1f0] sm:$0xf]
          %v4049 = vld [vmem:[#allocation7 + $0x1f4] sm:$0xf]
          %v4050 = vld [vmem:[#allocation7 + $0x1f8] sm:$0xf]
          %v4051 = vld [vmem:[#allocation7 + $0x1fc] sm:$0xf]
          %v4052 = vld [vmem:[#allocation8] sm:$0x1]
          %v4054 = vlaneseq
          %v4055 = vshrl.u32 %v4054, 7
          %v4056 = vsub.s32 0, %v4055
          %v4057 = vrot.slane %v4052, %v4056
          %v4187 = vunpack.c.l.b16 %v3924
          %v4188 = vunpack.c.l.b16 %v3925
          %v4189 = vunpack.c.l.b16 %v3926
          %v4190 = vunpack.c.l.b16 %v3927
          %v4191 = vunpack.c.l.b16 %v3928
          %v4192 = vunpack.c.l.b16 %v3929
          %v4193 = vunpack.c.l.b16 %v3930
          %v4194 = vunpack.c.l.b16 %v3931
          %v4195 = vunpack.c.l.b16 %v3932
          %v4196 = vunpack.c.l.b16 %v3933
          %v4197 = vunpack.c.l.b16 %v3934
          %v4198 = vunpack.c.l.b16 %v3935
          %v4199 = vunpack.c.l.b16 %v3936
          %v4200 = vunpack.c.l.b16 %v3937
          %v4201 = vunpack.c.l.b16 %v3938
          %v4202 = vunpack.c.l.b16 %v3939
          %v4203 = vunpack.c.l.b16 %v3940
          %v4204 = vunpack.c.l.b16 %v3941
          %v4205 = vunpack.c.l.b16 %v3942
          %v4206 = vunpack.c.l.b16 %v3943
          %v4207 = vunpack.c.l.b16 %v3944
          %v4208 = vunpack.c.l.b16 %v3945
          %v4209 = vunpack.c.l.b16 %v3946
          %v4210 = vunpack.c.l.b16 %v3947
          %v4211 = vunpack.c.l.b16 %v3948
          %v4212 = vunpack.c.l.b16 %v3949
          %v4213 = vunpack.c.l.b16 %v3950
          %v4214 = vunpack.c.l.b16 %v3951
          %v4215 = vunpack.c.l.b16 %v3952
          %v4216 = vunpack.c.l.b16 %v3953
          %v4217 = vunpack.c.l.b16 %v3954
          %v4218 = vunpack.c.l.b16 %v3955
          %v4219 = vunpack.c.l.b16 %v3956
          %v4220 = vunpack.c.l.b16 %v3957
          %v4221 = vunpack.c.l.b16 %v3958
          %v4222 = vunpack.c.l.b16 %v3959
          %v4223 = vunpack.c.l.b16 %v3960
          %v4224 = vunpack.c.l.b16 %v3961
          %v4225 = vunpack.c.l.b16 %v3962
          %v4226 = vunpack.c.l.b16 %v3963
          %v4227 = vunpack.c.l.b16 %v3964
          %v4228 = vunpack.c.l.b16 %v3965
          %v4229 = vunpack.c.l.b16 %v3966
          %v4230 = vunpack.c.l.b16 %v3967
          %v4231 = vunpack.c.l.b16 %v3968
          %v4232 = vunpack.c.l.b16 %v3969
          %v4233 = vunpack.c.l.b16 %v3970
          %v4234 = vunpack.c.l.b16 %v3971
          %v4235 = vunpack.c.l.b16 %v3972
          %v4236 = vunpack.c.l.b16 %v3973
          %v4237 = vunpack.c.l.b16 %v3974
          %v4238 = vunpack.c.l.b16 %v3975
          %v4239 = vunpack.c.l.b16 %v3976
          %v4240 = vunpack.c.l.b16 %v3977
          %v4241 = vunpack.c.l.b16 %v3978
          %v4242 = vunpack.c.l.b16 %v3979
          %v4243 = vunpack.c.l.b16 %v3980
          %v4244 = vunpack.c.l.b16 %v3981
          %v4245 = vunpack.c.l.b16 %v3982
          %v4246 = vunpack.c.l.b16 %v3983
          %v4247 = vunpack.c.l.b16 %v3984
          %v4248 = vunpack.c.l.b16 %v3985
          %v4249 = vunpack.c.l.b16 %v3986
          %v4250 = vunpack.c.l.b16 %v3987
          %v4251 = vunpack.c.l.b16 %v3988
          %v4252 = vunpack.c.l.b16 %v3989
          %v4253 = vunpack.c.l.b16 %v3990
          %v4254 = vunpack.c.l.b16 %v3991
          %v4255 = vunpack.c.l.b16 %v3992
          %v4256 = vunpack.c.l.b16 %v3993
          %v4257 = vunpack.c.l.b16 %v3994
          %v4258 = vunpack.c.l.b16 %v3995
          %v4259 = vunpack.c.l.b16 %v3996
          %v4260 = vunpack.c.l.b16 %v3997
          %v4261 = vunpack.c.l.b16 %v3998
          %v4262 = vunpack.c.l.b16 %v3999
          %v4263 = vunpack.c.l.b16 %v4000
          %v4264 = vunpack.c.l.b16 %v4001
          %v4265 = vunpack.c.l.b16 %v4002
          %v4266 = vunpack.c.l.b16 %v4003
          %v4267 = vunpack.c.l.b16 %v4004
          %v4268 = vunpack.c.l.b16 %v4005
          %v4269 = vunpack.c.l.b16 %v4006
          %v4270 = vunpack.c.l.b16 %v4007
          %v4271 = vunpack.c.l.b16 %v4008
          %v4272 = vunpack.c.l.b16 %v4009
          %v4273 = vunpack.c.l.b16 %v4010
          %v4274 = vunpack.c.l.b16 %v4011
          %v4275 = vunpack.c.l.b16 %v4012
          %v4276 = vunpack.c.l.b16 %v4013
          %v4277 = vunpack.c.l.b16 %v4014
          %v4278 = vunpack.c.l.b16 %v4015
          %v4279 = vunpack.c.l.b16 %v4016
          %v4280 = vunpack.c.l.b16 %v4017
          %v4281 = vunpack.c.l.b16 %v4018
          %v4282 = vunpack.c.l.b16 %v4019
          %v4283 = vunpack.c.l.b16 %v4020
          %v4284 = vunpack.c.l.b16 %v4021
          %v4285 = vunpack.c.l.b16 %v4022
          %v4286 = vunpack.c.l.b16 %v4023
          %v4287 = vunpack.c.l.b16 %v4024
          %v4288 = vunpack.c.l.b16 %v4025
          %v4289 = vunpack.c.l.b16 %v4026
          %v4290 = vunpack.c.l.b16 %v4027
          %v4291 = vunpack.c.l.b16 %v4028
          %v4292 = vunpack.c.l.b16 %v4029
          %v4293 = vunpack.c.l.b16 %v4030
          %v4294 = vunpack.c.l.b16 %v4031
          %v4295 = vunpack.c.l.b16 %v4032
          %v4296 = vunpack.c.l.b16 %v4033
          %v4297 = vunpack.c.l.b16 %v4034
          %v4298 = vunpack.c.l.b16 %v4035
          %v4299 = vunpack.c.l.b16 %v4036
          %v4300 = vunpack.c.l.b16 %v4037
          %v4301 = vunpack.c.l.b16 %v4038
          %v4302 = vunpack.c.l.b16 %v4039
          %v4303 = vunpack.c.l.b16 %v4040
          %v4304 = vunpack.c.l.b16 %v4041
          %v4305 = vunpack.c.l.b16 %v4042
          %v4306 = vunpack.c.l.b16 %v4043
          %v4307 = vunpack.c.l.b16 %v4044
          %v4308 = vunpack.c.l.b16 %v4045
          %v4309 = vunpack.c.l.b16 %v4046
          %v4310 = vunpack.c.l.b16 %v4047
          %v4311 = vunpack.c.l.b16 %v4048
          %v4312 = vunpack.c.l.b16 %v4049
          %v4313 = vunpack.c.l.b16 %v4050
          %v4314 = vunpack.c.l.b16 %v4051
          %v4315 = vpack.c.b16 %v4188, %v4187
          %v4316 = vpack.c.b16 %v4190, %v4189
          %v4317 = vpack.c.b16 %v4192, %v4191
          %v4318 = vpack.c.b16 %v4194, %v4193
          %v4319 = vpack.c.b16 %v4196, %v4195
          %v4320 = vpack.c.b16 %v4198, %v4197
          %v4321 = vpack.c.b16 %v4200, %v4199
          %v4322 = vpack.c.b16 %v4202, %v4201
          %v4323 = vpack.c.b16 %v4204, %v4203
          %v4324 = vpack.c.b16 %v4206, %v4205
          %v4325 = vpack.c.b16 %v4208, %v4207
          %v4326 = vpack.c.b16 %v4210, %v4209
          %v4327 = vpack.c.b16 %v4212, %v4211
          %v4328 = vpack.c.b16 %v4214, %v4213
          %v4329 = vpack.c.b16 %v4216, %v4215
          %v4330 = vpack.c.b16 %v4218, %v4217
          %v4331 = vpack.c.b16 %v4220, %v4219
          %v4332 = vpack.c.b16 %v4222, %v4221
          %v4333 = vpack.c.b16 %v4224, %v4223
          %v4334 = vpack.c.b16 %v4226, %v4225
          %v4335 = vpack.c.b16 %v4228, %v4227
          %v4336 = vpack.c.b16 %v4230, %v4229
          %v4337 = vpack.c.b16 %v4232, %v4231
          %v4338 = vpack.c.b16 %v4234, %v4233
          %v4339 = vpack.c.b16 %v4236, %v4235
          %v4340 = vpack.c.b16 %v4238, %v4237
          %v4341 = vpack.c.b16 %v4240, %v4239
          %v4342 = vpack.c.b16 %v4242, %v4241
          %v4343 = vpack.c.b16 %v4244, %v4243
          %v4344 = vpack.c.b16 %v4246, %v4245
          %v4345 = vpack.c.b16 %v4248, %v4247
          %v4346 = vpack.c.b16 %v4250, %v4249
          %v4347 = vpack.c.b16 %v4252, %v4251
          %v4348 = vpack.c.b16 %v4254, %v4253
          %v4349 = vpack.c.b16 %v4256, %v4255
          %v4350 = vpack.c.b16 %v4258, %v4257
          %v4351 = vpack.c.b16 %v4260, %v4259
          %v4352 = vpack.c.b16 %v4262, %v4261
          %v4353 = vpack.c.b16 %v4264, %v4263
          %v4354 = vpack.c.b16 %v4266, %v4265
          %v4355 = vpack.c.b16 %v4268, %v4267
          %v4356 = vpack.c.b16 %v4270, %v4269
          %v4357 = vpack.c.b16 %v4272, %v4271
          %v4358 = vpack.c.b16 %v4274, %v4273
          %v4359 = vpack.c.b16 %v4276, %v4275
          %v4360 = vpack.c.b16 %v4278, %v4277
          %v4361 = vpack.c.b16 %v4280, %v4279
          %v4362 = vpack.c.b16 %v4282, %v4281
          %v4363 = vpack.c.b16 %v4284, %v4283
          %v4364 = vpack.c.b16 %v4286, %v4285
          %v4365 = vpack.c.b16 %v4288, %v4287
          %v4366 = vpack.c.b16 %v4290, %v4289
          %v4367 = vpack.c.b16 %v4292, %v4291
          %v4368 = vpack.c.b16 %v4294, %v4293
          %v4369 = vpack.c.b16 %v4296, %v4295
          %v4370 = vpack.c.b16 %v4298, %v4297
          %v4371 = vpack.c.b16 %v4300, %v4299
          %v4372 = vpack.c.b16 %v4302, %v4301
          %v4373 = vpack.c.b16 %v4304, %v4303
          %v4374 = vpack.c.b16 %v4306, %v4305
          %v4375 = vpack.c.b16 %v4308, %v4307
          %v4376 = vpack.c.b16 %v4310, %v4309
          %v4377 = vpack.c.b16 %v4312, %v4311
          %v4378 = vpack.c.b16 %v4314, %v4313
          %4443 = vmatprep.subr.bf16.mxu0 0
          %4444 = vmatpush1.bf16.msra.mxu0 %v4322
          %4445 = vmatprep.subr.bf16.mxu0 0
          %4446 = vmatpush1.bf16.msra.mxu0 %v4321
          %4447 = vmatprep.subr.bf16.mxu0 0
          %4448 = vmatpush1.bf16.msra.mxu0 %v4320
          %4449 = vmatprep.subr.bf16.mxu0 0
          %4450 = vmatpush1.bf16.msra.mxu0 %v4319
          %4451 = vmatprep.subr.bf16.mxu0 0
          %4452 = vmatpush1.bf16.msra.mxu0 %v4318
          %4453 = vmatprep.subr.bf16.mxu0 0
          %4454 = vmatpush1.bf16.msra.mxu0 %v4317
          %4455 = vmatprep.subr.bf16.mxu0 0
          %4456 = vmatpush1.bf16.msra.mxu0 %v4316
          %4457 = vmatprep.subr.bf16.mxu0 0
          %4458 = vmatpush1.bf16.msra.mxu0 %v4315
          %4459 = vmatprep.subr.bf16.mxu0 0
          %4460 = vmatpush2.bf16.msra.mxu0 %v4330
          %4461 = vmatprep.subr.bf16.mxu0 0
          %4462 = vmatpush2.bf16.msra.mxu0 %v4329
          %4463 = vmatprep.subr.bf16.mxu0 0
          %4464 = vmatpush2.bf16.msra.mxu0 %v4328
          %4465 = vmatprep.subr.bf16.mxu0 0
          %4466 = vmatpush2.bf16.msra.mxu0 %v4327
          %4467 = vmatprep.subr.bf16.mxu0 0
          %4468 = vmatpush2.bf16.msra.mxu0 %v4326
          %4469 = vmatprep.subr.bf16.mxu0 0
          %4470 = vmatpush2.bf16.msra.mxu0 %v4325
          %4471 = vmatprep.subr.bf16.mxu0 0
          %4472 = vmatpush2.bf16.msra.mxu0 %v4324
          %4473 = vmatprep.subr.bf16.mxu0 0
          %4474 = vmatpush2.bf16.msra.mxu0 %v4323
          %4475 = vmatprep.mubr.bf16.mxu0 %v3917
          %4476 = vmatmul.mubr.bf16.gmra.mxu0 %v3916
          %v4477 = vpop.f32.mrf.mxu0
          %v4478 = vadd.f32 %v4057, %v4477
          %v4479 = vpop.f32.mrf.mxu0
          %v4480 = vpop.f32.mrf.mxu0
          %v4481 = vpop.f32.mrf.mxu0
          %4482 = vdwg.mxu0
          %4483 = vmatprep.subr.bf16.mxu0 0
          %4484 = vmatpush1.bf16.msra.mxu0 %v4338
          %4485 = vmatprep.subr.bf16.mxu0 0
          %4486 = vmatpush1.bf16.msra.mxu0 %v4337
          %4487 = vmatprep.subr.bf16.mxu0 0
          %4488 = vmatpush1.bf16.msra.mxu0 %v4336
          %4489 = vmatprep.subr.bf16.mxu0 0
          %4490 = vmatpush1.bf16.msra.mxu0 %v4335
          %4491 = vmatprep.subr.bf16.mxu0 0
          %4492 = vmatpush1.bf16.msra.mxu0 %v4334
          %4493 = vmatprep.subr.bf16.mxu0 0
          %4494 = vmatpush1.bf16.msra.mxu0 %v4333
          %4495 = vmatprep.subr.bf16.mxu0 0
          %4496 = vmatpush1.bf16.msra.mxu0 %v4332
          %4497 = vmatprep.subr.bf16.mxu0 0
          %4498 = vmatpush1.bf16.msra.mxu0 %v4331
          %4499 = vmatprep.subr.bf16.mxu0 0
          %4500 = vmatpush2.bf16.msra.mxu0 %v4346
          %4501 = vmatprep.subr.bf16.mxu0 0
          %4502 = vmatpush2.bf16.msra.mxu0 %v4345
          %4503 = vmatprep.subr.bf16.mxu0 0
          %4504 = vmatpush2.bf16.msra.mxu0 %v4344
          %4505 = vmatprep.subr.bf16.mxu0 0
          %4506 = vmatpush2.bf16.msra.mxu0 %v4343
          %4507 = vmatprep.subr.bf16.mxu0 0
          %4508 = vmatpush2.bf16.msra.mxu0 %v4342
          %4509 = vmatprep.subr.bf16.mxu0 0
          %4510 = vmatpush2.bf16.msra.mxu0 %v4341
          %4511 = vmatprep.subr.bf16.mxu0 0
          %4512 = vmatpush2.bf16.msra.mxu0 %v4340
          %4513 = vmatprep.subr.bf16.mxu0 0
          %4514 = vmatpush2.bf16.msra.mxu0 %v4339
          %4515 = vmatprep.mubr.bf16.mxu0 %v3919
          %4516 = vmatmul.mubr.bf16.gmra.mxu0 %v3918
          %v4517 = vpop.f32.mrf.mxu0
          %v4518 = vadd.f32 %v4478, %v4517
          %v4519 = vpop.f32.mrf.mxu0
          %v4520 = vpop.f32.mrf.mxu0
          %v4521 = vpop.f32.mrf.mxu0
          %4522 = vdwg.mxu0
          %4523 = vmatprep.subr.bf16.mxu0 0
          %4524 = vmatpush1.bf16.msra.mxu0 %v4354
          %4525 = vmatprep.subr.bf16.mxu0 0
          %4526 = vmatpush1.bf16.msra.mxu0 %v4353
          %4527 = vmatprep.subr.bf16.mxu0 0
          %4528 = vmatpush1.bf16.msra.mxu0 %v4352
          %4529 = vmatprep.subr.bf16.mxu0 0
          %4530 = vmatpush1.bf16.msra.mxu0 %v4351
          %4531 = vmatprep.subr.bf16.mxu0 0
          %4532 = vmatpush1.bf16.msra.mxu0 %v4350
          %4533 = vmatprep.subr.bf16.mxu0 0
          %4534 = vmatpush1.bf16.msra.mxu0 %v4349
          %4535 = vmatprep.subr.bf16.mxu0 0
          %4536 = vmatpush1.bf16.msra.mxu0 %v4348
          %4537 = vmatprep.subr.bf16.mxu0 0
          %4538 = vmatpush1.bf16.msra.mxu0 %v4347
          %4539 = vmatprep.subr.bf16.mxu0 0
          %4540 = vmatpush2.bf16.msra.mxu0 %v4362
          %4541 = vmatprep.subr.bf16.mxu0 0
          %4542 = vmatpush2.bf16.msra.mxu0 %v4361
          %4543 = vmatprep.subr.bf16.mxu0 0
          %4544 = vmatpush2.bf16.msra.mxu0 %v4360
          %4545 = vmatprep.subr.bf16.mxu0 0
          %4546 = vmatpush2.bf16.msra.mxu0 %v4359
          %4547 = vmatprep.subr.bf16.mxu0 0
          %4548 = vmatpush2.bf16.msra.mxu0 %v4358
          %4549 = vmatprep.subr.bf16.mxu0 0
          %4550 = vmatpush2.bf16.msra.mxu0 %v4357
          %4551 = vmatprep.subr.bf16.mxu0 0
          %4552 = vmatpush2.bf16.msra.mxu0 %v4356
          %4553 = vmatprep.subr.bf16.mxu0 0
          %4554 = vmatpush2.bf16.msra.mxu0 %v4355
          %4555 = vmatprep.mubr.bf16.mxu0 %v3921
          %4556 = vmatmul.mubr.bf16.gmra.mxu0 %v3920
          %v4557 = vpop.f32.mrf.mxu0
          %v4558 = vadd.f32 %v4518, %v4557
          %v4559 = vpop.f32.mrf.mxu0
          %v4560 = vpop.f32.mrf.mxu0
          %v4561 = vpop.f32.mrf.mxu0
          %4562 = vdwg.mxu0
          %4563 = vmatprep.subr.bf16.mxu0 0
          %4564 = vmatpush1.bf16.msra.mxu0 %v4370
          %4565 = vmatprep.subr.bf16.mxu0 0
          %4566 = vmatpush1.bf16.msra.mxu0 %v4369
          %4567 = vmatprep.subr.bf16.mxu0 0
          %4568 = vmatpush1.bf16.msra.mxu0 %v4368
          %4569 = vmatprep.subr.bf16.mxu0 0
          %4570 = vmatpush1.bf16.msra.mxu0 %v4367
          %4571 = vmatprep.subr.bf16.mxu0 0
          %4572 = vmatpush1.bf16.msra.mxu0 %v4366
          %4573 = vmatprep.subr.bf16.mxu0 0
          %4574 = vmatpush1.bf16.msra.mxu0 %v4365
          %4575 = vmatprep.subr.bf16.mxu0 0
          %4576 = vmatpush1.bf16.msra.mxu0 %v4364
          %4577 = vmatprep.subr.bf16.mxu0 0
          %4578 = vmatpush1.bf16.msra.mxu0 %v4363
          %4579 = vmatprep.subr.bf16.mxu0 0
          %4580 = vmatpush2.bf16.msra.mxu0 %v4378
          %4581 = vmatprep.subr.bf16.mxu0 0
          %4582 = vmatpush2.bf16.msra.mxu0 %v4377
          %4583 = vmatprep.subr.bf16.mxu0 0
          %4584 = vmatpush2.bf16.msra.mxu0 %v4376
          %4585 = vmatprep.subr.bf16.mxu0 0
          %4586 = vmatpush2.bf16.msra.mxu0 %v4375
          %4587 = vmatprep.subr.bf16.mxu0 0
          %4588 = vmatpush2.bf16.msra.mxu0 %v4374
          %4589 = vmatprep.subr.bf16.mxu0 0
          %4590 = vmatpush2.bf16.msra.mxu0 %v4373
          %4591 = vmatprep.subr.bf16.mxu0 0
          %4592 = vmatpush2.bf16.msra.mxu0 %v4372
          %4593 = vmatprep.subr.bf16.mxu0 0
          %4594 = vmatpush2.bf16.msra.mxu0 %v4371
          %4595 = vmatprep.mubr.bf16.mxu0 %v3923
          %4596 = vmatmul.mubr.bf16.gmra.mxu0 %v3922
          %v4597 = vpop.f32.mrf.mxu0
          %v4598 = vadd.f32 %v4558, %v4597
          %v4599 = vpop.f32.mrf.mxu0
          %v4600 = vpop.f32.mrf.mxu0
          %v4601 = vpop.f32.mrf.mxu0
          %4602 = vdwg.mxu0
          %v4603 = vlaneseq
          %v4604 = vand.u32 %v4603, 127
          %vm4605 = vcmp.lt.s32.totalorder %v4604, 7
          %vm4606 = vcmp.ge.s32.totalorder %v4604, 7
          %vm4607 = vcmp.lt.s32.totalorder %v4604, 64
          %vm4608 = vmand %vm4606, %vm4607
          %vm4609 = vcmp.eq.s32.totalorder %v4604, 64
          %vm4610 = vcmp.eq.s32.totalorder %v4604, 65
          %v4611 = vmul.f32 %v4598, %v4598
          %v4612 = vsel %vm4605, %v4611, 0.0
          %vm4613 = vcmask 1041408
          %v4614 = vsel %vm4613, %v4612, 0.0
          %4615 = vadd.xlane.f32.xlu0 %v4614
          %v4616 = vpop.xlane.xlu0 %4615
          %v4617 = vsel %vm4608, %v4611, 0.0
          %v4618 = vsel %vm4613, %v4617, 0.0
          %4619 = vadd.xlane.f32.xlu0 %v4618
          %v4620 = vpop.xlane.xlu0 %4619
          %v4621 = vrsqrt.pop %v4616
          %v4622 = vmul.f32 %v4616, %v4621
          %vm4623 = vcmp.eq.f32.partialorder %v4616, inf
          %v4624 = vsel %vm4623, %v4616, %v4622
          %vm4625 = vcmp.eq.f32.partialorder %v4616, 0.0
          %v4626 = vand.u32 %v4616, 2147483648
          %v4627 = vsel %vm4625, %v4626, %v4624
          %v4628 = vadd.f32 %v4627, 1e-07
          %v4629 = vrcp.pop %v4628
          %v4630 = vmul.f32 1.0, %v4629
          %v4631 = vrsqrt.pop %v4620
          %v4632 = vmul.f32 %v4620, %v4631
          %vm4633 = vcmp.eq.f32.partialorder %v4620, inf
          %v4634 = vsel %vm4633, %v4620, %v4632
          %vm4635 = vcmp.eq.f32.partialorder %v4620, 0.0
          %v4636 = vand.u32 %v4620, 2147483648
          %v4637 = vsel %vm4635, %v4636, %v4634
          %v4638 = vadd.f32 %v4637, 1e-07
          %v4639 = vrcp.pop %v4638
          %v4640 = vmul.f32 1.0, %v4639
          %v4641 = vsel %vm4605, %v4630, 0.0
          %v4642 = vsel %vm4608, %v4640, 0.0
          %v4643 = vadd.f32 %v4641, %v4642
          %v4644 = vand.u32 2147483647, %v4598
          %v4645 = vsub.f32 0.0, %v4644
          %v4646 = vmul.f32 %v4645, 1.442695
          %v4647 = vpow.pop %v4646
          %v4648 = vadd.f32 %v4647, 1.0
          %v4649 = vlog2.pop %v4648
          %v4650 = vmul.f32 %v4649, 0.6931472
          %v4651 = vmax.f32 %v4598, 0.0
          %v4652 = vadd.f32 %v4650, %v4651
          %v4653 = vadd.f32 %v4652, 80.0
          %v4654 = vsel %vm4609, %v4653, 0.0
          %v4655 = vadd.f32 %v4652, 1.0
          %v4656 = vsel %vm4610, %v4655, 0.0
          %v4657 = vadd.f32 %v4654, %v4656
          %v4658 = vmul.f32 %v4598, %v4643
          %v4659 = vadd.f32 %v4658, %v4657
          %4660 = vst [vmem:[%s329] sm:$0x3] %v4659
        $region64: #{encoder_forward.12} parent=39 // pred_fallthru
          _
        %p4661 = scmp.lt.s32.totalorder %s25, 0
        %s4662 = scalar_select %p4661, %s25, 0
        %s4663 = smul.addr %s4662, 2
        %s4664 = scalar_lea.vmem %s5, %s4663
        // Predicated region
        $region65: #{encoder_forward.12} parent=39 // pred_check
          %p4665 = pneg %p168
        $region66: #{encoder_forward.12} parent=39 // pred_check_branch
          %4667 = sbr.rel (%p4665) target = $region68
        $region67: #{encoder_forward.12} parent=39 // pred_region
          _
        $region68: #{encoder_forward.12} parent=39 // pred_fallthru
          _
        // Predicated region
        $region69: #{encoder_forward.12} parent=39 // pred_check
          %p4668 = pneg %p168
        $region70: #{encoder_forward.12} parent=39 // pred_check_branch
          %4670 = sbr.rel (%p4668) target = $region72
        $region71: #{encoder_forward.12} parent=39 // pred_region
          %p4671 = scmp.lt.s32.totalorder %s25, 0
          %s4672 = scalar_select %p4671, %s25, 0
          %s4673 = smul.addr %s4672, 2
          %s4674 = scalar_lea.vmem %s5, %s4673
        $region72: #{encoder_forward.12} parent=39 // pred_fallthru
          _
      $region40: #{encoder_forward.12} parent=5 // pred_fallthru
        _
      %p4675 = scmp.le.s32.totalorder 2, %s16
      // Predicated region
      $region73: #{encoder_forward.12} parent=5 // pred_check
        %p4676 = pneg %p4675
      $region74: #{encoder_forward.12} parent=5 // pred_check_branch
        %4678 = sbr.rel (%p4676) target = $region76
      $region75: #{encoder_forward.12} parent=5 // pred_region
        %s4679 = ssub.s32 %s16, 2
      $region76: #{encoder_forward.12} parent=5 // pred_fallthru
        _
    $region6: #{encoder_forward.12} parent=1 // loop_footer
      %s20 = sadd.s32 1, %s16
    $region7: #{encoder_forward.12} parent=1 // loop_footer_branch
      %15 = sbr.rel target = $region3
    $region8: #{encoder_forward.12} parent=1 // loop_exit
      _
    %4680 = vsyncpa [#allocation4], 1
    %s4681 = scalar_lea.sflag [#allocation4], 1
    %4682 = vsyncpa %s4681, 1
    %4683 = vsyncpa [#allocation6], 1
    %4684 = vsyncpa [#allocation9], 1

</llo_original>
